<compile_context>
chip_gen: v7x
topology: tpu7x:2x2x1
jax: 0.10.0
libtpu: 0.0.40
codegen_flags: <defaults>
</compile_context>

<pallas_src>
import functools

import jax
import jax.numpy as jnp
from jax import lax
from jax.experimental import pallas as pl
from jax.experimental.pallas import tpu as pltpu


# ---------------------------------------------------------------------------
# In-kernel per-layer recurrence
# ---------------------------------------------------------------------------
def _run_layer(in_ref, wih_ref, b_ref, whh_ref, xg_scr, act_scr, *, H, is_last):
    """One bidirectional LSTM layer, fully inside VMEM.

    in_ref:   (T, B, D)    input sequence (x block or previous layer's act_scr)
    wih_ref:  (D, 8H)      [W_ih_fwd^T | W_ih_bwd^T]
    b_ref:    (1, 8H)      [b_fwd | b_bwd] (b_ih + b_hh per direction)
    whh_ref:  (2H, 8H)     block-diagonal [[W_hh_f^T, 0], [0, W_hh_b^T]]
    xg_scr:   (T, B, 8H)   scratch for the hoisted input projection
    act_scr:  (T, B, 2H)   scratch receiving this layer's output (if not last)
    """
    T, B, D = in_ref.shape
    G = 4 * H

    # (1) Hoisted input projection for BOTH directions + bias: one MXU matmul.
    xg = jnp.dot(in_ref[...].reshape(T * B, D), wih_ref[...],
                 preferred_element_type=jnp.float32) + b_ref[...]
    xg_scr[...] = xg.reshape(T, B, 2 * G)

    whh = whh_ref[...]                                  # (2H, 8H)

    def gate(pre, c):
        sg = jax.nn.sigmoid(pre)                        # (B, 4H) on EUP
        g = jnp.tanh(pre[:, 2 * H:3 * H])
        c_new = sg[:, H:2 * H] * c + sg[:, 0:H] * g     # f*c + i*g
        h_new = sg[:, 3 * H:4 * H] * jnp.tanh(c_new)    # o*tanh(c)
        return h_new, c_new

    def step(t, carry):
        s = T - 1 - t
        if is_last:
            h_cat, c_f, c_b, hb0 = carry
        else:
            h_cat, c_f, c_b = carry
        # One fused recurrent matmul for both directions (block-diagonal W_hh).
        hh = jnp.dot(h_cat, whh, preferred_element_type=jnp.float32)   # (B, 8H)
        # Vreg-aligned slices (G = 4H = 128 lanes).
        pre_f = xg_scr[t, :, 0:G] + hh[:, 0:G]
        pre_b = xg_scr[s, :, G:2 * G] + hh[:, G:2 * G]
        h_f, c_f = gate(pre_f, c_f)
        h_b, c_b = gate(pre_b, c_b)
        h_cat = jnp.concatenate([h_f, h_b], axis=-1)                    # (B, 2H)
        if is_last:
            # Only out[:, -1, :] is needed downstream:
            #   forward half  -> final h_f (carried),
            #   backward half -> h_b produced at t == 0 (s == T-1).
            hb0 = jnp.where(t == 0, h_b, hb0)
            return (h_cat, c_f, c_b, hb0)
        # Intermediate layer: write the bidirectional output in place,
        # no second assembly pass.
        act_scr[t, :, 0:H] = h_f
        act_scr[s, :, H:2 * H] = h_b
        return (h_cat, c_f, c_b)

    z = jnp.zeros((B, H), jnp.float32)
    zc = jnp.zeros((B, 2 * H), jnp.float32)
    init = (zc, z, z, z) if is_last else (zc, z, z)
    # T is small & static -> fully unroll so the scheduler can interleave steps.
    return lax.fori_loop(0, T, step, init, unroll=True)


# ---------------------------------------------------------------------------
# Fused kernel: all LSTM layers + ReLU + FC
# ---------------------------------------------------------------------------
def _discriminator_kernel(num_layers, H, x_ref, *refs):
    layer_refs = refs[:3 * num_layers]
    fc_w_ref = refs[3 * num_layers]        # (2H, O)
    fc_b_ref = refs[3 * num_layers + 1]    # (1, O)
    out_ref = refs[3 * num_layers + 2]     # (B, O)
    xg_scr = refs[3 * num_layers + 3]      # (T, B, 8H)
    act_scr = refs[3 * num_layers + 4]     # (T, B, 2H)

    cur_in = x_ref
    final = None
    for l in range(num_layers):
        wih, b, whh = layer_refs[3 * l:3 * l + 3]
        is_last = l == num_layers - 1
        res = _run_layer(cur_in, wih, b, whh, xg_scr, act_scr, H=H,
                         is_last=is_last)
        if is_last:
            final = res
        cur_in = act_scr

    h_cat, _, _, hb0 = final
    # out[:, -1, :] = [h_fwd(T-1) | h_bwd(after input T-1)]; ReLU commutes with
    # the slice, so applying it here matches relu(out)[:, -1, :].
    feat = jnp.maximum(jnp.concatenate([h_cat[:, 0:H], hb0], axis=-1), 0.0)
    out_ref[...] = (jnp.dot(feat, fc_w_ref[...],
                            preferred_element_type=jnp.float32)
                    + fc_b_ref[...])


# ---------------------------------------------------------------------------
# One-time weight packing (outside the per-forward hot path)
# ---------------------------------------------------------------------------
def pack_params(params, hidden_size, num_layers):
    H = hidden_size
    packed = {"layers": []}
    for l in range(num_layers):
        p = params["lstm"][l]
        wih = jnp.concatenate(
            [jnp.transpose(p["w_ih_f"]), jnp.transpose(p["w_ih_b"])], axis=1)
        bias = jnp.concatenate(
            [p["b_ih_f"] + p["b_hh_f"], p["b_ih_b"] + p["b_hh_b"]])[None, :]
        whh_bd = jnp.zeros((2 * H, 8 * H), jnp.float32)
        whh_bd = whh_bd.at[0:H, 0:4 * H].set(jnp.transpose(p["w_hh_f"]))
        whh_bd = whh_bd.at[H:2 * H, 4 * H:8 * H].set(jnp.transpose(p["w_hh_b"]))
        packed["layers"].append({"wih": wih, "bias": bias, "whh": whh_bd})
    packed["fc_w"] = jnp.transpose(params["fc_w"])        # (2H, O)
    packed["fc_b"] = params["fc_b"][None, :]               # (1, O)
    return packed


# ---------------------------------------------------------------------------
# Forward wrapper (single pallas_call)
# ---------------------------------------------------------------------------
def discriminator_forward(x_btd, packed, *, hidden_size, num_layers):
    """Matches Discriminator.forward: x (B, T, input_size) -> (B, output_size)."""
    H = hidden_size
    G = 4 * H
    B0, T, D0 = x_btd.shape
    O = packed["fc_w"].shape[1]

    x = jnp.transpose(x_btd, (1, 0, 2)).astype(jnp.float32)   # (T, B, D)

    BT = 8                                  # sublane-multiple batch tile
    Bp = ((B0 + BT - 1) // BT) * BT
    if Bp != B0:
        x = jnp.pad(x, ((0, 0), (0, Bp - B0), (0, 0)))

    inputs = [x]
    in_specs = [pl.BlockSpec((T, BT, D0), lambda b: (0, b, 0))]
    for l in range(num_layers):
        lp = packed["layers"][l]
        d_in = D0 if l == 0 else 2 * H
        inputs += [lp["wih"], lp["bias"], lp["whh"]]
        in_specs += [
            pl.BlockSpec((d_in, 2 * G), lambda b: (0, 0)),
            pl.BlockSpec((1, 2 * G), lambda b: (0, 0)),
            pl.BlockSpec((2 * H, 2 * G), lambda b: (0, 0)),
        ]
    inputs += [packed["fc_w"], packed["fc_b"]]
    in_specs += [
        pl.BlockSpec((2 * H, O), lambda b: (0, 0)),
        pl.BlockSpec((1, O), lambda b: (0, 0)),
    ]

    kernel = functools.partial(_discriminator_kernel, num_layers, H)

    out = pl.pallas_call(
        kernel,
        out_shape=jax.ShapeDtypeStruct((Bp, O), jnp.float32),
        grid=(Bp // BT,),
        in_specs=in_specs,
        out_specs=pl.BlockSpec((BT, O), lambda b: (b, 0)),
        scratch_shapes=[
            pltpu.VMEM((T, BT, 2 * G), jnp.float32),    # hoisted input projection
            pltpu.VMEM((T, BT, 2 * H), jnp.float32),    # inter-layer activations
        ],
        compiler_params=pltpu.CompilerParams(
            dimension_semantics=("parallel",)),
    )(*inputs)
    return out[:B0]


# ---------------------------------------------------------------------------
# Deterministic parameter init (PyTorch-style U(-1/sqrt(H), 1/sqrt(H)))
# ---------------------------------------------------------------------------
def init_params(key, input_size, hidden_size, output_size, num_layers):
    H = hidden_size
    k_lstm = 1.0 / jnp.sqrt(jnp.float32(H))
    params = {"lstm": []}
    for layer in range(num_layers):
        d_in = input_size if layer == 0 else 2 * H
        layer_p = {}
        for d in ("f", "b"):
            key, k1, k2, k3, k4 = jax.random.split(key, 5)
            layer_p[f"w_ih_{d}"] = jax.random.uniform(
                k1, (4 * H, d_in), jnp.float32, -k_lstm, k_lstm)
            layer_p[f"w_hh_{d}"] = jax.random.uniform(
                k2, (4 * H, H), jnp.float32, -k_lstm, k_lstm)
            layer_p[f"b_ih_{d}"] = jax.random.uniform(
                k3, (4 * H,), jnp.float32, -k_lstm, k_lstm)
            layer_p[f"b_hh_{d}"] = jax.random.uniform(
                k4, (4 * H,), jnp.float32, -k_lstm, k_lstm)
        params["lstm"].append(layer_p)
    k_fc = 1.0 / jnp.sqrt(jnp.float32(2 * H))
    key, k1, k2 = jax.random.split(key, 3)
    params["fc_w"] = jax.random.uniform(
        k1, (output_size, 2 * H), jnp.float32, -k_fc, k_fc)
    params["fc_b"] = jax.random.uniform(
        k2, (output_size,), jnp.float32, -k_fc, k_fc)
    return params


# ---------------------------------------------------------------------------
# Pure-JAX reference (for correctness check only)
# ---------------------------------------------------------------------------
def _ref_lstm_dir(x_tbd, w_ih, w_hh, b_ih, b_hh, H, reverse):
    T, B, _ = x_tbd.shape
    xs = x_tbd[::-1] if reverse else x_tbd

    def step(carry, x_t):
        h, c = carry
        gates = x_t @ w_ih.T + h @ w_hh.T + b_ih + b_hh
        i = jax.nn.sigmoid(gates[:, :H])
        f = jax.nn.sigmoid(gates[:, H:2 * H])
        g = jnp.tanh(gates[:, 2 * H:3 * H])
        o = jax.nn.sigmoid(gates[:, 3 * H:])
        c = f * c + i * g
        h = o * jnp.tanh(c)
        return (h, c), h

    (_, _), hs = lax.scan(step, (jnp.zeros((B, H)), jnp.zeros((B, H))), xs)
    return hs[::-1] if reverse else hs


def _ref_forward(x_btd, params, H, num_layers):
    x = jnp.transpose(x_btd, (1, 0, 2)).astype(jnp.float32)
    layer_in = x
    for layer in range(num_layers):
        p = params["lstm"][layer]
        out_f = _ref_lstm_dir(layer_in, p["w_ih_f"], p["w_hh_f"],
                              p["b_ih_f"], p["b_hh_f"], H, False)
        out_b = _ref_lstm_dir(layer_in, p["w_ih_b"], p["w_hh_b"],
                              p["b_ih_b"], p["b_hh_b"], H, True)
        layer_in = jnp.concatenate([out_f, out_b], axis=-1)
    last = jnp.maximum(layer_in[-1], 0.0)
    return last @ params["fc_w"].T + params["fc_b"]


# ---------------------------------------------------------------------------
if __name__ == "__main__":
    B, T = 2, 8
    input_size, hidden_size, output_size, num_layers = 16, 32, 1, 2

    key = jax.random.PRNGKey(0)
    key, kx, kp = jax.random.split(key, 3)
    x = jax.random.normal(kx, (B, T, input_size), jnp.float32)
    params = init_params(kp, input_size, hidden_size, output_size, num_layers)

    # One-time weight packing (outside the per-forward hot path).
    packed = jax.tree_util.tree_map(
        lambda a: a, pack_params(params, hidden_size, num_layers))

    fwd = jax.jit(functools.partial(
        discriminator_forward, hidden_size=hidden_size, num_layers=num_layers))
    out = fwd(x, packed)
    out = jax.block_until_ready(out)

    ref = _ref_forward(x, params, hidden_size, num_layers)
    assert out.shape == (B, output_size), out.shape
    assert jnp.allclose(out, ref, atol=1e-4, rtol=1e-4), (out, ref)

    print("KERNEL_OK")
</pallas_src>

<mosaic_0001>
module attributes {stable_mosaic.version = 11 : i64} {
  func.func @_discriminator_kernel(%arg0: i32, %arg1: memref<8x8x16xf32, #tpu.memory_space<vmem>>, %arg2: memref<16x256xf32, #tpu.memory_space<vmem>>, %arg3: memref<1x256xf32, #tpu.memory_space<vmem>>, %arg4: memref<64x256xf32, #tpu.memory_space<vmem>>, %arg5: memref<64x256xf32, #tpu.memory_space<vmem>>, %arg6: memref<1x256xf32, #tpu.memory_space<vmem>>, %arg7: memref<64x256xf32, #tpu.memory_space<vmem>>, %arg8: memref<64x1xf32, #tpu.memory_space<vmem>>, %arg9: memref<1x1xf32, #tpu.memory_space<vmem>>, %arg10: memref<8x1xf32, #tpu.memory_space<vmem>>, %arg11: memref<8x8x256xf32, #tpu.memory_space<vmem>>, %arg12: memref<8x8x64xf32, #tpu.memory_space<vmem>>) attributes {dimension_semantics = [#tpu.dimension_semantics<parallel>], iteration_bounds = array<i64: 1>, scalar_prefetch = 0 : i64, scratch_operands = 2 : i64, tpu.core_type = #tpu.core_type<tc>, window_params = [{transform_indices = @transform_0, window_bounds = array<i64: 8, 8, 16>}, {pipeline_mode = #tpu.pipeline_mode<synchronous>, transform_indices = @transform_1, window_bounds = array<i64: 16, 256>}, {pipeline_mode = #tpu.pipeline_mode<synchronous>, transform_indices = @transform_2, window_bounds = array<i64: 1, 256>}, {pipeline_mode = #tpu.pipeline_mode<synchronous>, transform_indices = @transform_3, window_bounds = array<i64: 64, 256>}, {pipeline_mode = #tpu.pipeline_mode<synchronous>, transform_indices = @transform_4, window_bounds = array<i64: 64, 256>}, {pipeline_mode = #tpu.pipeline_mode<synchronous>, transform_indices = @transform_5, window_bounds = array<i64: 1, 256>}, {pipeline_mode = #tpu.pipeline_mode<synchronous>, transform_indices = @transform_6, window_bounds = array<i64: 64, 256>}, {pipeline_mode = #tpu.pipeline_mode<synchronous>, transform_indices = @transform_7, window_bounds = array<i64: 64, 1>}, {pipeline_mode = #tpu.pipeline_mode<synchronous>, transform_indices = @transform_8, window_bounds = array<i64: 1, 1>}, {transform_indices = @transform_9, window_bounds = array<i64: 8, 1>}]} {
    %c0 = arith.constant 0 : index
    %c0_0 = arith.constant 0 : index
    %c0_1 = arith.constant 0 : index
    %0 = vector.load %arg1[%c0, %c0_0, %c0_1] : memref<8x8x16xf32, #tpu.memory_space<vmem>>, vector<8x8x16xf32>
    %1 = vector.shape_cast %0 : vector<8x8x16xf32> to vector<64x16xf32>
    %c0_2 = arith.constant 0 : index
    %c0_3 = arith.constant 0 : index
    %2 = vector.load %arg2[%c0_2, %c0_3] : memref<16x256xf32, #tpu.memory_space<vmem>>, vector<16x256xf32>
    %cst = arith.constant dense<0.000000e+00> : vector<64x256xf32>
    %3 = tpu.matmul %1, %2, %cst {dimension_numbers = #tpu.dot_dimension_numbers<[1], [0], [0], [1], [0, 0, 1, 1], [], []>} : vector<64x16xf32>, vector<16x256xf32>, vector<64x256xf32> -> vector<64x256xf32>
    %c0_4 = arith.constant 0 : index
    %c0_5 = arith.constant 0 : index
    %4 = vector.load %arg3[%c0_4, %c0_5] : memref<1x256xf32, #tpu.memory_space<vmem>>, vector<1x256xf32>
    %5 = vector.broadcast %4 : vector<1x256xf32> to vector<64x256xf32>
    %6 = arith.addf %3, %5 : vector<64x256xf32>
    %7 = vector.shape_cast %6 : vector<64x256xf32> to vector<8x8x256xf32>
    %c0_6 = arith.constant 0 : index
    %c0_7 = arith.constant 0 : index
    %c0_8 = arith.constant 0 : index
    %8 = vector.load %arg11[%c0_6, %c0_7, %c0_8] : memref<8x8x256xf32, #tpu.memory_space<vmem>>, vector<8x8x256xf32>
    tpu.vector_store %arg11[%c0_6, %c0_7, %c0_8], %7 {strides = array<i32>} : memref<8x8x256xf32, #tpu.memory_space<vmem>>, vector<8x8x256xf32>,
    %c0_9 = arith.constant 0 : index
    %c0_10 = arith.constant 0 : index
    %9 = vector.load %arg4[%c0_9, %c0_10] : memref<64x256xf32, #tpu.memory_space<vmem>>, vector<64x256xf32>
    %cst_11 = arith.constant 0.000000e+00 : f32
    %10 = vector.broadcast %cst_11 : f32 to vector<8x32xf32>
    %cst_12 = arith.constant 0.000000e+00 : f32
    %11 = vector.broadcast %cst_12 : f32 to vector<8x64xf32>
    %c0_i32 = arith.constant 0 : i32
    %c7_i32 = arith.constant 7 : i32
    %12 = arith.subi %c7_i32, %c0_i32 : i32
    %cst_13 = arith.constant dense<0.000000e+00> : vector<8x256xf32>
    %13 = tpu.matmul %11, %9, %cst_13 {dimension_numbers = #tpu.dot_dimension_numbers<[1], [0], [0], [1], [0, 0, 1, 1], [], []>} : vector<8x64xf32>, vector<64x256xf32>, vector<8x256xf32> -> vector<8x256xf32>
    %14 = arith.index_cast %c0_i32 : i32 to index
    %c0_14 = arith.constant 0 : index
    %c0_15 = arith.constant 0 : index
    %15 = vector.load %arg11[%14, %c0_14, %c0_15] : memref<8x8x256xf32, #tpu.memory_space<vmem>>, vector<1x8x128xf32>
    %16 = vector.shape_cast %15 : vector<1x8x128xf32> to vector<8x128xf32>
    %17 = vector.extract_strided_slice %13 {offsets = [0, 0], sizes = [8, 128], strides = [1, 1]} : vector<8x256xf32> to vector<8x128xf32>
    %18 = arith.addf %16, %17 : vector<8x128xf32>
    %19 = arith.index_cast %12 : i32 to index
    %c0_16 = arith.constant 0 : index
    %c128 = arith.constant 128 : index
    %20 = vector.load %arg11[%19, %c0_16, %c128] : memref<8x8x256xf32, #tpu.memory_space<vmem>>, vector<1x8x128xf32>
    %21 = vector.shape_cast %20 : vector<1x8x128xf32> to vector<8x128xf32>
    %22 = vector.extract_strided_slice %13 {offsets = [0, 128], sizes = [8, 128], strides = [1, 1]} : vector<8x256xf32> to vector<8x128xf32>
    %23 = arith.addf %21, %22 : vector<8x128xf32>
    %24 = arith.negf %18 : vector<8x128xf32>
    %25 = math.exp %24 : vector<8x128xf32>
    %cst_17 = arith.constant 1.000000e+00 : f32
    %26 = vector.broadcast %cst_17 : f32 to vector<8x128xf32>
    %27 = arith.addf %26, %25 : vector<8x128xf32>
    %28 = arith.divf %26, %27 : vector<8x128xf32>
    %29 = vector.extract_strided_slice %18 {offsets = [0, 64], sizes = [8, 32], strides = [1, 1]} : vector<8x128xf32> to vector<8x32xf32>
    %30 = math.tanh %29 : vector<8x32xf32>
    %31 = vector.extract_strided_slice %28 {offsets = [0, 32], sizes = [8, 32], strides = [1, 1]} : vector<8x128xf32> to vector<8x32xf32>
    %32 = arith.mulf %31, %10 : vector<8x32xf32>
    %33 = vector.extract_strided_slice %28 {offsets = [0, 0], sizes = [8, 32], strides = [1, 1]} : vector<8x128xf32> to vector<8x32xf32>
    %34 = arith.mulf %33, %30 : vector<8x32xf32>
    %35 = arith.addf %32, %34 : vector<8x32xf32>
    %36 = vector.extract_strided_slice %28 {offsets = [0, 96], sizes = [8, 32], strides = [1, 1]} : vector<8x128xf32> to vector<8x32xf32>
    %37 = math.tanh %35 : vector<8x32xf32>
    %38 = arith.mulf %36, %37 : vector<8x32xf32>
    %39 = arith.negf %23 : vector<8x128xf32>
    %40 = math.exp %39 : vector<8x128xf32>
    %cst_18 = arith.constant 1.000000e+00 : f32
    %41 = vector.broadcast %cst_18 : f32 to vector<8x128xf32>
    %42 = arith.addf %41, %40 : vector<8x128xf32>
    %43 = arith.divf %41, %42 : vector<8x128xf32>
    %44 = vector.extract_strided_slice %23 {offsets = [0, 64], sizes = [8, 32], strides = [1, 1]} : vector<8x128xf32> to vector<8x32xf32>
    %45 = math.tanh %44 : vector<8x32xf32>
    %46 = vector.extract_strided_slice %43 {offsets = [0, 32], sizes = [8, 32], strides = [1, 1]} : vector<8x128xf32> to vector<8x32xf32>
    %47 = arith.mulf %46, %10 : vector<8x32xf32>
    %48 = vector.extract_strided_slice %43 {offsets = [0, 0], sizes = [8, 32], strides = [1, 1]} : vector<8x128xf32> to vector<8x32xf32>
    %49 = arith.mulf %48, %45 : vector<8x32xf32>
    %50 = arith.addf %47, %49 : vector<8x32xf32>
    %51 = vector.extract_strided_slice %43 {offsets = [0, 96], sizes = [8, 32], strides = [1, 1]} : vector<8x128xf32> to vector<8x32xf32>
    %52 = math.tanh %50 : vector<8x32xf32>
    %53 = arith.mulf %51, %52 : vector<8x32xf32>
    %54 = tpu.concatenate %38, %53 in 1 : vector<8x32xf32>, vector<8x32xf32> -> vector<8x64xf32>
    %55 = arith.index_cast %c0_i32 : i32 to index
    %c0_19 = arith.constant 0 : index
    %c0_20 = arith.constant 0 : index
    %56 = vector.load %arg12[%55, %c0_19, %c0_20] : memref<8x8x64xf32, #tpu.memory_space<vmem>>, vector<1x8x32xf32>
    %57 = vector.shape_cast %56 : vector<1x8x32xf32> to vector<8x32xf32>
    %58 = vector.shape_cast %38 : vector<8x32xf32> to vector<1x8x32xf32>
    tpu.vector_store %arg12[%55, %c0_19, %c0_20], %58 {strides = array<i32>} : memref<8x8x64xf32, #tpu.memory_space<vmem>>, vector<1x8x32xf32>,
    %59 = arith.index_cast %12 : i32 to index
    %c0_21 = arith.constant 0 : index
    %c32 = arith.constant 32 : index
    %60 = vector.load %arg12[%59, %c0_21, %c32] : memref<8x8x64xf32, #tpu.memory_space<vmem>>, vector<1x8x32xf32>
    %61 = vector.shape_cast %60 : vector<1x8x32xf32> to vector<8x32xf32>
    %62 = vector.shape_cast %53 : vector<8x32xf32> to vector<1x8x32xf32>
    tpu.vector_store %arg12[%59, %c0_21, %c32], %62 {strides = array<i32>} : memref<8x8x64xf32, #tpu.memory_space<vmem>>, vector<1x8x32xf32>,
    %c1_i32 = arith.constant 1 : i32
    %c7_i32_22 = arith.constant 7 : i32
    %63 = arith.subi %c7_i32_22, %c1_i32 : i32
    %cst_23 = arith.constant dense<0.000000e+00> : vector<8x256xf32>
    %64 = tpu.matmul %54, %9, %cst_23 {dimension_numbers = #tpu.dot_dimension_numbers<[1], [0], [0], [1], [0, 0, 1, 1], [], []>} : vector<8x64xf32>, vector<64x256xf32>, vector<8x256xf32> -> vector<8x256xf32>
    %65 = arith.index_cast %c1_i32 : i32 to index
    %c0_24 = arith.constant 0 : index
    %c0_25 = arith.constant 0 : index
    %66 = vector.load %arg11[%65, %c0_24, %c0_25] : memref<8x8x256xf32, #tpu.memory_space<vmem>>, vector<1x8x128xf32>
    %67 = vector.shape_cast %66 : vector<1x8x128xf32> to vector<8x128xf32>
    %68 = vector.extract_strided_slice %64 {offsets = [0, 0], sizes = [8, 128], strides = [1, 1]} : vector<8x256xf32> to vector<8x128xf32>
    %69 = arith.addf %67, %68 : vector<8x128xf32>
    %70 = arith.index_cast %63 : i32 to index
    %c0_26 = arith.constant 0 : index
    %c128_27 = arith.constant 128 : index
    %71 = vector.load %arg11[%70, %c0_26, %c128_27] : memref<8x8x256xf32, #tpu.memory_space<vmem>>, vector<1x8x128xf32>
    %72 = vector.shape_cast %71 : vector<1x8x128xf32> to vector<8x128xf32>
    %73 = vector.extract_strided_slice %64 {offsets = [0, 128], sizes = [8, 128], strides = [1, 1]} : vector<8x256xf32> to vector<8x128xf32>
    %74 = arith.addf %72, %73 : vector<8x128xf32>
    %75 = arith.negf %69 : vector<8x128xf32>
    %76 = math.exp %75 : vector<8x128xf32>
    %cst_28 = arith.constant 1.000000e+00 : f32
    %77 = vector.broadcast %cst_28 : f32 to vector<8x128xf32>
    %78 = arith.addf %77, %76 : vector<8x128xf32>
    %79 = arith.divf %77, %78 : vector<8x128xf32>
    %80 = vector.extract_strided_slice %69 {offsets = [0, 64], sizes = [8, 32], strides = [1, 1]} : vector<8x128xf32> to vector<8x32xf32>
    %81 = math.tanh %80 : vector<8x32xf32>
    %82 = vector.extract_strided_slice %79 {offsets = [0, 32], sizes = [8, 32], strides = [1, 1]} : vector<8x128xf32> to vector<8x32xf32>
    %83 = arith.mulf %82, %35 : vector<8x32xf32>
    %84 = vector.extract_strided_slice %79 {offsets = [0, 0], sizes = [8, 32], strides = [1, 1]} : vector<8x128xf32> to vector<8x32xf32>
    %85 = arith.mulf %84, %81 : vector<8x32xf32>
    %86 = arith.addf %83, %85 : vector<8x32xf32>
    %87 = vector.extract_strided_slice %79 {offsets = [0, 96], sizes = [8, 32], strides = [1, 1]} : vector<8x128xf32> to vector<8x32xf32>
    %88 = math.tanh %86 : vector<8x32xf32>
    %89 = arith.mulf %87, %88 : vector<8x32xf32>
    %90 = arith.negf %74 : vector<8x128xf32>
    %91 = math.exp %90 : vector<8x128xf32>
    %cst_29 = arith.constant 1.000000e+00 : f32
    %92 = vector.broadcast %cst_29 : f32 to vector<8x128xf32>
    %93 = arith.addf %92, %91 : vector<8x128xf32>
    %94 = arith.divf %92, %93 : vector<8x128xf32>
    %95 = vector.extract_strided_slice %74 {offsets = [0, 64], sizes = [8, 32], strides = [1, 1]} : vector<8x128xf32> to vector<8x32xf32>
    %96 = math.tanh %95 : vector<8x32xf32>
    %97 = vector.extract_strided_slice %94 {offsets = [0, 32], sizes = [8, 32], strides = [1, 1]} : vector<8x128xf32> to vector<8x32xf32>
    %98 = arith.mulf %97, %50 : vector<8x32xf32>
    %99 = vector.extract_strided_slice %94 {offsets = [0, 0], sizes = [8, 32], strides = [1, 1]} : vector<8x128xf32> to vector<8x32xf32>
    %100 = arith.mulf %99, %96 : vector<8x32xf32>
    %101 = arith.addf %98, %100 : vector<8x32xf32>
    %102 = vector.extract_strided_slice %94 {offsets = [0, 96], sizes = [8, 32], strides = [1, 1]} : vector<8x128xf32> to vector<8x32xf32>
    %103 = math.tanh %101 : vector<8x32xf32>
    %104 = arith.mulf %102, %103 : vector<8x32xf32>
    %105 = tpu.concatenate %89, %104 in 1 : vector<8x32xf32>, vector<8x32xf32> -> vector<8x64xf32>
    %106 = arith.index_cast %c1_i32 : i32 to index
    %c0_30 = arith.constant 0 : index
    %c0_31 = arith.constant 0 : index
    %107 = vector.load %arg12[%106, %c0_30, %c0_31] : memref<8x8x64xf32, #tpu.memory_space<vmem>>, vector<1x8x32xf32>
    %108 = vector.shape_cast %107 : vector<1x8x32xf32> to vector<8x32xf32>
    %109 = vector.shape_cast %89 : vector<8x32xf32> to vector<1x8x32xf32>
    tpu.vector_store %arg12[%106, %c0_30, %c0_31], %109 {strides = array<i32>} : memref<8x8x64xf32, #tpu.memory_space<vmem>>, vector<1x8x32xf32>,
    %110 = arith.index_cast %63 : i32 to index
    %c0_32 = arith.constant 0 : index
    %c32_33 = arith.constant 32 : index
    %111 = vector.load %arg12[%110, %c0_32, %c32_33] : memref<8x8x64xf32, #tpu.memory_space<vmem>>, vector<1x8x32xf32>
    %112 = vector.shape_cast %111 : vector<1x8x32xf32> to vector<8x32xf32>
    %113 = vector.shape_cast %104 : vector<8x32xf32> to vector<1x8x32xf32>
    tpu.vector_store %arg12[%110, %c0_32, %c32_33], %113 {strides = array<i32>} : memref<8x8x64xf32, #tpu.memory_space<vmem>>, vector<1x8x32xf32>,
    %c2_i32 = arith.constant 2 : i32
    %c7_i32_34 = arith.constant 7 : i32
    %114 = arith.subi %c7_i32_34, %c2_i32 : i32
    %cst_35 = arith.constant dense<0.000000e+00> : vector<8x256xf32>
    %115 = tpu.matmul %105, %9, %cst_35 {dimension_numbers = #tpu.dot_dimension_numbers<[1], [0], [0], [1], [0, 0, 1, 1], [], []>} : vector<8x64xf32>, vector<64x256xf32>, vector<8x256xf32> -> vector<8x256xf32>
    %116 = arith.index_cast %c2_i32 : i32 to index
    %c0_36 = arith.constant 0 : index
    %c0_37 = arith.constant 0 : index
    %117 = vector.load %arg11[%116, %c0_36, %c0_37] : memref<8x8x256xf32, #tpu.memory_space<vmem>>, vector<1x8x128xf32>
    %118 = vector.shape_cast %117 : vector<1x8x128xf32> to vector<8x128xf32>
    %119 = vector.extract_strided_slice %115 {offsets = [0, 0], sizes = [8, 128], strides = [1, 1]} : vector<8x256xf32> to vector<8x128xf32>
    %120 = arith.addf %118, %119 : vector<8x128xf32>
    %121 = arith.index_cast %114 : i32 to index
    %c0_38 = arith.constant 0 : index
    %c128_39 = arith.constant 128 : index
    %122 = vector.load %arg11[%121, %c0_38, %c128_39] : memref<8x8x256xf32, #tpu.memory_space<vmem>>, vector<1x8x128xf32>
    %123 = vector.shape_cast %122 : vector<1x8x128xf32> to vector<8x128xf32>
    %124 = vector.extract_strided_slice %115 {offsets = [0, 128], sizes = [8, 128], strides = [1, 1]} : vector<8x256xf32> to vector<8x128xf32>
    %125 = arith.addf %123, %124 : vector<8x128xf32>
    %126 = arith.negf %120 : vector<8x128xf32>
    %127 = math.exp %126 : vector<8x128xf32>
    %cst_40 = arith.constant 1.000000e+00 : f32
    %128 = vector.broadcast %cst_40 : f32 to vector<8x128xf32>
    %129 = arith.addf %128, %127 : vector<8x128xf32>
    %130 = arith.divf %128, %129 : vector<8x128xf32>
    %131 = vector.extract_strided_slice %120 {offsets = [0, 64], sizes = [8, 32], strides = [1, 1]} : vector<8x128xf32> to vector<8x32xf32>
    %132 = math.tanh %131 : vector<8x32xf32>
    %133 = vector.extract_strided_slice %130 {offsets = [0, 32], sizes = [8, 32], strides = [1, 1]} : vector<8x128xf32> to vector<8x32xf32>
    %134 = arith.mulf %133, %86 : vector<8x32xf32>
    %135 = vector.extract_strided_slice %130 {offsets = [0, 0], sizes = [8, 32], strides = [1, 1]} : vector<8x128xf32> to vector<8x32xf32>
    %136 = arith.mulf %135, %132 : vector<8x32xf32>
    %137 = arith.addf %134, %136 : vector<8x32xf32>
    %138 = vector.extract_strided_slice %130 {offsets = [0, 96], sizes = [8, 32], strides = [1, 1]} : vector<8x128xf32> to vector<8x32xf32>
    %139 = math.tanh %137 : vector<8x32xf32>
    %140 = arith.mulf %138, %139 : vector<8x32xf32>
    %141 = arith.negf %125 : vector<8x128xf32>
    %142 = math.exp %141 : vector<8x128xf32>
    %cst_41 = arith.constant 1.000000e+00 : f32
    %143 = vector.broadcast %cst_41 : f32 to vector<8x128xf32>
    %144 = arith.addf %143, %142 : vector<8x128xf32>
    %145 = arith.divf %143, %144 : vector<8x128xf32>
    %146 = vector.extract_strided_slice %125 {offsets = [0, 64], sizes = [8, 32], strides = [1, 1]} : vector<8x128xf32> to vector<8x32xf32>
    %147 = math.tanh %146 : vector<8x32xf32>
    %148 = vector.extract_strided_slice %145 {offsets = [0, 32], sizes = [8, 32], strides = [1, 1]} : vector<8x128xf32> to vector<8x32xf32>
    %149 = arith.mulf %148, %101 : vector<8x32xf32>
    %150 = vector.extract_strided_slice %145 {offsets = [0, 0], sizes = [8, 32], strides = [1, 1]} : vector<8x128xf32> to vector<8x32xf32>
    %151 = arith.mulf %150, %147 : vector<8x32xf32>
    %152 = arith.addf %149, %151 : vector<8x32xf32>
    %153 = vector.extract_strided_slice %145 {offsets = [0, 96], sizes = [8, 32], strides = [1, 1]} : vector<8x128xf32> to vector<8x32xf32>
    %154 = math.tanh %152 : vector<8x32xf32>
    %155 = arith.mulf %153, %154 : vector<8x32xf32>
    %156 = tpu.concatenate %140, %155 in 1 : vector<8x32xf32>, vector<8x32xf32> -> vector<8x64xf32>
    %157 = arith.index_cast %c2_i32 : i32 to index
    %c0_42 = arith.constant 0 : index
    %c0_43 = arith.constant 0 : index
    %158 = vector.load %arg12[%157, %c0_42, %c0_43] : memref<8x8x64xf32, #tpu.memory_space<vmem>>, vector<1x8x32xf32>
    %159 = vector.shape_cast %158 : vector<1x8x32xf32> to vector<8x32xf32>
    %160 = vector.shape_cast %140 : vector<8x32xf32> to vector<1x8x32xf32>
    tpu.vector_store %arg12[%157, %c0_42, %c0_43], %160 {strides = array<i32>} : memref<8x8x64xf32, #tpu.memory_space<vmem>>, vector<1x8x32xf32>,
    %161 = arith.index_cast %114 : i32 to index
    %c0_44 = arith.constant 0 : index
    %c32_45 = arith.constant 32 : index
    %162 = vector.load %arg12[%161, %c0_44, %c32_45] : memref<8x8x64xf32, #tpu.memory_space<vmem>>, vector<1x8x32xf32>
    %163 = vector.shape_cast %162 : vector<1x8x32xf32> to vector<8x32xf32>
    %164 = vector.shape_cast %155 : vector<8x32xf32> to vector<1x8x32xf32>
    tpu.vector_store %arg12[%161, %c0_44, %c32_45], %164 {strides = array<i32>} : memref<8x8x64xf32, #tpu.memory_space<vmem>>, vector<1x8x32xf32>,
    %c3_i32 = arith.constant 3 : i32
    %c7_i32_46 = arith.constant 7 : i32
    %165 = arith.subi %c7_i32_46, %c3_i32 : i32
    %cst_47 = arith.constant dense<0.000000e+00> : vector<8x256xf32>
    %166 = tpu.matmul %156, %9, %cst_47 {dimension_numbers = #tpu.dot_dimension_numbers<[1], [0], [0], [1], [0, 0, 1, 1], [], []>} : vector<8x64xf32>, vector<64x256xf32>, vector<8x256xf32> -> vector<8x256xf32>
    %167 = arith.index_cast %c3_i32 : i32 to index
    %c0_48 = arith.constant 0 : index
    %c0_49 = arith.constant 0 : index
    %168 = vector.load %arg11[%167, %c0_48, %c0_49] : memref<8x8x256xf32, #tpu.memory_space<vmem>>, vector<1x8x128xf32>
    %169 = vector.shape_cast %168 : vector<1x8x128xf32> to vector<8x128xf32>
    %170 = vector.extract_strided_slice %166 {offsets = [0, 0], sizes = [8, 128], strides = [1, 1]} : vector<8x256xf32> to vector<8x128xf32>
    %171 = arith.addf %169, %170 : vector<8x128xf32>
    %172 = arith.index_cast %165 : i32 to index
    %c0_50 = arith.constant 0 : index
    %c128_51 = arith.constant 128 : index
    %173 = vector.load %arg11[%172, %c0_50, %c128_51] : memref<8x8x256xf32, #tpu.memory_space<vmem>>, vector<1x8x128xf32>
    %174 = vector.shape_cast %173 : vector<1x8x128xf32> to vector<8x128xf32>
    %175 = vector.extract_strided_slice %166 {offsets = [0, 128], sizes = [8, 128], strides = [1, 1]} : vector<8x256xf32> to vector<8x128xf32>
    %176 = arith.addf %174, %175 : vector<8x128xf32>
    %177 = arith.negf %171 : vector<8x128xf32>
    %178 = math.exp %177 : vector<8x128xf32>
    %cst_52 = arith.constant 1.000000e+00 : f32
    %179 = vector.broadcast %cst_52 : f32 to vector<8x128xf32>
    %180 = arith.addf %179, %178 : vector<8x128xf32>
    %181 = arith.divf %179, %180 : vector<8x128xf32>
    %182 = vector.extract_strided_slice %171 {offsets = [0, 64], sizes = [8, 32], strides = [1, 1]} : vector<8x128xf32> to vector<8x32xf32>
    %183 = math.tanh %182 : vector<8x32xf32>
    %184 = vector.extract_strided_slice %181 {offsets = [0, 32], sizes = [8, 32], strides = [1, 1]} : vector<8x128xf32> to vector<8x32xf32>
    %185 = arith.mulf %184, %137 : vector<8x32xf32>
    %186 = vector.extract_strided_slice %181 {offsets = [0, 0], sizes = [8, 32], strides = [1, 1]} : vector<8x128xf32> to vector<8x32xf32>
    %187 = arith.mulf %186, %183 : vector<8x32xf32>
    %188 = arith.addf %185, %187 : vector<8x32xf32>
    %189 = vector.extract_strided_slice %181 {offsets = [0, 96], sizes = [8, 32], strides = [1, 1]} : vector<8x128xf32> to vector<8x32xf32>
    %190 = math.tanh %188 : vector<8x32xf32>
    %191 = arith.mulf %189, %190 : vector<8x32xf32>
    %192 = arith.negf %176 : vector<8x128xf32>
    %193 = math.exp %192 : vector<8x128xf32>
    %cst_53 = arith.constant 1.000000e+00 : f32
    %194 = vector.broadcast %cst_53 : f32 to vector<8x128xf32>
    %195 = arith.addf %194, %193 : vector<8x128xf32>
    %196 = arith.divf %194, %195 : vector<8x128xf32>
    %197 = vector.extract_strided_slice %176 {offsets = [0, 64], sizes = [8, 32], strides = [1, 1]} : vector<8x128xf32> to vector<8x32xf32>
    %198 = math.tanh %197 : vector<8x32xf32>
    %199 = vector.extract_strided_slice %196 {offsets = [0, 32], sizes = [8, 32], strides = [1, 1]} : vector<8x128xf32> to vector<8x32xf32>
    %200 = arith.mulf %199, %152 : vector<8x32xf32>
    %201 = vector.extract_strided_slice %196 {offsets = [0, 0], sizes = [8, 32], strides = [1, 1]} : vector<8x128xf32> to vector<8x32xf32>
    %202 = arith.mulf %201, %198 : vector<8x32xf32>
    %203 = arith.addf %200, %202 : vector<8x32xf32>
    %204 = vector.extract_strided_slice %196 {offsets = [0, 96], sizes = [8, 32], strides = [1, 1]} : vector<8x128xf32> to vector<8x32xf32>
    %205 = math.tanh %203 : vector<8x32xf32>
    %206 = arith.mulf %204, %205 : vector<8x32xf32>
    %207 = tpu.concatenate %191, %206 in 1 : vector<8x32xf32>, vector<8x32xf32> -> vector<8x64xf32>
    %208 = arith.index_cast %c3_i32 : i32 to index
    %c0_54 = arith.constant 0 : index
    %c0_55 = arith.constant 0 : index
    %209 = vector.load %arg12[%208, %c0_54, %c0_55] : memref<8x8x64xf32, #tpu.memory_space<vmem>>, vector<1x8x32xf32>
    %210 = vector.shape_cast %209 : vector<1x8x32xf32> to vector<8x32xf32>
    %211 = vector.shape_cast %191 : vector<8x32xf32> to vector<1x8x32xf32>
    tpu.vector_store %arg12[%208, %c0_54, %c0_55], %211 {strides = array<i32>} : memref<8x8x64xf32, #tpu.memory_space<vmem>>, vector<1x8x32xf32>,
    %212 = arith.index_cast %165 : i32 to index
    %c0_56 = arith.constant 0 : index
    %c32_57 = arith.constant 32 : index
    %213 = vector.load %arg12[%212, %c0_56, %c32_57] : memref<8x8x64xf32, #tpu.memory_space<vmem>>, vector<1x8x32xf32>
    %214 = vector.shape_cast %213 : vector<1x8x32xf32> to vector<8x32xf32>
    %215 = vector.shape_cast %206 : vector<8x32xf32> to vector<1x8x32xf32>
    tpu.vector_store %arg12[%212, %c0_56, %c32_57], %215 {strides = array<i32>} : memref<8x8x64xf32, #tpu.memory_space<vmem>>, vector<1x8x32xf32>,
    %c4_i32 = arith.constant 4 : i32
    %c7_i32_58 = arith.constant 7 : i32
    %216 = arith.subi %c7_i32_58, %c4_i32 : i32
    %cst_59 = arith.constant dense<0.000000e+00> : vector<8x256xf32>
    %217 = tpu.matmul %207, %9, %cst_59 {dimension_numbers = #tpu.dot_dimension_numbers<[1], [0], [0], [1], [0, 0, 1, 1], [], []>} : vector<8x64xf32>, vector<64x256xf32>, vector<8x256xf32> -> vector<8x256xf32>
    %218 = arith.index_cast %c4_i32 : i32 to index
    %c0_60 = arith.constant 0 : index
    %c0_61 = arith.constant 0 : index
    %219 = vector.load %arg11[%218, %c0_60, %c0_61] : memref<8x8x256xf32, #tpu.memory_space<vmem>>, vector<1x8x128xf32>
    %220 = vector.shape_cast %219 : vector<1x8x128xf32> to vector<8x128xf32>
    %221 = vector.extract_strided_slice %217 {offsets = [0, 0], sizes = [8, 128], strides = [1, 1]} : vector<8x256xf32> to vector<8x128xf32>
    %222 = arith.addf %220, %221 : vector<8x128xf32>
    %223 = arith.index_cast %216 : i32 to index
    %c0_62 = arith.constant 0 : index
    %c128_63 = arith.constant 128 : index
    %224 = vector.load %arg11[%223, %c0_62, %c128_63] : memref<8x8x256xf32, #tpu.memory_space<vmem>>, vector<1x8x128xf32>
    %225 = vector.shape_cast %224 : vector<1x8x128xf32> to vector<8x128xf32>
    %226 = vector.extract_strided_slice %217 {offsets = [0, 128], sizes = [8, 128], strides = [1, 1]} : vector<8x256xf32> to vector<8x128xf32>
    %227 = arith.addf %225, %226 : vector<8x128xf32>
    %228 = arith.negf %222 : vector<8x128xf32>
    %229 = math.exp %228 : vector<8x128xf32>
    %cst_64 = arith.constant 1.000000e+00 : f32
    %230 = vector.broadcast %cst_64 : f32 to vector<8x128xf32>
    %231 = arith.addf %230, %229 : vector<8x128xf32>
    %232 = arith.divf %230, %231 : vector<8x128xf32>
    %233 = vector.extract_strided_slice %222 {offsets = [0, 64], sizes = [8, 32], strides = [1, 1]} : vector<8x128xf32> to vector<8x32xf32>
    %234 = math.tanh %233 : vector<8x32xf32>
    %235 = vector.extract_strided_slice %232 {offsets = [0, 32], sizes = [8, 32], strides = [1, 1]} : vector<8x128xf32> to vector<8x32xf32>
    %236 = arith.mulf %235, %188 : vector<8x32xf32>
    %237 = vector.extract_strided_slice %232 {offsets = [0, 0], sizes = [8, 32], strides = [1, 1]} : vector<8x128xf32> to vector<8x32xf32>
    %238 = arith.mulf %237, %234 : vector<8x32xf32>
    %239 = arith.addf %236, %238 : vector<8x32xf32>
    %240 = vector.extract_strided_slice %232 {offsets = [0, 96], sizes = [8, 32], strides = [1, 1]} : vector<8x128xf32> to vector<8x32xf32>
    %241 = math.tanh %239 : vector<8x32xf32>
    %242 = arith.mulf %240, %241 : vector<8x32xf32>
    %243 = arith.negf %227 : vector<8x128xf32>
    %244 = math.exp %243 : vector<8x128xf32>
    %cst_65 = arith.constant 1.000000e+00 : f32
    %245 = vector.broadcast %cst_65 : f32 to vector<8x128xf32>
    %246 = arith.addf %245, %244 : vector<8x128xf32>
    %247 = arith.divf %245, %246 : vector<8x128xf32>
    %248 = vector.extract_strided_slice %227 {offsets = [0, 64], sizes = [8, 32], strides = [1, 1]} : vector<8x128xf32> to vector<8x32xf32>
    %249 = math.tanh %248 : vector<8x32xf32>
    %250 = vector.extract_strided_slice %247 {offsets = [0, 32], sizes = [8, 32], strides = [1, 1]} : vector<8x128xf32> to vector<8x32xf32>
    %251 = arith.mulf %250, %203 : vector<8x32xf32>
    %252 = vector.extract_strided_slice %247 {offsets = [0, 0], sizes = [8, 32], strides = [1, 1]} : vector<8x128xf32> to vector<8x32xf32>
    %253 = arith.mulf %252, %249 : vector<8x32xf32>
    %254 = arith.addf %251, %253 : vector<8x32xf32>
    %255 = vector.extract_strided_slice %247 {offsets = [0, 96], sizes = [8, 32], strides = [1, 1]} : vector<8x128xf32> to vector<8x32xf32>
    %256 = math.tanh %254 : vector<8x32xf32>
    %257 = arith.mulf %255, %256 : vector<8x32xf32>
    %258 = tpu.concatenate %242, %257 in 1 : vector<8x32xf32>, vector<8x32xf32> -> vector<8x64xf32>
    %259 = arith.index_cast %c4_i32 : i32 to index
    %c0_66 = arith.constant 0 : index
    %c0_67 = arith.constant 0 : index
    %260 = vector.load %arg12[%259, %c0_66, %c0_67] : memref<8x8x64xf32, #tpu.memory_space<vmem>>, vector<1x8x32xf32>
    %261 = vector.shape_cast %260 : vector<1x8x32xf32> to vector<8x32xf32>
    %262 = vector.shape_cast %242 : vector<8x32xf32> to vector<1x8x32xf32>
    tpu.vector_store %arg12[%259, %c0_66, %c0_67], %262 {strides = array<i32>} : memref<8x8x64xf32, #tpu.memory_space<vmem>>, vector<1x8x32xf32>,
    %263 = arith.index_cast %216 : i32 to index
    %c0_68 = arith.constant 0 : index
    %c32_69 = arith.constant 32 : index
    %264 = vector.load %arg12[%263, %c0_68, %c32_69] : memref<8x8x64xf32, #tpu.memory_space<vmem>>, vector<1x8x32xf32>
    %265 = vector.shape_cast %264 : vector<1x8x32xf32> to vector<8x32xf32>
    %266 = vector.shape_cast %257 : vector<8x32xf32> to vector<1x8x32xf32>
    tpu.vector_store %arg12[%263, %c0_68, %c32_69], %266 {strides = array<i32>} : memref<8x8x64xf32, #tpu.memory_space<vmem>>, vector<1x8x32xf32>,
    %c5_i32 = arith.constant 5 : i32
    %c7_i32_70 = arith.constant 7 : i32
    %267 = arith.subi %c7_i32_70, %c5_i32 : i32
    %cst_71 = arith.constant dense<0.000000e+00> : vector<8x256xf32>
    %268 = tpu.matmul %258, %9, %cst_71 {dimension_numbers = #tpu.dot_dimension_numbers<[1], [0], [0], [1], [0, 0, 1, 1], [], []>} : vector<8x64xf32>, vector<64x256xf32>, vector<8x256xf32> -> vector<8x256xf32>
    %269 = arith.index_cast %c5_i32 : i32 to index
    %c0_72 = arith.constant 0 : index
    %c0_73 = arith.constant 0 : index
    %270 = vector.load %arg11[%269, %c0_72, %c0_73] : memref<8x8x256xf32, #tpu.memory_space<vmem>>, vector<1x8x128xf32>
    %271 = vector.shape_cast %270 : vector<1x8x128xf32> to vector<8x128xf32>
    %272 = vector.extract_strided_slice %268 {offsets = [0, 0], sizes = [8, 128], strides = [1, 1]} : vector<8x256xf32> to vector<8x128xf32>
    %273 = arith.addf %271, %272 : vector<8x128xf32>
    %274 = arith.index_cast %267 : i32 to index
    %c0_74 = arith.constant 0 : index
    %c128_75 = arith.constant 128 : index
    %275 = vector.load %arg11[%274, %c0_74, %c128_75] : memref<8x8x256xf32, #tpu.memory_space<vmem>>, vector<1x8x128xf32>
    %276 = vector.shape_cast %275 : vector<1x8x128xf32> to vector<8x128xf32>
    %277 = vector.extract_strided_slice %268 {offsets = [0, 128], sizes = [8, 128], strides = [1, 1]} : vector<8x256xf32> to vector<8x128xf32>
    %278 = arith.addf %276, %277 : vector<8x128xf32>
    %279 = arith.negf %273 : vector<8x128xf32>
    %280 = math.exp %279 : vector<8x128xf32>
    %cst_76 = arith.constant 1.000000e+00 : f32
    %281 = vector.broadcast %cst_76 : f32 to vector<8x128xf32>
    %282 = arith.addf %281, %280 : vector<8x128xf32>
    %283 = arith.divf %281, %282 : vector<8x128xf32>
    %284 = vector.extract_strided_slice %273 {offsets = [0, 64], sizes = [8, 32], strides = [1, 1]} : vector<8x128xf32> to vector<8x32xf32>
    %285 = math.tanh %284 : vector<8x32xf32>
    %286 = vector.extract_strided_slice %283 {offsets = [0, 32], sizes = [8, 32], strides = [1, 1]} : vector<8x128xf32> to vector<8x32xf32>
    %287 = arith.mulf %286, %239 : vector<8x32xf32>
    %288 = vector.extract_strided_slice %283 {offsets = [0, 0], sizes = [8, 32], strides = [1, 1]} : vector<8x128xf32> to vector<8x32xf32>
    %289 = arith.mulf %288, %285 : vector<8x32xf32>
    %290 = arith.addf %287, %289 : vector<8x32xf32>
    %291 = vector.extract_strided_slice %283 {offsets = [0, 96], sizes = [8, 32], strides = [1, 1]} : vector<8x128xf32> to vector<8x32xf32>
    %292 = math.tanh %290 : vector<8x32xf32>
    %293 = arith.mulf %291, %292 : vector<8x32xf32>
    %294 = arith.negf %278 : vector<8x128xf32>
    %295 = math.exp %294 : vector<8x128xf32>
    %cst_77 = arith.constant 1.000000e+00 : f32
    %296 = vector.broadcast %cst_77 : f32 to vector<8x128xf32>
    %297 = arith.addf %296, %295 : vector<8x128xf32>
    %298 = arith.divf %296, %297 : vector<8x128xf32>
    %299 = vector.extract_strided_slice %278 {offsets = [0, 64], sizes = [8, 32], strides = [1, 1]} : vector<8x128xf32> to vector<8x32xf32>
    %300 = math.tanh %299 : vector<8x32xf32>
    %301 = vector.extract_strided_slice %298 {offsets = [0, 32], sizes = [8, 32], strides = [1, 1]} : vector<8x128xf32> to vector<8x32xf32>
    %302 = arith.mulf %301, %254 : vector<8x32xf32>
    %303 = vector.extract_strided_slice %298 {offsets = [0, 0], sizes = [8, 32], strides = [1, 1]} : vector<8x128xf32> to vector<8x32xf32>
    %304 = arith.mulf %303, %300 : vector<8x32xf32>
    %305 = arith.addf %302, %304 : vector<8x32xf32>
    %306 = vector.extract_strided_slice %298 {offsets = [0, 96], sizes = [8, 32], strides = [1, 1]} : vector<8x128xf32> to vector<8x32xf32>
    %307 = math.tanh %305 : vector<8x32xf32>
    %308 = arith.mulf %306, %307 : vector<8x32xf32>
    %309 = tpu.concatenate %293, %308 in 1 : vector<8x32xf32>, vector<8x32xf32> -> vector<8x64xf32>
    %310 = arith.index_cast %c5_i32 : i32 to index
    %c0_78 = arith.constant 0 : index
    %c0_79 = arith.constant 0 : index
    %311 = vector.load %arg12[%310, %c0_78, %c0_79] : memref<8x8x64xf32, #tpu.memory_space<vmem>>, vector<1x8x32xf32>
    %312 = vector.shape_cast %311 : vector<1x8x32xf32> to vector<8x32xf32>
    %313 = vector.shape_cast %293 : vector<8x32xf32> to vector<1x8x32xf32>
    tpu.vector_store %arg12[%310, %c0_78, %c0_79], %313 {strides = array<i32>} : memref<8x8x64xf32, #tpu.memory_space<vmem>>, vector<1x8x32xf32>,
    %314 = arith.index_cast %267 : i32 to index
    %c0_80 = arith.constant 0 : index
    %c32_81 = arith.constant 32 : index
    %315 = vector.load %arg12[%314, %c0_80, %c32_81] : memref<8x8x64xf32, #tpu.memory_space<vmem>>, vector<1x8x32xf32>
    %316 = vector.shape_cast %315 : vector<1x8x32xf32> to vector<8x32xf32>
    %317 = vector.shape_cast %308 : vector<8x32xf32> to vector<1x8x32xf32>
    tpu.vector_store %arg12[%314, %c0_80, %c32_81], %317 {strides = array<i32>} : memref<8x8x64xf32, #tpu.memory_space<vmem>>, vector<1x8x32xf32>,
    %c6_i32 = arith.constant 6 : i32
    %c7_i32_82 = arith.constant 7 : i32
    %318 = arith.subi %c7_i32_82, %c6_i32 : i32
    %cst_83 = arith.constant dense<0.000000e+00> : vector<8x256xf32>
    %319 = tpu.matmul %309, %9, %cst_83 {dimension_numbers = #tpu.dot_dimension_numbers<[1], [0], [0], [1], [0, 0, 1, 1], [], []>} : vector<8x64xf32>, vector<64x256xf32>, vector<8x256xf32> -> vector<8x256xf32>
    %320 = arith.index_cast %c6_i32 : i32 to index
    %c0_84 = arith.constant 0 : index
    %c0_85 = arith.constant 0 : index
    %321 = vector.load %arg11[%320, %c0_84, %c0_85] : memref<8x8x256xf32, #tpu.memory_space<vmem>>, vector<1x8x128xf32>
    %322 = vector.shape_cast %321 : vector<1x8x128xf32> to vector<8x128xf32>
    %323 = vector.extract_strided_slice %319 {offsets = [0, 0], sizes = [8, 128], strides = [1, 1]} : vector<8x256xf32> to vector<8x128xf32>
    %324 = arith.addf %322, %323 : vector<8x128xf32>
    %325 = arith.index_cast %318 : i32 to index
    %c0_86 = arith.constant 0 : index
    %c128_87 = arith.constant 128 : index
    %326 = vector.load %arg11[%325, %c0_86, %c128_87] : memref<8x8x256xf32, #tpu.memory_space<vmem>>, vector<1x8x128xf32>
    %327 = vector.shape_cast %326 : vector<1x8x128xf32> to vector<8x128xf32>
    %328 = vector.extract_strided_slice %319 {offsets = [0, 128], sizes = [8, 128], strides = [1, 1]} : vector<8x256xf32> to vector<8x128xf32>
    %329 = arith.addf %327, %328 : vector<8x128xf32>
    %330 = arith.negf %324 : vector<8x128xf32>
    %331 = math.exp %330 : vector<8x128xf32>
    %cst_88 = arith.constant 1.000000e+00 : f32
    %332 = vector.broadcast %cst_88 : f32 to vector<8x128xf32>
    %333 = arith.addf %332, %331 : vector<8x128xf32>
    %334 = arith.divf %332, %333 : vector<8x128xf32>
    %335 = vector.extract_strided_slice %324 {offsets = [0, 64], sizes = [8, 32], strides = [1, 1]} : vector<8x128xf32> to vector<8x32xf32>
    %336 = math.tanh %335 : vector<8x32xf32>
    %337 = vector.extract_strided_slice %334 {offsets = [0, 32], sizes = [8, 32], strides = [1, 1]} : vector<8x128xf32> to vector<8x32xf32>
    %338 = arith.mulf %337, %290 : vector<8x32xf32>
    %339 = vector.extract_strided_slice %334 {offsets = [0, 0], sizes = [8, 32], strides = [1, 1]} : vector<8x128xf32> to vector<8x32xf32>
    %340 = arith.mulf %339, %336 : vector<8x32xf32>
    %341 = arith.addf %338, %340 : vector<8x32xf32>
    %342 = vector.extract_strided_slice %334 {offsets = [0, 96], sizes = [8, 32], strides = [1, 1]} : vector<8x128xf32> to vector<8x32xf32>
    %343 = math.tanh %341 : vector<8x32xf32>
    %344 = arith.mulf %342, %343 : vector<8x32xf32>
    %345 = arith.negf %329 : vector<8x128xf32>
    %346 = math.exp %345 : vector<8x128xf32>
    %cst_89 = arith.constant 1.000000e+00 : f32
    %347 = vector.broadcast %cst_89 : f32 to vector<8x128xf32>
    %348 = arith.addf %347, %346 : vector<8x128xf32>
    %349 = arith.divf %347, %348 : vector<8x128xf32>
    %350 = vector.extract_strided_slice %329 {offsets = [0, 64], sizes = [8, 32], strides = [1, 1]} : vector<8x128xf32> to vector<8x32xf32>
    %351 = math.tanh %350 : vector<8x32xf32>
    %352 = vector.extract_strided_slice %349 {offsets = [0, 32], sizes = [8, 32], strides = [1, 1]} : vector<8x128xf32> to vector<8x32xf32>
    %353 = arith.mulf %352, %305 : vector<8x32xf32>
    %354 = vector.extract_strided_slice %349 {offsets = [0, 0], sizes = [8, 32], strides = [1, 1]} : vector<8x128xf32> to vector<8x32xf32>
    %355 = arith.mulf %354, %351 : vector<8x32xf32>
    %356 = arith.addf %353, %355 : vector<8x32xf32>
    %357 = vector.extract_strided_slice %349 {offsets = [0, 96], sizes = [8, 32], strides = [1, 1]} : vector<8x128xf32> to vector<8x32xf32>
    %358 = math.tanh %356 : vector<8x32xf32>
    %359 = arith.mulf %357, %358 : vector<8x32xf32>
    %360 = tpu.concatenate %344, %359 in 1 : vector<8x32xf32>, vector<8x32xf32> -> vector<8x64xf32>
    %361 = arith.index_cast %c6_i32 : i32 to index
    %c0_90 = arith.constant 0 : index
    %c0_91 = arith.constant 0 : index
    %362 = vector.load %arg12[%361, %c0_90, %c0_91] : memref<8x8x64xf32, #tpu.memory_space<vmem>>, vector<1x8x32xf32>
    %363 = vector.shape_cast %362 : vector<1x8x32xf32> to vector<8x32xf32>
    %364 = vector.shape_cast %344 : vector<8x32xf32> to vector<1x8x32xf32>
    tpu.vector_store %arg12[%361, %c0_90, %c0_91], %364 {strides = array<i32>} : memref<8x8x64xf32, #tpu.memory_space<vmem>>, vector<1x8x32xf32>,
    %365 = arith.index_cast %318 : i32 to index
    %c0_92 = arith.constant 0 : index
    %c32_93 = arith.constant 32 : index
    %366 = vector.load %arg12[%365, %c0_92, %c32_93] : memref<8x8x64xf32, #tpu.memory_space<vmem>>, vector<1x8x32xf32>
    %367 = vector.shape_cast %366 : vector<1x8x32xf32> to vector<8x32xf32>
    %368 = vector.shape_cast %359 : vector<8x32xf32> to vector<1x8x32xf32>
    tpu.vector_store %arg12[%365, %c0_92, %c32_93], %368 {strides = array<i32>} : memref<8x8x64xf32, #tpu.memory_space<vmem>>, vector<1x8x32xf32>,
    %c7_i32_94 = arith.constant 7 : i32
    %c7_i32_95 = arith.constant 7 : i32
    %369 = arith.subi %c7_i32_95, %c7_i32_94 : i32
    %cst_96 = arith.constant dense<0.000000e+00> : vector<8x256xf32>
    %370 = tpu.matmul %360, %9, %cst_96 {dimension_numbers = #tpu.dot_dimension_numbers<[1], [0], [0], [1], [0, 0, 1, 1], [], []>} : vector<8x64xf32>, vector<64x256xf32>, vector<8x256xf32> -> vector<8x256xf32>
    %371 = arith.index_cast %c7_i32_94 : i32 to index
    %c0_97 = arith.constant 0 : index
    %c0_98 = arith.constant 0 : index
    %372 = vector.load %arg11[%371, %c0_97, %c0_98] : memref<8x8x256xf32, #tpu.memory_space<vmem>>, vector<1x8x128xf32>
    %373 = vector.shape_cast %372 : vector<1x8x128xf32> to vector<8x128xf32>
    %374 = vector.extract_strided_slice %370 {offsets = [0, 0], sizes = [8, 128], strides = [1, 1]} : vector<8x256xf32> to vector<8x128xf32>
    %375 = arith.addf %373, %374 : vector<8x128xf32>
    %376 = arith.index_cast %369 : i32 to index
    %c0_99 = arith.constant 0 : index
    %c128_100 = arith.constant 128 : index
    %377 = vector.load %arg11[%376, %c0_99, %c128_100] : memref<8x8x256xf32, #tpu.memory_space<vmem>>, vector<1x8x128xf32>
    %378 = vector.shape_cast %377 : vector<1x8x128xf32> to vector<8x128xf32>
    %379 = vector.extract_strided_slice %370 {offsets = [0, 128], sizes = [8, 128], strides = [1, 1]} : vector<8x256xf32> to vector<8x128xf32>
    %380 = arith.addf %378, %379 : vector<8x128xf32>
    %381 = arith.negf %375 : vector<8x128xf32>
    %382 = math.exp %381 : vector<8x128xf32>
    %cst_101 = arith.constant 1.000000e+00 : f32
    %383 = vector.broadcast %cst_101 : f32 to vector<8x128xf32>
    %384 = arith.addf %383, %382 : vector<8x128xf32>
    %385 = arith.divf %383, %384 : vector<8x128xf32>
    %386 = vector.extract_strided_slice %375 {offsets = [0, 64], sizes = [8, 32], strides = [1, 1]} : vector<8x128xf32> to vector<8x32xf32>
    %387 = math.tanh %386 : vector<8x32xf32>
    %388 = vector.extract_strided_slice %385 {offsets = [0, 32], sizes = [8, 32], strides = [1, 1]} : vector<8x128xf32> to vector<8x32xf32>
    %389 = arith.mulf %388, %341 : vector<8x32xf32>
    %390 = vector.extract_strided_slice %385 {offsets = [0, 0], sizes = [8, 32], strides = [1, 1]} : vector<8x128xf32> to vector<8x32xf32>
    %391 = arith.mulf %390, %387 : vector<8x32xf32>
    %392 = arith.addf %389, %391 : vector<8x32xf32>
    %393 = vector.extract_strided_slice %385 {offsets = [0, 96], sizes = [8, 32], strides = [1, 1]} : vector<8x128xf32> to vector<8x32xf32>
    %394 = math.tanh %392 : vector<8x32xf32>
    %395 = arith.mulf %393, %394 : vector<8x32xf32>
    %396 = arith.negf %380 : vector<8x128xf32>
    %397 = math.exp %396 : vector<8x128xf32>
    %cst_102 = arith.constant 1.000000e+00 : f32
    %398 = vector.broadcast %cst_102 : f32 to vector<8x128xf32>
    %399 = arith.addf %398, %397 : vector<8x128xf32>
    %400 = arith.divf %398, %399 : vector<8x128xf32>
    %401 = vector.extract_strided_slice %380 {offsets = [0, 64], sizes = [8, 32], strides = [1, 1]} : vector<8x128xf32> to vector<8x32xf32>
    %402 = math.tanh %401 : vector<8x32xf32>
    %403 = vector.extract_strided_slice %400 {offsets = [0, 32], sizes = [8, 32], strides = [1, 1]} : vector<8x128xf32> to vector<8x32xf32>
    %404 = arith.mulf %403, %356 : vector<8x32xf32>
    %405 = vector.extract_strided_slice %400 {offsets = [0, 0], sizes = [8, 32], strides = [1, 1]} : vector<8x128xf32> to vector<8x32xf32>
    %406 = arith.mulf %405, %402 : vector<8x32xf32>
    %407 = arith.addf %404, %406 : vector<8x32xf32>
    %408 = vector.extract_strided_slice %400 {offsets = [0, 96], sizes = [8, 32], strides = [1, 1]} : vector<8x128xf32> to vector<8x32xf32>
    %409 = math.tanh %407 : vector<8x32xf32>
    %410 = arith.mulf %408, %409 : vector<8x32xf32>
    %411 = tpu.concatenate %395, %410 in 1 : vector<8x32xf32>, vector<8x32xf32> -> vector<8x64xf32>
    %412 = arith.index_cast %c7_i32_94 : i32 to index
    %c0_103 = arith.constant 0 : index
    %c0_104 = arith.constant 0 : index
    %413 = vector.load %arg12[%412, %c0_103, %c0_104] : memref<8x8x64xf32, #tpu.memory_space<vmem>>, vector<1x8x32xf32>
    %414 = vector.shape_cast %413 : vector<1x8x32xf32> to vector<8x32xf32>
    %415 = vector.shape_cast %395 : vector<8x32xf32> to vector<1x8x32xf32>
    tpu.vector_store %arg12[%412, %c0_103, %c0_104], %415 {strides = array<i32>} : memref<8x8x64xf32, #tpu.memory_space<vmem>>, vector<1x8x32xf32>,
    %416 = arith.index_cast %369 : i32 to index
    %c0_105 = arith.constant 0 : index
    %c32_106 = arith.constant 32 : index
    %417 = vector.load %arg12[%416, %c0_105, %c32_106] : memref<8x8x64xf32, #tpu.memory_space<vmem>>, vector<1x8x32xf32>
    %418 = vector.shape_cast %417 : vector<1x8x32xf32> to vector<8x32xf32>
    %419 = vector.shape_cast %410 : vector<8x32xf32> to vector<1x8x32xf32>
    tpu.vector_store %arg12[%416, %c0_105, %c32_106], %419 {strides = array<i32>} : memref<8x8x64xf32, #tpu.memory_space<vmem>>, vector<1x8x32xf32>,
    %c8_i32 = arith.constant 8 : i32
    %c0_107 = arith.constant 0 : index
    %c0_108 = arith.constant 0 : index
    %c0_109 = arith.constant 0 : index
    %420 = vector.load %arg12[%c0_107, %c0_108, %c0_109] : memref<8x8x64xf32, #tpu.memory_space<vmem>>, vector<8x8x64xf32>
    %421 = vector.shape_cast %420 : vector<8x8x64xf32> to vector<64x64xf32>
    %c0_110 = arith.constant 0 : index
    %c0_111 = arith.constant 0 : index
    %422 = vector.load %arg5[%c0_110, %c0_111] : memref<64x256xf32, #tpu.memory_space<vmem>>, vector<64x256xf32>
    %cst_112 = arith.constant dense<0.000000e+00> : vector<64x256xf32>
    %423 = tpu.matmul %421, %422, %cst_112 {dimension_numbers = #tpu.dot_dimension_numbers<[1], [0], [0], [1], [0, 0, 1, 1], [], []>} : vector<64x64xf32>, vector<64x256xf32>, vector<64x256xf32> -> vector<64x256xf32>
    %c0_113 = arith.constant 0 : index
    %c0_114 = arith.constant 0 : index
    %424 = vector.load %arg6[%c0_113, %c0_114] : memref<1x256xf32, #tpu.memory_space<vmem>>, vector<1x256xf32>
    %425 = vector.broadcast %424 : vector<1x256xf32> to vector<64x256xf32>
    %426 = arith.addf %423, %425 : vector<64x256xf32>
    %427 = vector.shape_cast %426 : vector<64x256xf32> to vector<8x8x256xf32>
    %c0_115 = arith.constant 0 : index
    %c0_116 = arith.constant 0 : index
    %c0_117 = arith.constant 0 : index
    %428 = vector.load %arg11[%c0_115, %c0_116, %c0_117] : memref<8x8x256xf32, #tpu.memory_space<vmem>>, vector<8x8x256xf32>
    tpu.vector_store %arg11[%c0_115, %c0_116, %c0_117], %427 {strides = array<i32>} : memref<8x8x256xf32, #tpu.memory_space<vmem>>, vector<8x8x256xf32>,
    %c0_118 = arith.constant 0 : index
    %c0_119 = arith.constant 0 : index
    %429 = vector.load %arg7[%c0_118, %c0_119] : memref<64x256xf32, #tpu.memory_space<vmem>>, vector<64x256xf32>
    %cst_120 = arith.constant 0.000000e+00 : f32
    %430 = vector.broadcast %cst_120 : f32 to vector<8x32xf32>
    %cst_121 = arith.constant 0.000000e+00 : f32
    %431 = vector.broadcast %cst_121 : f32 to vector<8x64xf32>
    %c0_i32_122 = arith.constant 0 : i32
    %c7_i32_123 = arith.constant 7 : i32
    %432 = arith.subi %c7_i32_123, %c0_i32_122 : i32
    %cst_124 = arith.constant dense<0.000000e+00> : vector<8x256xf32>
    %433 = tpu.matmul %431, %429, %cst_124 {dimension_numbers = #tpu.dot_dimension_numbers<[1], [0], [0], [1], [0, 0, 1, 1], [], []>} : vector<8x64xf32>, vector<64x256xf32>, vector<8x256xf32> -> vector<8x256xf32>
    %434 = arith.index_cast %c0_i32_122 : i32 to index
    %c0_125 = arith.constant 0 : index
    %c0_126 = arith.constant 0 : index
    %435 = vector.load %arg11[%434, %c0_125, %c0_126] : memref<8x8x256xf32, #tpu.memory_space<vmem>>, vector<1x8x128xf32>
    %436 = vector.shape_cast %435 : vector<1x8x128xf32> to vector<8x128xf32>
    %437 = vector.extract_strided_slice %433 {offsets = [0, 0], sizes = [8, 128], strides = [1, 1]} : vector<8x256xf32> to vector<8x128xf32>
    %438 = arith.addf %436, %437 : vector<8x128xf32>
    %439 = arith.index_cast %432 : i32 to index
    %c0_127 = arith.constant 0 : index
    %c128_128 = arith.constant 128 : index
    %440 = vector.load %arg11[%439, %c0_127, %c128_128] : memref<8x8x256xf32, #tpu.memory_space<vmem>>, vector<1x8x128xf32>
    %441 = vector.shape_cast %440 : vector<1x8x128xf32> to vector<8x128xf32>
    %442 = vector.extract_strided_slice %433 {offsets = [0, 128], sizes = [8, 128], strides = [1, 1]} : vector<8x256xf32> to vector<8x128xf32>
    %443 = arith.addf %441, %442 : vector<8x128xf32>
    %444 = arith.negf %438 : vector<8x128xf32>
    %445 = math.exp %444 : vector<8x128xf32>
    %cst_129 = arith.constant 1.000000e+00 : f32
    %446 = vector.broadcast %cst_129 : f32 to vector<8x128xf32>
    %447 = arith.addf %446, %445 : vector<8x128xf32>
    %448 = arith.divf %446, %447 : vector<8x128xf32>
    %449 = vector.extract_strided_slice %438 {offsets = [0, 64], sizes = [8, 32], strides = [1, 1]} : vector<8x128xf32> to vector<8x32xf32>
    %450 = math.tanh %449 : vector<8x32xf32>
    %451 = vector.extract_strided_slice %448 {offsets = [0, 32], sizes = [8, 32], strides = [1, 1]} : vector<8x128xf32> to vector<8x32xf32>
    %452 = arith.mulf %451, %430 : vector<8x32xf32>
    %453 = vector.extract_strided_slice %448 {offsets = [0, 0], sizes = [8, 32], strides = [1, 1]} : vector<8x128xf32> to vector<8x32xf32>
    %454 = arith.mulf %453, %450 : vector<8x32xf32>
    %455 = arith.addf %452, %454 : vector<8x32xf32>
    %456 = vector.extract_strided_slice %448 {offsets = [0, 96], sizes = [8, 32], strides = [1, 1]} : vector<8x128xf32> to vector<8x32xf32>
    %457 = math.tanh %455 : vector<8x32xf32>
    %458 = arith.mulf %456, %457 : vector<8x32xf32>
    %459 = arith.negf %443 : vector<8x128xf32>
    %460 = math.exp %459 : vector<8x128xf32>
    %cst_130 = arith.constant 1.000000e+00 : f32
    %461 = vector.broadcast %cst_130 : f32 to vector<8x128xf32>
    %462 = arith.addf %461, %460 : vector<8x128xf32>
    %463 = arith.divf %461, %462 : vector<8x128xf32>
    %464 = vector.extract_strided_slice %443 {offsets = [0, 64], sizes = [8, 32], strides = [1, 1]} : vector<8x128xf32> to vector<8x32xf32>
    %465 = math.tanh %464 : vector<8x32xf32>
    %466 = vector.extract_strided_slice %463 {offsets = [0, 32], sizes = [8, 32], strides = [1, 1]} : vector<8x128xf32> to vector<8x32xf32>
    %467 = arith.mulf %466, %430 : vector<8x32xf32>
    %468 = vector.extract_strided_slice %463 {offsets = [0, 0], sizes = [8, 32], strides = [1, 1]} : vector<8x128xf32> to vector<8x32xf32>
    %469 = arith.mulf %468, %465 : vector<8x32xf32>
    %470 = arith.addf %467, %469 : vector<8x32xf32>
    %471 = vector.extract_strided_slice %463 {offsets = [0, 96], sizes = [8, 32], strides = [1, 1]} : vector<8x128xf32> to vector<8x32xf32>
    %472 = math.tanh %470 : vector<8x32xf32>
    %473 = arith.mulf %471, %472 : vector<8x32xf32>
    %474 = tpu.concatenate %458, %473 in 1 : vector<8x32xf32>, vector<8x32xf32> -> vector<8x64xf32>
    %c0_i32_131 = arith.constant 0 : i32
    %475 = arith.cmpi eq, %c0_i32_122, %c0_i32_131 : i32
    %476 = arith.select %475, %473, %430 : vector<8x32xf32>
    %c1_i32_132 = arith.constant 1 : i32
    %c7_i32_133 = arith.constant 7 : i32
    %477 = arith.subi %c7_i32_133, %c1_i32_132 : i32
    %cst_134 = arith.constant dense<0.000000e+00> : vector<8x256xf32>
    %478 = tpu.matmul %474, %429, %cst_134 {dimension_numbers = #tpu.dot_dimension_numbers<[1], [0], [0], [1], [0, 0, 1, 1], [], []>} : vector<8x64xf32>, vector<64x256xf32>, vector<8x256xf32> -> vector<8x256xf32>
    %479 = arith.index_cast %c1_i32_132 : i32 to index
    %c0_135 = arith.constant 0 : index
    %c0_136 = arith.constant 0 : index
    %480 = vector.load %arg11[%479, %c0_135, %c0_136] : memref<8x8x256xf32, #tpu.memory_space<vmem>>, vector<1x8x128xf32>
    %481 = vector.shape_cast %480 : vector<1x8x128xf32> to vector<8x128xf32>
    %482 = vector.extract_strided_slice %478 {offsets = [0, 0], sizes = [8, 128], strides = [1, 1]} : vector<8x256xf32> to vector<8x128xf32>
    %483 = arith.addf %481, %482 : vector<8x128xf32>
    %484 = arith.index_cast %477 : i32 to index
    %c0_137 = arith.constant 0 : index
    %c128_138 = arith.constant 128 : index
    %485 = vector.load %arg11[%484, %c0_137, %c128_138] : memref<8x8x256xf32, #tpu.memory_space<vmem>>, vector<1x8x128xf32>
    %486 = vector.shape_cast %485 : vector<1x8x128xf32> to vector<8x128xf32>
    %487 = vector.extract_strided_slice %478 {offsets = [0, 128], sizes = [8, 128], strides = [1, 1]} : vector<8x256xf32> to vector<8x128xf32>
    %488 = arith.addf %486, %487 : vector<8x128xf32>
    %489 = arith.negf %483 : vector<8x128xf32>
    %490 = math.exp %489 : vector<8x128xf32>
    %cst_139 = arith.constant 1.000000e+00 : f32
    %491 = vector.broadcast %cst_139 : f32 to vector<8x128xf32>
    %492 = arith.addf %491, %490 : vector<8x128xf32>
    %493 = arith.divf %491, %492 : vector<8x128xf32>
    %494 = vector.extract_strided_slice %483 {offsets = [0, 64], sizes = [8, 32], strides = [1, 1]} : vector<8x128xf32> to vector<8x32xf32>
    %495 = math.tanh %494 : vector<8x32xf32>
    %496 = vector.extract_strided_slice %493 {offsets = [0, 32], sizes = [8, 32], strides = [1, 1]} : vector<8x128xf32> to vector<8x32xf32>
    %497 = arith.mulf %496, %455 : vector<8x32xf32>
    %498 = vector.extract_strided_slice %493 {offsets = [0, 0], sizes = [8, 32], strides = [1, 1]} : vector<8x128xf32> to vector<8x32xf32>
    %499 = arith.mulf %498, %495 : vector<8x32xf32>
    %500 = arith.addf %497, %499 : vector<8x32xf32>
    %501 = vector.extract_strided_slice %493 {offsets = [0, 96], sizes = [8, 32], strides = [1, 1]} : vector<8x128xf32> to vector<8x32xf32>
    %502 = math.tanh %500 : vector<8x32xf32>
    %503 = arith.mulf %501, %502 : vector<8x32xf32>
    %504 = arith.negf %488 : vector<8x128xf32>
    %505 = math.exp %504 : vector<8x128xf32>
    %cst_140 = arith.constant 1.000000e+00 : f32
    %506 = vector.broadcast %cst_140 : f32 to vector<8x128xf32>
    %507 = arith.addf %506, %505 : vector<8x128xf32>
    %508 = arith.divf %506, %507 : vector<8x128xf32>
    %509 = vector.extract_strided_slice %488 {offsets = [0, 64], sizes = [8, 32], strides = [1, 1]} : vector<8x128xf32> to vector<8x32xf32>
    %510 = math.tanh %509 : vector<8x32xf32>
    %511 = vector.extract_strided_slice %508 {offsets = [0, 32], sizes = [8, 32], strides = [1, 1]} : vector<8x128xf32> to vector<8x32xf32>
    %512 = arith.mulf %511, %470 : vector<8x32xf32>
    %513 = vector.extract_strided_slice %508 {offsets = [0, 0], sizes = [8, 32], strides = [1, 1]} : vector<8x128xf32> to vector<8x32xf32>
    %514 = arith.mulf %513, %510 : vector<8x32xf32>
    %515 = arith.addf %512, %514 : vector<8x32xf32>
    %516 = vector.extract_strided_slice %508 {offsets = [0, 96], sizes = [8, 32], strides = [1, 1]} : vector<8x128xf32> to vector<8x32xf32>
    %517 = math.tanh %515 : vector<8x32xf32>
    %518 = arith.mulf %516, %517 : vector<8x32xf32>
    %519 = tpu.concatenate %503, %518 in 1 : vector<8x32xf32>, vector<8x32xf32> -> vector<8x64xf32>
    %c0_i32_141 = arith.constant 0 : i32
    %520 = arith.cmpi eq, %c1_i32_132, %c0_i32_141 : i32
    %521 = arith.select %520, %518, %476 : vector<8x32xf32>
    %c2_i32_142 = arith.constant 2 : i32
    %c7_i32_143 = arith.constant 7 : i32
    %522 = arith.subi %c7_i32_143, %c2_i32_142 : i32
    %cst_144 = arith.constant dense<0.000000e+00> : vector<8x256xf32>
    %523 = tpu.matmul %519, %429, %cst_144 {dimension_numbers = #tpu.dot_dimension_numbers<[1], [0], [0], [1], [0, 0, 1, 1], [], []>} : vector<8x64xf32>, vector<64x256xf32>, vector<8x256xf32> -> vector<8x256xf32>
    %524 = arith.index_cast %c2_i32_142 : i32 to index
    %c0_145 = arith.constant 0 : index
    %c0_146 = arith.constant 0 : index
    %525 = vector.load %arg11[%524, %c0_145, %c0_146] : memref<8x8x256xf32, #tpu.memory_space<vmem>>, vector<1x8x128xf32>
    %526 = vector.shape_cast %525 : vector<1x8x128xf32> to vector<8x128xf32>
    %527 = vector.extract_strided_slice %523 {offsets = [0, 0], sizes = [8, 128], strides = [1, 1]} : vector<8x256xf32> to vector<8x128xf32>
    %528 = arith.addf %526, %527 : vector<8x128xf32>
    %529 = arith.index_cast %522 : i32 to index
    %c0_147 = arith.constant 0 : index
    %c128_148 = arith.constant 128 : index
    %530 = vector.load %arg11[%529, %c0_147, %c128_148] : memref<8x8x256xf32, #tpu.memory_space<vmem>>, vector<1x8x128xf32>
    %531 = vector.shape_cast %530 : vector<1x8x128xf32> to vector<8x128xf32>
    %532 = vector.extract_strided_slice %523 {offsets = [0, 128], sizes = [8, 128], strides = [1, 1]} : vector<8x256xf32> to vector<8x128xf32>
    %533 = arith.addf %531, %532 : vector<8x128xf32>
    %534 = arith.negf %528 : vector<8x128xf32>
    %535 = math.exp %534 : vector<8x128xf32>
    %cst_149 = arith.constant 1.000000e+00 : f32
    %536 = vector.broadcast %cst_149 : f32 to vector<8x128xf32>
    %537 = arith.addf %536, %535 : vector<8x128xf32>
    %538 = arith.divf %536, %537 : vector<8x128xf32>
    %539 = vector.extract_strided_slice %528 {offsets = [0, 64], sizes = [8, 32], strides = [1, 1]} : vector<8x128xf32> to vector<8x32xf32>
    %540 = math.tanh %539 : vector<8x32xf32>
    %541 = vector.extract_strided_slice %538 {offsets = [0, 32], sizes = [8, 32], strides = [1, 1]} : vector<8x128xf32> to vector<8x32xf32>
    %542 = arith.mulf %541, %500 : vector<8x32xf32>
    %543 = vector.extract_strided_slice %538 {offsets = [0, 0], sizes = [8, 32], strides = [1, 1]} : vector<8x128xf32> to vector<8x32xf32>
    %544 = arith.mulf %543, %540 : vector<8x32xf32>
    %545 = arith.addf %542, %544 : vector<8x32xf32>
    %546 = vector.extract_strided_slice %538 {offsets = [0, 96], sizes = [8, 32], strides = [1, 1]} : vector<8x128xf32> to vector<8x32xf32>
    %547 = math.tanh %545 : vector<8x32xf32>
    %548 = arith.mulf %546, %547 : vector<8x32xf32>
    %549 = arith.negf %533 : vector<8x128xf32>
    %550 = math.exp %549 : vector<8x128xf32>
    %cst_150 = arith.constant 1.000000e+00 : f32
    %551 = vector.broadcast %cst_150 : f32 to vector<8x128xf32>
    %552 = arith.addf %551, %550 : vector<8x128xf32>
    %553 = arith.divf %551, %552 : vector<8x128xf32>
    %554 = vector.extract_strided_slice %533 {offsets = [0, 64], sizes = [8, 32], strides = [1, 1]} : vector<8x128xf32> to vector<8x32xf32>
    %555 = math.tanh %554 : vector<8x32xf32>
    %556 = vector.extract_strided_slice %553 {offsets = [0, 32], sizes = [8, 32], strides = [1, 1]} : vector<8x128xf32> to vector<8x32xf32>
    %557 = arith.mulf %556, %515 : vector<8x32xf32>
    %558 = vector.extract_strided_slice %553 {offsets = [0, 0], sizes = [8, 32], strides = [1, 1]} : vector<8x128xf32> to vector<8x32xf32>
    %559 = arith.mulf %558, %555 : vector<8x32xf32>
    %560 = arith.addf %557, %559 : vector<8x32xf32>
    %561 = vector.extract_strided_slice %553 {offsets = [0, 96], sizes = [8, 32], strides = [1, 1]} : vector<8x128xf32> to vector<8x32xf32>
    %562 = math.tanh %560 : vector<8x32xf32>
    %563 = arith.mulf %561, %562 : vector<8x32xf32>
    %564 = tpu.concatenate %548, %563 in 1 : vector<8x32xf32>, vector<8x32xf32> -> vector<8x64xf32>
    %c0_i32_151 = arith.constant 0 : i32
    %565 = arith.cmpi eq, %c2_i32_142, %c0_i32_151 : i32
    %566 = arith.select %565, %563, %521 : vector<8x32xf32>
    %c3_i32_152 = arith.constant 3 : i32
    %c7_i32_153 = arith.constant 7 : i32
    %567 = arith.subi %c7_i32_153, %c3_i32_152 : i32
    %cst_154 = arith.constant dense<0.000000e+00> : vector<8x256xf32>
    %568 = tpu.matmul %564, %429, %cst_154 {dimension_numbers = #tpu.dot_dimension_numbers<[1], [0], [0], [1], [0, 0, 1, 1], [], []>} : vector<8x64xf32>, vector<64x256xf32>, vector<8x256xf32> -> vector<8x256xf32>
    %569 = arith.index_cast %c3_i32_152 : i32 to index
    %c0_155 = arith.constant 0 : index
    %c0_156 = arith.constant 0 : index
    %570 = vector.load %arg11[%569, %c0_155, %c0_156] : memref<8x8x256xf32, #tpu.memory_space<vmem>>, vector<1x8x128xf32>
    %571 = vector.shape_cast %570 : vector<1x8x128xf32> to vector<8x128xf32>
    %572 = vector.extract_strided_slice %568 {offsets = [0, 0], sizes = [8, 128], strides = [1, 1]} : vector<8x256xf32> to vector<8x128xf32>
    %573 = arith.addf %571, %572 : vector<8x128xf32>
    %574 = arith.index_cast %567 : i32 to index
    %c0_157 = arith.constant 0 : index
    %c128_158 = arith.constant 128 : index
    %575 = vector.load %arg11[%574, %c0_157, %c128_158] : memref<8x8x256xf32, #tpu.memory_space<vmem>>, vector<1x8x128xf32>
    %576 = vector.shape_cast %575 : vector<1x8x128xf32> to vector<8x128xf32>
    %577 = vector.extract_strided_slice %568 {offsets = [0, 128], sizes = [8, 128], strides = [1, 1]} : vector<8x256xf32> to vector<8x128xf32>
    %578 = arith.addf %576, %577 : vector<8x128xf32>
    %579 = arith.negf %573 : vector<8x128xf32>
    %580 = math.exp %579 : vector<8x128xf32>
    %cst_159 = arith.constant 1.000000e+00 : f32
    %581 = vector.broadcast %cst_159 : f32 to vector<8x128xf32>
    %582 = arith.addf %581, %580 : vector<8x128xf32>
    %583 = arith.divf %581, %582 : vector<8x128xf32>
    %584 = vector.extract_strided_slice %573 {offsets = [0, 64], sizes = [8, 32], strides = [1, 1]} : vector<8x128xf32> to vector<8x32xf32>
    %585 = math.tanh %584 : vector<8x32xf32>
    %586 = vector.extract_strided_slice %583 {offsets = [0, 32], sizes = [8, 32], strides = [1, 1]} : vector<8x128xf32> to vector<8x32xf32>
    %587 = arith.mulf %586, %545 : vector<8x32xf32>
    %588 = vector.extract_strided_slice %583 {offsets = [0, 0], sizes = [8, 32], strides = [1, 1]} : vector<8x128xf32> to vector<8x32xf32>
    %589 = arith.mulf %588, %585 : vector<8x32xf32>
    %590 = arith.addf %587, %589 : vector<8x32xf32>
    %591 = vector.extract_strided_slice %583 {offsets = [0, 96], sizes = [8, 32], strides = [1, 1]} : vector<8x128xf32> to vector<8x32xf32>
    %592 = math.tanh %590 : vector<8x32xf32>
    %593 = arith.mulf %591, %592 : vector<8x32xf32>
    %594 = arith.negf %578 : vector<8x128xf32>
    %595 = math.exp %594 : vector<8x128xf32>
    %cst_160 = arith.constant 1.000000e+00 : f32
    %596 = vector.broadcast %cst_160 : f32 to vector<8x128xf32>
    %597 = arith.addf %596, %595 : vector<8x128xf32>
    %598 = arith.divf %596, %597 : vector<8x128xf32>
    %599 = vector.extract_strided_slice %578 {offsets = [0, 64], sizes = [8, 32], strides = [1, 1]} : vector<8x128xf32> to vector<8x32xf32>
    %600 = math.tanh %599 : vector<8x32xf32>
    %601 = vector.extract_strided_slice %598 {offsets = [0, 32], sizes = [8, 32], strides = [1, 1]} : vector<8x128xf32> to vector<8x32xf32>
    %602 = arith.mulf %601, %560 : vector<8x32xf32>
    %603 = vector.extract_strided_slice %598 {offsets = [0, 0], sizes = [8, 32], strides = [1, 1]} : vector<8x128xf32> to vector<8x32xf32>
    %604 = arith.mulf %603, %600 : vector<8x32xf32>
    %605 = arith.addf %602, %604 : vector<8x32xf32>
    %606 = vector.extract_strided_slice %598 {offsets = [0, 96], sizes = [8, 32], strides = [1, 1]} : vector<8x128xf32> to vector<8x32xf32>
    %607 = math.tanh %605 : vector<8x32xf32>
    %608 = arith.mulf %606, %607 : vector<8x32xf32>
    %609 = tpu.concatenate %593, %608 in 1 : vector<8x32xf32>, vector<8x32xf32> -> vector<8x64xf32>
    %c0_i32_161 = arith.constant 0 : i32
    %610 = arith.cmpi eq, %c3_i32_152, %c0_i32_161 : i32
    %611 = arith.select %610, %608, %566 : vector<8x32xf32>
    %c4_i32_162 = arith.constant 4 : i32
    %c7_i32_163 = arith.constant 7 : i32
    %612 = arith.subi %c7_i32_163, %c4_i32_162 : i32
    %cst_164 = arith.constant dense<0.000000e+00> : vector<8x256xf32>
    %613 = tpu.matmul %609, %429, %cst_164 {dimension_numbers = #tpu.dot_dimension_numbers<[1], [0], [0], [1], [0, 0, 1, 1], [], []>} : vector<8x64xf32>, vector<64x256xf32>, vector<8x256xf32> -> vector<8x256xf32>
    %614 = arith.index_cast %c4_i32_162 : i32 to index
    %c0_165 = arith.constant 0 : index
    %c0_166 = arith.constant 0 : index
    %615 = vector.load %arg11[%614, %c0_165, %c0_166] : memref<8x8x256xf32, #tpu.memory_space<vmem>>, vector<1x8x128xf32>
    %616 = vector.shape_cast %615 : vector<1x8x128xf32> to vector<8x128xf32>
    %617 = vector.extract_strided_slice %613 {offsets = [0, 0], sizes = [8, 128], strides = [1, 1]} : vector<8x256xf32> to vector<8x128xf32>
    %618 = arith.addf %616, %617 : vector<8x128xf32>
    %619 = arith.index_cast %612 : i32 to index
    %c0_167 = arith.constant 0 : index
    %c128_168 = arith.constant 128 : index
    %620 = vector.load %arg11[%619, %c0_167, %c128_168] : memref<8x8x256xf32, #tpu.memory_space<vmem>>, vector<1x8x128xf32>
    %621 = vector.shape_cast %620 : vector<1x8x128xf32> to vector<8x128xf32>
    %622 = vector.extract_strided_slice %613 {offsets = [0, 128], sizes = [8, 128], strides = [1, 1]} : vector<8x256xf32> to vector<8x128xf32>
    %623 = arith.addf %621, %622 : vector<8x128xf32>
    %624 = arith.negf %618 : vector<8x128xf32>
    %625 = math.exp %624 : vector<8x128xf32>
    %cst_169 = arith.constant 1.000000e+00 : f32
    %626 = vector.broadcast %cst_169 : f32 to vector<8x128xf32>
    %627 = arith.addf %626, %625 : vector<8x128xf32>
    %628 = arith.divf %626, %627 : vector<8x128xf32>
    %629 = vector.extract_strided_slice %618 {offsets = [0, 64], sizes = [8, 32], strides = [1, 1]} : vector<8x128xf32> to vector<8x32xf32>
    %630 = math.tanh %629 : vector<8x32xf32>
    %631 = vector.extract_strided_slice %628 {offsets = [0, 32], sizes = [8, 32], strides = [1, 1]} : vector<8x128xf32> to vector<8x32xf32>
    %632 = arith.mulf %631, %590 : vector<8x32xf32>
    %633 = vector.extract_strided_slice %628 {offsets = [0, 0], sizes = [8, 32], strides = [1, 1]} : vector<8x128xf32> to vector<8x32xf32>
    %634 = arith.mulf %633, %630 : vector<8x32xf32>
    %635 = arith.addf %632, %634 : vector<8x32xf32>
    %636 = vector.extract_strided_slice %628 {offsets = [0, 96], sizes = [8, 32], strides = [1, 1]} : vector<8x128xf32> to vector<8x32xf32>
    %637 = math.tanh %635 : vector<8x32xf32>
    %638 = arith.mulf %636, %637 : vector<8x32xf32>
    %639 = arith.negf %623 : vector<8x128xf32>
    %640 = math.exp %639 : vector<8x128xf32>
    %cst_170 = arith.constant 1.000000e+00 : f32
    %641 = vector.broadcast %cst_170 : f32 to vector<8x128xf32>
    %642 = arith.addf %641, %640 : vector<8x128xf32>
    %643 = arith.divf %641, %642 : vector<8x128xf32>
    %644 = vector.extract_strided_slice %623 {offsets = [0, 64], sizes = [8, 32], strides = [1, 1]} : vector<8x128xf32> to vector<8x32xf32>
    %645 = math.tanh %644 : vector<8x32xf32>
    %646 = vector.extract_strided_slice %643 {offsets = [0, 32], sizes = [8, 32], strides = [1, 1]} : vector<8x128xf32> to vector<8x32xf32>
    %647 = arith.mulf %646, %605 : vector<8x32xf32>
    %648 = vector.extract_strided_slice %643 {offsets = [0, 0], sizes = [8, 32], strides = [1, 1]} : vector<8x128xf32> to vector<8x32xf32>
    %649 = arith.mulf %648, %645 : vector<8x32xf32>
    %650 = arith.addf %647, %649 : vector<8x32xf32>
    %651 = vector.extract_strided_slice %643 {offsets = [0, 96], sizes = [8, 32], strides = [1, 1]} : vector<8x128xf32> to vector<8x32xf32>
    %652 = math.tanh %650 : vector<8x32xf32>
    %653 = arith.mulf %651, %652 : vector<8x32xf32>
    %654 = tpu.concatenate %638, %653 in 1 : vector<8x32xf32>, vector<8x32xf32> -> vector<8x64xf32>
    %c0_i32_171 = arith.constant 0 : i32
    %655 = arith.cmpi eq, %c4_i32_162, %c0_i32_171 : i32
    %656 = arith.select %655, %653, %611 : vector<8x32xf32>
    %c5_i32_172 = arith.constant 5 : i32
    %c7_i32_173 = arith.constant 7 : i32
    %657 = arith.subi %c7_i32_173, %c5_i32_172 : i32
    %cst_174 = arith.constant dense<0.000000e+00> : vector<8x256xf32>
    %658 = tpu.matmul %654, %429, %cst_174 {dimension_numbers = #tpu.dot_dimension_numbers<[1], [0], [0], [1], [0, 0, 1, 1], [], []>} : vector<8x64xf32>, vector<64x256xf32>, vector<8x256xf32> -> vector<8x256xf32>
    %659 = arith.index_cast %c5_i32_172 : i32 to index
    %c0_175 = arith.constant 0 : index
    %c0_176 = arith.constant 0 : index
    %660 = vector.load %arg11[%659, %c0_175, %c0_176] : memref<8x8x256xf32, #tpu.memory_space<vmem>>, vector<1x8x128xf32>
    %661 = vector.shape_cast %660 : vector<1x8x128xf32> to vector<8x128xf32>
    %662 = vector.extract_strided_slice %658 {offsets = [0, 0], sizes = [8, 128], strides = [1, 1]} : vector<8x256xf32> to vector<8x128xf32>
    %663 = arith.addf %661, %662 : vector<8x128xf32>
    %664 = arith.index_cast %657 : i32 to index
    %c0_177 = arith.constant 0 : index
    %c128_178 = arith.constant 128 : index
    %665 = vector.load %arg11[%664, %c0_177, %c128_178] : memref<8x8x256xf32, #tpu.memory_space<vmem>>, vector<1x8x128xf32>
    %666 = vector.shape_cast %665 : vector<1x8x128xf32> to vector<8x128xf32>
    %667 = vector.extract_strided_slice %658 {offsets = [0, 128], sizes = [8, 128], strides = [1, 1]} : vector<8x256xf32> to vector<8x128xf32>
    %668 = arith.addf %666, %667 : vector<8x128xf32>
    %669 = arith.negf %663 : vector<8x128xf32>
    %670 = math.exp %669 : vector<8x128xf32>
    %cst_179 = arith.constant 1.000000e+00 : f32
    %671 = vector.broadcast %cst_179 : f32 to vector<8x128xf32>
    %672 = arith.addf %671, %670 : vector<8x128xf32>
    %673 = arith.divf %671, %672 : vector<8x128xf32>
    %674 = vector.extract_strided_slice %663 {offsets = [0, 64], sizes = [8, 32], strides = [1, 1]} : vector<8x128xf32> to vector<8x32xf32>
    %675 = math.tanh %674 : vector<8x32xf32>
    %676 = vector.extract_strided_slice %673 {offsets = [0, 32], sizes = [8, 32], strides = [1, 1]} : vector<8x128xf32> to vector<8x32xf32>
    %677 = arith.mulf %676, %635 : vector<8x32xf32>
    %678 = vector.extract_strided_slice %673 {offsets = [0, 0], sizes = [8, 32], strides = [1, 1]} : vector<8x128xf32> to vector<8x32xf32>
    %679 = arith.mulf %678, %675 : vector<8x32xf32>
    %680 = arith.addf %677, %679 : vector<8x32xf32>
    %681 = vector.extract_strided_slice %673 {offsets = [0, 96], sizes = [8, 32], strides = [1, 1]} : vector<8x128xf32> to vector<8x32xf32>
    %682 = math.tanh %680 : vector<8x32xf32>
    %683 = arith.mulf %681, %682 : vector<8x32xf32>
    %684 = arith.negf %668 : vector<8x128xf32>
    %685 = math.exp %684 : vector<8x128xf32>
    %cst_180 = arith.constant 1.000000e+00 : f32
    %686 = vector.broadcast %cst_180 : f32 to vector<8x128xf32>
    %687 = arith.addf %686, %685 : vector<8x128xf32>
    %688 = arith.divf %686, %687 : vector<8x128xf32>
    %689 = vector.extract_strided_slice %668 {offsets = [0, 64], sizes = [8, 32], strides = [1, 1]} : vector<8x128xf32> to vector<8x32xf32>
    %690 = math.tanh %689 : vector<8x32xf32>
    %691 = vector.extract_strided_slice %688 {offsets = [0, 32], sizes = [8, 32], strides = [1, 1]} : vector<8x128xf32> to vector<8x32xf32>
    %692 = arith.mulf %691, %650 : vector<8x32xf32>
    %693 = vector.extract_strided_slice %688 {offsets = [0, 0], sizes = [8, 32], strides = [1, 1]} : vector<8x128xf32> to vector<8x32xf32>
    %694 = arith.mulf %693, %690 : vector<8x32xf32>
    %695 = arith.addf %692, %694 : vector<8x32xf32>
    %696 = vector.extract_strided_slice %688 {offsets = [0, 96], sizes = [8, 32], strides = [1, 1]} : vector<8x128xf32> to vector<8x32xf32>
    %697 = math.tanh %695 : vector<8x32xf32>
    %698 = arith.mulf %696, %697 : vector<8x32xf32>
    %699 = tpu.concatenate %683, %698 in 1 : vector<8x32xf32>, vector<8x32xf32> -> vector<8x64xf32>
    %c0_i32_181 = arith.constant 0 : i32
    %700 = arith.cmpi eq, %c5_i32_172, %c0_i32_181 : i32
    %701 = arith.select %700, %698, %656 : vector<8x32xf32>
    %c6_i32_182 = arith.constant 6 : i32
    %c7_i32_183 = arith.constant 7 : i32
    %702 = arith.subi %c7_i32_183, %c6_i32_182 : i32
    %cst_184 = arith.constant dense<0.000000e+00> : vector<8x256xf32>
    %703 = tpu.matmul %699, %429, %cst_184 {dimension_numbers = #tpu.dot_dimension_numbers<[1], [0], [0], [1], [0, 0, 1, 1], [], []>} : vector<8x64xf32>, vector<64x256xf32>, vector<8x256xf32> -> vector<8x256xf32>
    %704 = arith.index_cast %c6_i32_182 : i32 to index
    %c0_185 = arith.constant 0 : index
    %c0_186 = arith.constant 0 : index
    %705 = vector.load %arg11[%704, %c0_185, %c0_186] : memref<8x8x256xf32, #tpu.memory_space<vmem>>, vector<1x8x128xf32>
    %706 = vector.shape_cast %705 : vector<1x8x128xf32> to vector<8x128xf32>
    %707 = vector.extract_strided_slice %703 {offsets = [0, 0], sizes = [8, 128], strides = [1, 1]} : vector<8x256xf32> to vector<8x128xf32>
    %708 = arith.addf %706, %707 : vector<8x128xf32>
    %709 = arith.index_cast %702 : i32 to index
    %c0_187 = arith.constant 0 : index
    %c128_188 = arith.constant 128 : index
    %710 = vector.load %arg11[%709, %c0_187, %c128_188] : memref<8x8x256xf32, #tpu.memory_space<vmem>>, vector<1x8x128xf32>
    %711 = vector.shape_cast %710 : vector<1x8x128xf32> to vector<8x128xf32>
    %712 = vector.extract_strided_slice %703 {offsets = [0, 128], sizes = [8, 128], strides = [1, 1]} : vector<8x256xf32> to vector<8x128xf32>
    %713 = arith.addf %711, %712 : vector<8x128xf32>
    %714 = arith.negf %708 : vector<8x128xf32>
    %715 = math.exp %714 : vector<8x128xf32>
    %cst_189 = arith.constant 1.000000e+00 : f32
    %716 = vector.broadcast %cst_189 : f32 to vector<8x128xf32>
    %717 = arith.addf %716, %715 : vector<8x128xf32>
    %718 = arith.divf %716, %717 : vector<8x128xf32>
    %719 = vector.extract_strided_slice %708 {offsets = [0, 64], sizes = [8, 32], strides = [1, 1]} : vector<8x128xf32> to vector<8x32xf32>
    %720 = math.tanh %719 : vector<8x32xf32>
    %721 = vector.extract_strided_slice %718 {offsets = [0, 32], sizes = [8, 32], strides = [1, 1]} : vector<8x128xf32> to vector<8x32xf32>
    %722 = arith.mulf %721, %680 : vector<8x32xf32>
    %723 = vector.extract_strided_slice %718 {offsets = [0, 0], sizes = [8, 32], strides = [1, 1]} : vector<8x128xf32> to vector<8x32xf32>
    %724 = arith.mulf %723, %720 : vector<8x32xf32>
    %725 = arith.addf %722, %724 : vector<8x32xf32>
    %726 = vector.extract_strided_slice %718 {offsets = [0, 96], sizes = [8, 32], strides = [1, 1]} : vector<8x128xf32> to vector<8x32xf32>
    %727 = math.tanh %725 : vector<8x32xf32>
    %728 = arith.mulf %726, %727 : vector<8x32xf32>
    %729 = arith.negf %713 : vector<8x128xf32>
    %730 = math.exp %729 : vector<8x128xf32>
    %cst_190 = arith.constant 1.000000e+00 : f32
    %731 = vector.broadcast %cst_190 : f32 to vector<8x128xf32>
    %732 = arith.addf %731, %730 : vector<8x128xf32>
    %733 = arith.divf %731, %732 : vector<8x128xf32>
    %734 = vector.extract_strided_slice %713 {offsets = [0, 64], sizes = [8, 32], strides = [1, 1]} : vector<8x128xf32> to vector<8x32xf32>
    %735 = math.tanh %734 : vector<8x32xf32>
    %736 = vector.extract_strided_slice %733 {offsets = [0, 32], sizes = [8, 32], strides = [1, 1]} : vector<8x128xf32> to vector<8x32xf32>
    %737 = arith.mulf %736, %695 : vector<8x32xf32>
    %738 = vector.extract_strided_slice %733 {offsets = [0, 0], sizes = [8, 32], strides = [1, 1]} : vector<8x128xf32> to vector<8x32xf32>
    %739 = arith.mulf %738, %735 : vector<8x32xf32>
    %740 = arith.addf %737, %739 : vector<8x32xf32>
    %741 = vector.extract_strided_slice %733 {offsets = [0, 96], sizes = [8, 32], strides = [1, 1]} : vector<8x128xf32> to vector<8x32xf32>
    %742 = math.tanh %740 : vector<8x32xf32>
    %743 = arith.mulf %741, %742 : vector<8x32xf32>
    %744 = tpu.concatenate %728, %743 in 1 : vector<8x32xf32>, vector<8x32xf32> -> vector<8x64xf32>
    %c0_i32_191 = arith.constant 0 : i32
    %745 = arith.cmpi eq, %c6_i32_182, %c0_i32_191 : i32
    %746 = arith.select %745, %743, %701 : vector<8x32xf32>
    %c7_i32_192 = arith.constant 7 : i32
    %c7_i32_193 = arith.constant 7 : i32
    %747 = arith.subi %c7_i32_193, %c7_i32_192 : i32
    %cst_194 = arith.constant dense<0.000000e+00> : vector<8x256xf32>
    %748 = tpu.matmul %744, %429, %cst_194 {dimension_numbers = #tpu.dot_dimension_numbers<[1], [0], [0], [1], [0, 0, 1, 1], [], []>} : vector<8x64xf32>, vector<64x256xf32>, vector<8x256xf32> -> vector<8x256xf32>
    %749 = arith.index_cast %c7_i32_192 : i32 to index
    %c0_195 = arith.constant 0 : index
    %c0_196 = arith.constant 0 : index
    %750 = vector.load %arg11[%749, %c0_195, %c0_196] : memref<8x8x256xf32, #tpu.memory_space<vmem>>, vector<1x8x128xf32>
    %751 = vector.shape_cast %750 : vector<1x8x128xf32> to vector<8x128xf32>
    %752 = vector.extract_strided_slice %748 {offsets = [0, 0], sizes = [8, 128], strides = [1, 1]} : vector<8x256xf32> to vector<8x128xf32>
    %753 = arith.addf %751, %752 : vector<8x128xf32>
    %754 = arith.index_cast %747 : i32 to index
    %c0_197 = arith.constant 0 : index
    %c128_198 = arith.constant 128 : index
    %755 = vector.load %arg11[%754, %c0_197, %c128_198] : memref<8x8x256xf32, #tpu.memory_space<vmem>>, vector<1x8x128xf32>
    %756 = vector.shape_cast %755 : vector<1x8x128xf32> to vector<8x128xf32>
    %757 = vector.extract_strided_slice %748 {offsets = [0, 128], sizes = [8, 128], strides = [1, 1]} : vector<8x256xf32> to vector<8x128xf32>
    %758 = arith.addf %756, %757 : vector<8x128xf32>
    %759 = arith.negf %753 : vector<8x128xf32>
    %760 = math.exp %759 : vector<8x128xf32>
    %cst_199 = arith.constant 1.000000e+00 : f32
    %761 = vector.broadcast %cst_199 : f32 to vector<8x128xf32>
    %762 = arith.addf %761, %760 : vector<8x128xf32>
    %763 = arith.divf %761, %762 : vector<8x128xf32>
    %764 = vector.extract_strided_slice %753 {offsets = [0, 64], sizes = [8, 32], strides = [1, 1]} : vector<8x128xf32> to vector<8x32xf32>
    %765 = math.tanh %764 : vector<8x32xf32>
    %766 = vector.extract_strided_slice %763 {offsets = [0, 32], sizes = [8, 32], strides = [1, 1]} : vector<8x128xf32> to vector<8x32xf32>
    %767 = arith.mulf %766, %725 : vector<8x32xf32>
    %768 = vector.extract_strided_slice %763 {offsets = [0, 0], sizes = [8, 32], strides = [1, 1]} : vector<8x128xf32> to vector<8x32xf32>
    %769 = arith.mulf %768, %765 : vector<8x32xf32>
    %770 = arith.addf %767, %769 : vector<8x32xf32>
    %771 = vector.extract_strided_slice %763 {offsets = [0, 96], sizes = [8, 32], strides = [1, 1]} : vector<8x128xf32> to vector<8x32xf32>
    %772 = math.tanh %770 : vector<8x32xf32>
    %773 = arith.mulf %771, %772 : vector<8x32xf32>
    %774 = arith.negf %758 : vector<8x128xf32>
    %775 = math.exp %774 : vector<8x128xf32>
    %cst_200 = arith.constant 1.000000e+00 : f32
    %776 = vector.broadcast %cst_200 : f32 to vector<8x128xf32>
    %777 = arith.addf %776, %775 : vector<8x128xf32>
    %778 = arith.divf %776, %777 : vector<8x128xf32>
    %779 = vector.extract_strided_slice %758 {offsets = [0, 64], sizes = [8, 32], strides = [1, 1]} : vector<8x128xf32> to vector<8x32xf32>
    %780 = math.tanh %779 : vector<8x32xf32>
    %781 = vector.extract_strided_slice %778 {offsets = [0, 32], sizes = [8, 32], strides = [1, 1]} : vector<8x128xf32> to vector<8x32xf32>
    %782 = arith.mulf %781, %740 : vector<8x32xf32>
    %783 = vector.extract_strided_slice %778 {offsets = [0, 0], sizes = [8, 32], strides = [1, 1]} : vector<8x128xf32> to vector<8x32xf32>
    %784 = arith.mulf %783, %780 : vector<8x32xf32>
    %785 = arith.addf %782, %784 : vector<8x32xf32>
    %786 = vector.extract_strided_slice %778 {offsets = [0, 96], sizes = [8, 32], strides = [1, 1]} : vector<8x128xf32> to vector<8x32xf32>
    %787 = math.tanh %785 : vector<8x32xf32>
    %788 = arith.mulf %786, %787 : vector<8x32xf32>
    %789 = tpu.concatenate %773, %788 in 1 : vector<8x32xf32>, vector<8x32xf32> -> vector<8x64xf32>
    %c0_i32_201 = arith.constant 0 : i32
    %790 = arith.cmpi eq, %c7_i32_192, %c0_i32_201 : i32
    %791 = arith.select %790, %788, %746 : vector<8x32xf32>
    %c8_i32_202 = arith.constant 8 : i32
    %792 = vector.extract_strided_slice %789 {offsets = [0, 0], sizes = [8, 32], strides = [1, 1]} : vector<8x64xf32> to vector<8x32xf32>
    %793 = tpu.concatenate %792, %791 in 1 : vector<8x32xf32>, vector<8x32xf32> -> vector<8x64xf32>
    %cst_203 = arith.constant 0.000000e+00 : f32
    %794 = vector.broadcast %cst_203 : f32 to vector<8x64xf32>
    %795 = arith.maximumf %793, %794 : vector<8x64xf32>
    %c0_204 = arith.constant 0 : index
    %c0_205 = arith.constant 0 : index
    %796 = vector.load %arg8[%c0_204, %c0_205] : memref<64x1xf32, #tpu.memory_space<vmem>>, vector<64x1xf32>
    %cst_206 = arith.constant dense<0.000000e+00> : vector<8x1xf32>
    %797 = tpu.matmul %795, %796, %cst_206 {dimension_numbers = #tpu.dot_dimension_numbers<[1], [0], [0], [1], [0, 0, 1, 1], [], []>} : vector<8x64xf32>, vector<64x1xf32>, vector<8x1xf32> -> vector<8x1xf32>
    %c0_207 = arith.constant 0 : index
    %c0_208 = arith.constant 0 : index
    %798 = vector.load %arg9[%c0_207, %c0_208] : memref<1x1xf32, #tpu.memory_space<vmem>>, vector<1x1xf32>
    %799 = vector.broadcast %798 : vector<1x1xf32> to vector<8x1xf32>
    %800 = arith.addf %797, %799 : vector<8x1xf32>
    %c0_209 = arith.constant 0 : index
    %c0_210 = arith.constant 0 : index
    %801 = vector.load %arg10[%c0_209, %c0_210] : memref<8x1xf32, #tpu.memory_space<vmem>>, vector<8x1xf32>
    tpu.vector_store %arg10[%c0_209, %c0_210], %800 {strides = array<i32>} : memref<8x1xf32, #tpu.memory_space<vmem>>, vector<8x1xf32>,
    return
  }
  func.func @transform_0(%arg0: i32) -> (i32, i32, i32) {
    %c0_i32 = arith.constant 0 : i32
    %c0_i32_0 = arith.constant 0 : i32
    %c0_i32_1 = arith.constant 0 : i32
    return %c0_i32, %arg0, %c0_i32_0 : i32, i32, i32
  }
  func.func @transform_1(%arg0: i32) -> (i32, i32) {
    %c0_i32 = arith.constant 0 : i32
    %c0_i32_0 = arith.constant 0 : i32
    %c0_i32_1 = arith.constant 0 : i32
    return %c0_i32, %c0_i32_0 : i32, i32
  }
  func.func @transform_2(%arg0: i32) -> (i32, i32) {
    %c0_i32 = arith.constant 0 : i32
    %c0_i32_0 = arith.constant 0 : i32
    %c0_i32_1 = arith.constant 0 : i32
    return %c0_i32, %c0_i32_0 : i32, i32
  }
  func.func @transform_3(%arg0: i32) -> (i32, i32) {
    %c0_i32 = arith.constant 0 : i32
    %c0_i32_0 = arith.constant 0 : i32
    %c0_i32_1 = arith.constant 0 : i32
    return %c0_i32, %c0_i32_0 : i32, i32
  }
  func.func @transform_4(%arg0: i32) -> (i32, i32) {
    %c0_i32 = arith.constant 0 : i32
    %c0_i32_0 = arith.constant 0 : i32
    %c0_i32_1 = arith.constant 0 : i32
    return %c0_i32, %c0_i32_0 : i32, i32
  }
  func.func @transform_5(%arg0: i32) -> (i32, i32) {
    %c0_i32 = arith.constant 0 : i32
    %c0_i32_0 = arith.constant 0 : i32
    %c0_i32_1 = arith.constant 0 : i32
    return %c0_i32, %c0_i32_0 : i32, i32
  }
  func.func @transform_6(%arg0: i32) -> (i32, i32) {
    %c0_i32 = arith.constant 0 : i32
    %c0_i32_0 = arith.constant 0 : i32
    %c0_i32_1 = arith.constant 0 : i32
    return %c0_i32, %c0_i32_0 : i32, i32
  }
  func.func @transform_7(%arg0: i32) -> (i32, i32) {
    %c0_i32 = arith.constant 0 : i32
    %c0_i32_0 = arith.constant 0 : i32
    %c0_i32_1 = arith.constant 0 : i32
    return %c0_i32, %c0_i32_0 : i32, i32
  }
  func.func @transform_8(%arg0: i32) -> (i32, i32) {
    %c0_i32 = arith.constant 0 : i32
    %c0_i32_0 = arith.constant 0 : i32
    %c0_i32_1 = arith.constant 0 : i32
    return %c0_i32, %c0_i32_0 : i32, i32
  }
  func.func @transform_9(%arg0: i32) -> (i32, i32) {
    %c0_i32 = arith.constant 0 : i32
    %c0_i32_0 = arith.constant 0 : i32
    return %arg0, %c0_i32 : i32, i32
  }
}

</mosaic_0001>

<llo_original>
// kernel: discriminator_forward.1
$region0: #{discriminator_forward.1}
  #allocation0 [shape = 'u32[]', space=smem, size = 0x4, offset = 0x4, fixed_abs, tag = 'smem constant byte address 0x4 - core index']
  #allocation1 [shape = 'u32[144,128]{1,0:T(1,128)}', space=vmem, size = 0x12000, scoped, tag = 'internal scratch']
  #allocation2 [shape = 'f32[8,8,256]{2,1,0:T(8,128)}', space=vmem, size = 0x10000, scoped, tag = 'scratch operand']
  #allocation3 [shape = 'f32[8,8,64]{2,1,0:T(8,128)}', space=vmem, size = 0x8000, scoped, tag = 'scratch operand']
  #allocation4 [shape = 'f32[1,1]{1,0:T(1,128)S(1)}', space=vmem, size = 0x200, scoped, tag = 'scoped memory for discriminator_forward.1']
  %s0 = inlined_call_operand.vmem [shape: f32[8,8,16], index: 0, kind: input, shape index: {}]
  %s1 = inlined_call_operand.vmem [shape: f32[16,256], index: 1, kind: input, shape index: {}]
  %s2 = inlined_call_operand.vmem [shape: f32[1,256], index: 2, kind: input, shape index: {}]
  %s3 = inlined_call_operand.vmem [shape: f32[64,256], index: 3, kind: input, shape index: {}]
  %s4 = inlined_call_operand.hbm [shape: f32[64,256], index: 4, kind: input, shape index: {}]
  %s5 = inlined_call_operand.vmem [shape: f32[1,256], index: 5, kind: input, shape index: {}]
  %s6 = inlined_call_operand.hbm [shape: f32[64,256], index: 6, kind: input, shape index: {}]
  %s7 = inlined_call_operand.vmem [shape: f32[64,1], index: 7, kind: input, shape index: {}]
  %s8 = inlined_call_operand.<no memory space> [shape: f32[1,1], index: 8, kind: input, shape index: {}]
  %s9 = inlined_call_operand.vmem [shape: f32[8,1], index: 9, kind: output, shape index: {}]
  %s10 = sld [smem:[#allocation0]]
  $region54: #{discriminator_forward.1} parent=0
    _
  %s12 = ssub.s32 1, %s10
  %s13 = scalar_select 0, %s12, %s10
  %v14 = vstv %s8
  %15 = vst [vmem:[#allocation4] sm:$0x1] %v14
  $region1: #{discriminator_forward.1} parent=0
    #allocation5 [shape = 'u8[65536]{0}', space=vmem, size = 0x10000, scoped, tag = 'input window, operand 4, single buffered']
    #allocation6 [shape = 's32[1]{0}', space=sflag, size = 0x4, scoped, tag = 'scoped memory for discriminator_forward.1']
    #allocation7 [shape = 'u8[65536]{0}', space=vmem, size = 0x10000, scoped, tag = 'input window, operand 6, single buffered']
    #allocation8 [shape = 's32[1]{0}', space=sflag, size = 0x4, scoped, tag = 'scoped memory for discriminator_forward.1']
    %16 = vsyncpa [#allocation6], 0
    %17 = vsyncpa [#allocation8], 0
    // Predicated region
    $region2: #{discriminator_forward.1} parent=1 // pred_check
      _
    $region3: #{discriminator_forward.1} parent=1 // pred_check_branch
      %19 = sbr.rel (0) target = $region5
    $region4: #{discriminator_forward.1} parent=1 // pred_region
      _
    $region5: #{discriminator_forward.1} parent=1 // pred_fallthru
      _
    // Predicated region
    $region6: #{discriminator_forward.1} parent=1 // pred_check
      _
    $region7: #{discriminator_forward.1} parent=1 // pred_check_branch
      %21 = sbr.rel (0) target = $region9
    $region8: #{discriminator_forward.1} parent=1 // pred_region
      _
    $region9: #{discriminator_forward.1} parent=1 // pred_fallthru
      _
    // Predicated region
    $region10: #{discriminator_forward.1} parent=1 // pred_check
      _
    $region11: #{discriminator_forward.1} parent=1 // pred_check_branch
      %23 = sbr.rel (0) target = $region13
    $region12: #{discriminator_forward.1} parent=1 // pred_region
      _
    $region13: #{discriminator_forward.1} parent=1 // pred_fallthru
      _
    // Predicated region
    $region14: #{discriminator_forward.1} parent=1 // pred_check
      _
    $region15: #{discriminator_forward.1} parent=1 // pred_check_branch
      %25 = sbr.rel (0) target = $region17
    $region16: #{discriminator_forward.1} parent=1 // pred_region
      _
    $region17: #{discriminator_forward.1} parent=1 // pred_fallthru
      _
    // Predicated region
    $region18: #{discriminator_forward.1} parent=1 // pred_check
      _
    $region19: #{discriminator_forward.1} parent=1 // pred_check_branch
      %27 = sbr.rel (0) target = $region21
    $region20: #{discriminator_forward.1} parent=1 // pred_region
      %s29 = ssub.s32 2048, 2048
      %30 = vsyncadd [#allocation6], %s29
      %s31 = sshll.u32 [#allocation5], 4
      %s32 = int_to_ptr.vmem [resolvable:$true] %s31
      %37 = dma.hbm_to_vmem [thread:$0]  %s4, 2048, %s32, [#allocation6], 256, 256, 16
    $region21: #{discriminator_forward.1} parent=1 // pred_fallthru
      _
    // Predicated region
    $region22: #{discriminator_forward.1} parent=1 // pred_check
      _
    $region23: #{discriminator_forward.1} parent=1 // pred_check_branch
      %39 = sbr.rel (0) target = $region25
    $region24: #{discriminator_forward.1} parent=1 // pred_region
      _
    $region25: #{discriminator_forward.1} parent=1 // pred_fallthru
      _
    // Predicated region
    $region26: #{discriminator_forward.1} parent=1 // pred_check
      _
    $region27: #{discriminator_forward.1} parent=1 // pred_check_branch
      %41 = sbr.rel (0) target = $region29
    $region28: #{discriminator_forward.1} parent=1 // pred_region
      %s43 = ssub.s32 2048, 2048
      %44 = vsyncadd [#allocation8], %s43
      %s45 = sshll.u32 [#allocation7], 4
      %s46 = int_to_ptr.vmem [resolvable:$true] %s45
      %51 = dma.hbm_to_vmem [thread:$0]  %s6, 2048, %s46, [#allocation8], 256, 256, 16
    $region29: #{discriminator_forward.1} parent=1 // pred_fallthru
      _
    // Predicated region
    $region30: #{discriminator_forward.1} parent=1 // pred_check
      _
    $region31: #{discriminator_forward.1} parent=1 // pred_check_branch
      %53 = sbr.rel (0) target = $region33
    $region32: #{discriminator_forward.1} parent=1 // pred_region
      _
    $region33: #{discriminator_forward.1} parent=1 // pred_fallthru
      _
    // Predicated region
    $region34: #{discriminator_forward.1} parent=1 // pred_check
      _
    $region35: #{discriminator_forward.1} parent=1 // pred_check_branch
      %55 = sbr.rel (0) target = $region37
    $region36: #{discriminator_forward.1} parent=1 // pred_region
      _
    $region37: #{discriminator_forward.1} parent=1 // pred_fallthru
      _
    // Predicated region
    $region38: #{discriminator_forward.1} parent=1 // pred_check
      _
    $region39: #{discriminator_forward.1} parent=1 // pred_check_branch
      %57 = sbr.rel (0) target = $region41
    $region40: #{discriminator_forward.1} parent=1 // pred_region
      %58 = dma.done [#allocation6], 2048
    $region41: #{discriminator_forward.1} parent=1 // pred_fallthru
      _
    // Predicated region
    $region42: #{discriminator_forward.1} parent=1 // pred_check
      _
    $region43: #{discriminator_forward.1} parent=1 // pred_check_branch
      %60 = sbr.rel (0) target = $region45
    $region44: #{discriminator_forward.1} parent=1 // pred_region
      %61 = dma.done [#allocation8], 2048
    $region45: #{discriminator_forward.1} parent=1 // pred_fallthru
      _
    %v62 = vld [vmem:[%s0] sm:$0xff]
    %v63 = vld [vmem:[%s0 + $0x8] sm:$0xff]
    %v64 = vld [vmem:[%s0 + $0x10] sm:$0xff]
    %v65 = vld [vmem:[%s0 + $0x18] sm:$0xff]
    %v66 = vld [vmem:[%s0 + $0x20] sm:$0xff]
    %v67 = vld [vmem:[%s0 + $0x28] sm:$0xff]
    %v68 = vld [vmem:[%s0 + $0x30] sm:$0xff]
    %v69 = vld [vmem:[%s0 + $0x38] sm:$0xff]
    %v70 = vld [vmem:[%s1] sm:$0xff]
    %v71 = vld [vmem:[%s1 + $0x8] sm:$0xff]
    %v72 = vld [vmem:[%s1 + $0x10] sm:$0xff]
    %v73 = vld [vmem:[%s1 + $0x18] sm:$0xff]
    %v74 = vld [vmem:[%s2] sm:$0x3]
    %v76 = vlaneseq
    %v77 = vshrl.u32 %v76, 7
    %v78 = vsub.s32 0, %v77
    %v79 = vrot.slane %v74, %v78
    %v80 = vlaneseq
    %v81 = vshrl.u32 %v80, 7
    %v82 = vsub.s32 1, %v81
    %v83 = vrot.slane %v74, %v82
    %vm86 = vcmask 130048
    %v88 = vsel %vm86, %v62, 0
    %v91 = vsel %vm86, %v63, 0
    %v94 = vsel %vm86, %v64, 0
    %v97 = vsel %vm86, %v65, 0
    %v100 = vsel %vm86, %v66, 0
    %v103 = vsel %vm86, %v67, 0
    %v106 = vsel %vm86, %v68, 0
    %v109 = vsel %vm86, %v69, 0
    %111 = vmatprep.subr.mxu0 %v71
    %112 = vmatpush1.msra.mxu0 %v70
    %113 = vmatprep.subr.mxu0 %v73
    %114 = vmatpush1.msra.mxu0 %v72
    %115 = vmatprep.subr.mxu0 0.0
    %116 = vmatpush1.msra.mxu0 0.0
    %117 = vmatprep.subr.mxu0 0.0
    %118 = vmatpush1.msra.mxu0 0.0
    %119 = vmatprep.subr.mxu0 0.0
    %120 = vmatpush1.msra.mxu0 0.0
    %121 = vmatprep.subr.mxu0 0.0
    %122 = vmatpush1.msra.mxu0 0.0
    %123 = vmatprep.subr.mxu0 0.0
    %124 = vmatpush1.msra.mxu0 0.0
    %125 = vmatprep.subr.mxu0 0.0
    %126 = vmatpush1.msra.mxu0 0.0
    %127 = vmatprep.subr.mxu0 0.0
    %128 = vmatpush1.msra.mxu0 0.0
    %129 = vmatprep.subr.mxu0 0.0
    %130 = vmatpush1.msra.mxu0 0.0
    %131 = vmatprep.subr.mxu0 0.0
    %132 = vmatpush1.msra.mxu0 0.0
    %133 = vmatprep.subr.mxu0 0.0
    %134 = vmatpush1.msra.mxu0 0.0
    %135 = vmatprep.subr.mxu0 0.0
    %136 = vmatpush1.msra.mxu0 0.0
    %137 = vmatprep.subr.mxu0 0.0
    %138 = vmatpush1.msra.mxu0 0.0
    %139 = vmatprep.subr.mxu0 0.0
    %140 = vmatpush1.msra.mxu0 0.0
    %141 = vmatprep.subr.mxu0 0.0
    %142 = vmatpush1.msra.mxu0 0.0
    %143 = vmatprep.subr.mxu0 0.0
    %144 = vmatpush1.msra.mxu0 0.0
    %145 = vmatprep.subr.mxu0 0.0
    %146 = vmatpush1.msra.mxu0 0.0
    %147 = vmatprep.subr.mxu0 0.0
    %148 = vmatpush1.msra.mxu0 0.0
    %149 = vmatprep.subr.mxu0 0.0
    %150 = vmatpush1.msra.mxu0 0.0
    %151 = vmatprep.subr.mxu0 0.0
    %152 = vmatpush1.msra.mxu0 0.0
    %153 = vmatprep.subr.mxu0 0.0
    %154 = vmatpush1.msra.mxu0 0.0
    %155 = vmatprep.subr.mxu0 0.0
    %156 = vmatpush1.msra.mxu0 0.0
    %157 = vmatprep.subr.mxu0 0.0
    %158 = vmatpush1.msra.mxu0 0.0
    %159 = vmatprep.subr.mxu0 0.0
    %160 = vmatpush1.msra.mxu0 0.0
    %161 = vmatprep.subr.mxu0 0.0
    %162 = vmatpush1.msra.mxu0 0.0
    %163 = vmatprep.subr.mxu0 0.0
    %164 = vmatpush1.msra.mxu0 0.0
    %165 = vmatprep.subr.mxu0 0.0
    %166 = vmatpush1.msra.mxu0 0.0
    %167 = vmatprep.subr.mxu0 0.0
    %168 = vmatpush1.msra.mxu0 0.0
    %169 = vmatprep.subr.mxu0 0.0
    %170 = vmatpush1.msra.mxu0 0.0
    %171 = vmatprep.subr.mxu0 0.0
    %172 = vmatpush1.msra.mxu0 0.0
    %173 = vmatprep.subr.mxu0 0.0
    %174 = vmatpush1.msra.mxu0 0.0
    %175 = vmatprep.mubr.f32.mxu0 0.0
    %176 = vmatmul.mubr.f32.gmra.mrb[0].mxu0 %v88
    %v177 = vpop.f32.mrb[0].mxu0
    %v178 = vadd.f32 %v79, %v177
    %v179 = vpop.f32.mrb[0].mxu0
    %v180 = vadd.f32 %v83, %v179
    %181 = vmatprep.mubr.f32.mxu0 0.0
    %182 = vmatmul.mubr.f32.gmra.mrb[0].mxu0 %v91
    %v183 = vpop.f32.mrb[0].mxu0
    %v184 = vadd.f32 %v79, %v183
    %v185 = vpop.f32.mrb[0].mxu0
    %v186 = vadd.f32 %v83, %v185
    %187 = vmatprep.mubr.f32.mxu0 0.0
    %188 = vmatmul.mubr.f32.gmra.mrb[0].mxu0 %v94
    %v189 = vpop.f32.mrb[0].mxu0
    %v190 = vadd.f32 %v79, %v189
    %v191 = vpop.f32.mrb[0].mxu0
    %v192 = vadd.f32 %v83, %v191
    %193 = vmatprep.mubr.f32.mxu0 0.0
    %194 = vmatmul.mubr.f32.gmra.mrb[0].mxu0 %v97
    %v195 = vpop.f32.mrb[0].mxu0
    %v196 = vadd.f32 %v79, %v195
    %v197 = vpop.f32.mrb[0].mxu0
    %v198 = vadd.f32 %v83, %v197
    %199 = vmatprep.mubr.f32.mxu0 0.0
    %200 = vmatmul.mubr.f32.gmra.mrb[0].mxu0 %v100
    %v201 = vpop.f32.mrb[0].mxu0
    %v202 = vadd.f32 %v79, %v201
    %v203 = vpop.f32.mrb[0].mxu0
    %v204 = vadd.f32 %v83, %v203
    %205 = vmatprep.mubr.f32.mxu0 0.0
    %206 = vmatmul.mubr.f32.gmra.mrb[0].mxu0 %v103
    %v207 = vpop.f32.mrb[0].mxu0
    %v208 = vadd.f32 %v79, %v207
    %v209 = vpop.f32.mrb[0].mxu0
    %v210 = vadd.f32 %v83, %v209
    %211 = vmatprep.mubr.f32.mxu0 0.0
    %212 = vmatmul.mubr.f32.gmra.mrb[0].mxu0 %v106
    %v213 = vpop.f32.mrb[0].mxu0
    %v214 = vadd.f32 %v79, %v213
    %v215 = vpop.f32.mrb[0].mxu0
    %v216 = vadd.f32 %v83, %v215
    %217 = vmatprep.mubr.f32.mxu0 0.0
    %218 = vmatmul.mubr.f32.gmra.mrb[0].mxu0 %v109
    %v219 = vpop.f32.mrb[0].mxu0
    %v220 = vadd.f32 %v79, %v219
    %v221 = vpop.f32.mrb[0].mxu0
    %v222 = vadd.f32 %v83, %v221
    %223 = vdwg.mxu0
    %224 = vst [vmem:[#allocation2] sm:$0xff] %v178
    %225 = vst [vmem:[#allocation2 + $0x8] sm:$0xff] %v180
    %226 = vst [vmem:[#allocation2 + $0x10] sm:$0xff] %v184
    %227 = vst [vmem:[#allocation2 + $0x18] sm:$0xff] %v186
    %228 = vst [vmem:[#allocation2 + $0x20] sm:$0xff] %v190
    %229 = vst [vmem:[#allocation2 + $0x28] sm:$0xff] %v192
    %230 = vst [vmem:[#allocation2 + $0x30] sm:$0xff] %v196
    %231 = vst [vmem:[#allocation2 + $0x38] sm:$0xff] %v198
    %232 = vst [vmem:[#allocation2 + $0x40] sm:$0xff] %v202
    %233 = vst [vmem:[#allocation2 + $0x48] sm:$0xff] %v204
    %234 = vst [vmem:[#allocation2 + $0x50] sm:$0xff] %v208
    %235 = vst [vmem:[#allocation2 + $0x58] sm:$0xff] %v210
    %236 = vst [vmem:[#allocation2 + $0x60] sm:$0xff] %v214
    %237 = vst [vmem:[#allocation2 + $0x68] sm:$0xff] %v216
    %238 = vst [vmem:[#allocation2 + $0x70] sm:$0xff] %v220
    %239 = vst [vmem:[#allocation2 + $0x78] sm:$0xff] %v222
    %v240 = vld [vmem:[%s3] sm:$0xff]
    %v241 = vld [vmem:[%s3 + $0x8] sm:$0xff]
    %v242 = vld [vmem:[%s3 + $0x10] sm:$0xff]
    %v243 = vld [vmem:[%s3 + $0x18] sm:$0xff]
    %v244 = vld [vmem:[%s3 + $0x20] sm:$0xff]
    %v245 = vld [vmem:[%s3 + $0x28] sm:$0xff]
    %v246 = vld [vmem:[%s3 + $0x30] sm:$0xff]
    %v247 = vld [vmem:[%s3 + $0x38] sm:$0xff]
    %v248 = vld [vmem:[%s3 + $0x40] sm:$0xff]
    %v249 = vld [vmem:[%s3 + $0x48] sm:$0xff]
    %v250 = vld [vmem:[%s3 + $0x50] sm:$0xff]
    %v251 = vld [vmem:[%s3 + $0x58] sm:$0xff]
    %v252 = vld [vmem:[%s3 + $0x60] sm:$0xff]
    %v253 = vld [vmem:[%s3 + $0x68] sm:$0xff]
    %v254 = vld [vmem:[%s3 + $0x70] sm:$0xff]
    %v255 = vld [vmem:[%s3 + $0x78] sm:$0xff]
    %vm256 = vcmask 523264
    %v258 = vsel %vm256, 0.0, 0
    %260 = vmatprep.subr.mxu0 %v241
    %261 = vmatpush1.msra.mxu0 %v240
    %262 = vmatprep.subr.mxu0 %v243
    %263 = vmatpush1.msra.mxu0 %v242
    %264 = vmatprep.subr.mxu0 %v245
    %265 = vmatpush1.msra.mxu0 %v244
    %266 = vmatprep.subr.mxu0 %v247
    %267 = vmatpush1.msra.mxu0 %v246
    %268 = vmatprep.subr.mxu0 %v249
    %269 = vmatpush1.msra.mxu0 %v248
    %270 = vmatprep.subr.mxu0 %v251
    %271 = vmatpush1.msra.mxu0 %v250
    %272 = vmatprep.subr.mxu0 %v253
    %273 = vmatpush1.msra.mxu0 %v252
    %274 = vmatprep.subr.mxu0 %v255
    %275 = vmatpush1.msra.mxu0 %v254
    %276 = vmatprep.subr.mxu0 0.0
    %277 = vmatpush1.msra.mxu0 0.0
    %278 = vmatprep.subr.mxu0 0.0
    %279 = vmatpush1.msra.mxu0 0.0
    %280 = vmatprep.subr.mxu0 0.0
    %281 = vmatpush1.msra.mxu0 0.0
    %282 = vmatprep.subr.mxu0 0.0
    %283 = vmatpush1.msra.mxu0 0.0
    %284 = vmatprep.subr.mxu0 0.0
    %285 = vmatpush1.msra.mxu0 0.0
    %286 = vmatprep.subr.mxu0 0.0
    %287 = vmatpush1.msra.mxu0 0.0
    %288 = vmatprep.subr.mxu0 0.0
    %289 = vmatpush1.msra.mxu0 0.0
    %290 = vmatprep.subr.mxu0 0.0
    %291 = vmatpush1.msra.mxu0 0.0
    %292 = vmatprep.subr.mxu0 0.0
    %293 = vmatpush1.msra.mxu0 0.0
    %294 = vmatprep.subr.mxu0 0.0
    %295 = vmatpush1.msra.mxu0 0.0
    %296 = vmatprep.subr.mxu0 0.0
    %297 = vmatpush1.msra.mxu0 0.0
    %298 = vmatprep.subr.mxu0 0.0
    %299 = vmatpush1.msra.mxu0 0.0
    %300 = vmatprep.subr.mxu0 0.0
    %301 = vmatpush1.msra.mxu0 0.0
    %302 = vmatprep.subr.mxu0 0.0
    %303 = vmatpush1.msra.mxu0 0.0
    %304 = vmatprep.subr.mxu0 0.0
    %305 = vmatpush1.msra.mxu0 0.0
    %306 = vmatprep.subr.mxu0 0.0
    %307 = vmatpush1.msra.mxu0 0.0
    %308 = vmatprep.subr.mxu0 0.0
    %309 = vmatpush1.msra.mxu0 0.0
    %310 = vmatprep.subr.mxu0 0.0
    %311 = vmatpush1.msra.mxu0 0.0
    %312 = vmatprep.subr.mxu0 0.0
    %313 = vmatpush1.msra.mxu0 0.0
    %314 = vmatprep.subr.mxu0 0.0
    %315 = vmatpush1.msra.mxu0 0.0
    %316 = vmatprep.subr.mxu0 0.0
    %317 = vmatpush1.msra.mxu0 0.0
    %318 = vmatprep.subr.mxu0 0.0
    %319 = vmatpush1.msra.mxu0 0.0
    %320 = vmatprep.subr.mxu0 0.0
    %321 = vmatpush1.msra.mxu0 0.0
    %322 = vmatprep.subr.mxu0 0.0
    %323 = vmatpush1.msra.mxu0 0.0
    %324 = vmatprep.mubr.f32.mxu0 0.0
    %325 = vmatmul.mubr.f32.gmra.mrb[0].mxu0 %v258
    %v326 = vpop.f32.mrb[0].mxu0
    %v327 = vadd.f32 0.0, %v326
    %v328 = vpop.f32.mrb[0].mxu0
    %v329 = vadd.f32 0.0, %v328
    %330 = vdwg.mxu0
    %v331 = vld [vmem:[#allocation2] sm:$0xff]
    %v332 = vadd.f32 %v331, %v327
    %s333 = scalar_lea.vmem [#allocation2], 112
    %v334 = vld [vmem:[%s333 + $0x8] sm:$0xff]
    %v335 = vadd.f32 %v334, %v329
    %v336 = vxor.u32 %v332, 2147483648
    %v337 = vmul.f32 %v336, 1.442695
    %v338 = vpow.pop %v337
    %v339 = vadd.f32 %v338, 1.0
    %v340 = vrcp.pop %v339
    %v341 = vmul.f32 1.0, %v340
    %v342 = vtanh.pop %v332
    %v343 = vmul.f32 %v341, 0.0
    %345 = vrot.lane.b32.xlu0 %v342, 64
    %v346 = vpop.permute.xlu0 %345
    %v348 = vmul.f32 %v341, %v346
    %350 = vrot.lane.b32.xlu0 %v348, 32
    %v351 = vpop.permute.xlu0 %350
    %v353 = vadd.f32 %v343, %v351
    %v354 = vtanh.pop %v353
    %356 = vrot.lane.b32.xlu0 %v354, 64
    %v357 = vpop.permute.xlu0 %356
    %v359 = vmul.f32 %v341, %v357
    %v360 = vxor.u32 %v335, 2147483648
    %v361 = vmul.f32 %v360, 1.442695
    %v362 = vpow.pop %v361
    %v363 = vadd.f32 %v362, 1.0
    %v364 = vrcp.pop %v363
    %v365 = vmul.f32 1.0, %v364
    %v366 = vtanh.pop %v335
    %v367 = vmul.f32 %v365, 0.0
    %369 = vrot.lane.b32.xlu0 %v366, 64
    %v370 = vpop.permute.xlu0 %369
    %v372 = vmul.f32 %v365, %v370
    %374 = vrot.lane.b32.xlu0 %v372, 32
    %v375 = vpop.permute.xlu0 %374
    %v377 = vadd.f32 %v367, %v375
    %v378 = vtanh.pop %v377
    %380 = vrot.lane.b32.xlu0 %v378, 64
    %v381 = vpop.permute.xlu0 %380
    %v383 = vmul.f32 %v365, %v381
    %385 = vrot.lane.b32.xlu0 %v359, 32
    %v386 = vpop.permute.xlu0 %385
    %389 = vrot.lane.b32.xlu0 %v383, 64
    %v390 = vpop.permute.xlu0 %389
    %vm392 = vcmask 261120
    %v393 = vsel %vm392, %v386, %v390
    %394 = vst.msk [vmem:[#allocation3] sm:$0xff] %vm392, %v386
    %s395 = scalar_lea.vmem [#allocation3], 56
    %vm396 = vcmask 523520
    %397 = vst.msk [vmem:[%s395] sm:$0xff] %vm396, %v390
    %v399 = vsel %vm256, %v393, 0
    %401 = vmatprep.subr.mxu0 %v241
    %402 = vmatpush1.msra.mxu0 %v240
    %403 = vmatprep.subr.mxu0 %v243
    %404 = vmatpush1.msra.mxu0 %v242
    %405 = vmatprep.subr.mxu0 %v245
    %406 = vmatpush1.msra.mxu0 %v244
    %407 = vmatprep.subr.mxu0 %v247
    %408 = vmatpush1.msra.mxu0 %v246
    %409 = vmatprep.subr.mxu0 %v249
    %410 = vmatpush1.msra.mxu0 %v248
    %411 = vmatprep.subr.mxu0 %v251
    %412 = vmatpush1.msra.mxu0 %v250
    %413 = vmatprep.subr.mxu0 %v253
    %414 = vmatpush1.msra.mxu0 %v252
    %415 = vmatprep.subr.mxu0 %v255
    %416 = vmatpush1.msra.mxu0 %v254
    %417 = vmatprep.subr.mxu0 0.0
    %418 = vmatpush1.msra.mxu0 0.0
    %419 = vmatprep.subr.mxu0 0.0
    %420 = vmatpush1.msra.mxu0 0.0
    %421 = vmatprep.subr.mxu0 0.0
    %422 = vmatpush1.msra.mxu0 0.0
    %423 = vmatprep.subr.mxu0 0.0
    %424 = vmatpush1.msra.mxu0 0.0
    %425 = vmatprep.subr.mxu0 0.0
    %426 = vmatpush1.msra.mxu0 0.0
    %427 = vmatprep.subr.mxu0 0.0
    %428 = vmatpush1.msra.mxu0 0.0
    %429 = vmatprep.subr.mxu0 0.0
    %430 = vmatpush1.msra.mxu0 0.0
    %431 = vmatprep.subr.mxu0 0.0
    %432 = vmatpush1.msra.mxu0 0.0
    %433 = vmatprep.subr.mxu0 0.0
    %434 = vmatpush1.msra.mxu0 0.0
    %435 = vmatprep.subr.mxu0 0.0
    %436 = vmatpush1.msra.mxu0 0.0
    %437 = vmatprep.subr.mxu0 0.0
    %438 = vmatpush1.msra.mxu0 0.0
    %439 = vmatprep.subr.mxu0 0.0
    %440 = vmatpush1.msra.mxu0 0.0
    %441 = vmatprep.subr.mxu0 0.0
    %442 = vmatpush1.msra.mxu0 0.0
    %443 = vmatprep.subr.mxu0 0.0
    %444 = vmatpush1.msra.mxu0 0.0
    %445 = vmatprep.subr.mxu0 0.0
    %446 = vmatpush1.msra.mxu0 0.0
    %447 = vmatprep.subr.mxu0 0.0
    %448 = vmatpush1.msra.mxu0 0.0
    %449 = vmatprep.subr.mxu0 0.0
    %450 = vmatpush1.msra.mxu0 0.0
    %451 = vmatprep.subr.mxu0 0.0
    %452 = vmatpush1.msra.mxu0 0.0
    %453 = vmatprep.subr.mxu0 0.0
    %454 = vmatpush1.msra.mxu0 0.0
    %455 = vmatprep.subr.mxu0 0.0
    %456 = vmatpush1.msra.mxu0 0.0
    %457 = vmatprep.subr.mxu0 0.0
    %458 = vmatpush1.msra.mxu0 0.0
    %459 = vmatprep.subr.mxu0 0.0
    %460 = vmatpush1.msra.mxu0 0.0
    %461 = vmatprep.subr.mxu0 0.0
    %462 = vmatpush1.msra.mxu0 0.0
    %463 = vmatprep.subr.mxu0 0.0
    %464 = vmatpush1.msra.mxu0 0.0
    %465 = vmatprep.mubr.f32.mxu0 0.0
    %466 = vmatmul.mubr.f32.gmra.mrb[0].mxu0 %v399
    %v467 = vpop.f32.mrb[0].mxu0
    %v468 = vadd.f32 0.0, %v467
    %v469 = vpop.f32.mrb[0].mxu0
    %v470 = vadd.f32 0.0, %v469
    %471 = vdwg.mxu0
    %s472 = scalar_lea.vmem [#allocation2], 16
    %v473 = vld [vmem:[%s472] sm:$0xff]
    %v474 = vadd.f32 %v473, %v468
    %s475 = scalar_lea.vmem [#allocation2], 96
    %v476 = vld [vmem:[%s475 + $0x8] sm:$0xff]
    %v477 = vadd.f32 %v476, %v470
    %v478 = vxor.u32 %v474, 2147483648
    %v479 = vmul.f32 %v478, 1.442695
    %v480 = vpow.pop %v479
    %v481 = vadd.f32 %v480, 1.0
    %v482 = vrcp.pop %v481
    %v483 = vmul.f32 1.0, %v482
    %v484 = vtanh.pop %v474
    %v485 = vmul.f32 %v483, %v353
    %487 = vrot.lane.b32.xlu0 %v484, 64
    %v488 = vpop.permute.xlu0 %487
    %v490 = vmul.f32 %v483, %v488
    %492 = vrot.lane.b32.xlu0 %v490, 32
    %v493 = vpop.permute.xlu0 %492
    %v495 = vadd.f32 %v485, %v493
    %v496 = vtanh.pop %v495
    %498 = vrot.lane.b32.xlu0 %v496, 64
    %v499 = vpop.permute.xlu0 %498
    %v501 = vmul.f32 %v483, %v499
    %v502 = vxor.u32 %v477, 2147483648
    %v503 = vmul.f32 %v502, 1.442695
    %v504 = vpow.pop %v503
    %v505 = vadd.f32 %v504, 1.0
    %v506 = vrcp.pop %v505
    %v507 = vmul.f32 1.0, %v506
    %v508 = vtanh.pop %v477
    %v509 = vmul.f32 %v507, %v377
    %511 = vrot.lane.b32.xlu0 %v508, 64
    %v512 = vpop.permute.xlu0 %511
    %v514 = vmul.f32 %v507, %v512
    %516 = vrot.lane.b32.xlu0 %v514, 32
    %v517 = vpop.permute.xlu0 %516
    %v519 = vadd.f32 %v509, %v517
    %v520 = vtanh.pop %v519
    %522 = vrot.lane.b32.xlu0 %v520, 64
    %v523 = vpop.permute.xlu0 %522
    %v525 = vmul.f32 %v507, %v523
    %527 = vrot.lane.b32.xlu0 %v501, 32
    %v528 = vpop.permute.xlu0 %527
    %531 = vrot.lane.b32.xlu0 %v525, 64
    %v532 = vpop.permute.xlu0 %531
    %v534 = vsel %vm392, %v528, %v532
    %s535 = scalar_lea.vmem [#allocation3], 8
    %536 = vst.msk [vmem:[%s535] sm:$0xff] %vm392, %v528
    %s537 = scalar_lea.vmem [#allocation3], 48
    %538 = vst.msk [vmem:[%s537] sm:$0xff] %vm396, %v532
    %v540 = vsel %vm256, %v534, 0
    %542 = vmatprep.subr.mxu0 %v241
    %543 = vmatpush1.msra.mxu0 %v240
    %544 = vmatprep.subr.mxu0 %v243
    %545 = vmatpush1.msra.mxu0 %v242
    %546 = vmatprep.subr.mxu0 %v245
    %547 = vmatpush1.msra.mxu0 %v244
    %548 = vmatprep.subr.mxu0 %v247
    %549 = vmatpush1.msra.mxu0 %v246
    %550 = vmatprep.subr.mxu0 %v249
    %551 = vmatpush1.msra.mxu0 %v248
    %552 = vmatprep.subr.mxu0 %v251
    %553 = vmatpush1.msra.mxu0 %v250
    %554 = vmatprep.subr.mxu0 %v253
    %555 = vmatpush1.msra.mxu0 %v252
    %556 = vmatprep.subr.mxu0 %v255
    %557 = vmatpush1.msra.mxu0 %v254
    %558 = vmatprep.subr.mxu0 0.0
    %559 = vmatpush1.msra.mxu0 0.0
    %560 = vmatprep.subr.mxu0 0.0
    %561 = vmatpush1.msra.mxu0 0.0
    %562 = vmatprep.subr.mxu0 0.0
    %563 = vmatpush1.msra.mxu0 0.0
    %564 = vmatprep.subr.mxu0 0.0
    %565 = vmatpush1.msra.mxu0 0.0
    %566 = vmatprep.subr.mxu0 0.0
    %567 = vmatpush1.msra.mxu0 0.0
    %568 = vmatprep.subr.mxu0 0.0
    %569 = vmatpush1.msra.mxu0 0.0
    %570 = vmatprep.subr.mxu0 0.0
    %571 = vmatpush1.msra.mxu0 0.0
    %572 = vmatprep.subr.mxu0 0.0
    %573 = vmatpush1.msra.mxu0 0.0
    %574 = vmatprep.subr.mxu0 0.0
    %575 = vmatpush1.msra.mxu0 0.0
    %576 = vmatprep.subr.mxu0 0.0
    %577 = vmatpush1.msra.mxu0 0.0
    %578 = vmatprep.subr.mxu0 0.0
    %579 = vmatpush1.msra.mxu0 0.0
    %580 = vmatprep.subr.mxu0 0.0
    %581 = vmatpush1.msra.mxu0 0.0
    %582 = vmatprep.subr.mxu0 0.0
    %583 = vmatpush1.msra.mxu0 0.0
    %584 = vmatprep.subr.mxu0 0.0
    %585 = vmatpush1.msra.mxu0 0.0
    %586 = vmatprep.subr.mxu0 0.0
    %587 = vmatpush1.msra.mxu0 0.0
    %588 = vmatprep.subr.mxu0 0.0
    %589 = vmatpush1.msra.mxu0 0.0
    %590 = vmatprep.subr.mxu0 0.0
    %591 = vmatpush1.msra.mxu0 0.0
    %592 = vmatprep.subr.mxu0 0.0
    %593 = vmatpush1.msra.mxu0 0.0
    %594 = vmatprep.subr.mxu0 0.0
    %595 = vmatpush1.msra.mxu0 0.0
    %596 = vmatprep.subr.mxu0 0.0
    %597 = vmatpush1.msra.mxu0 0.0
    %598 = vmatprep.subr.mxu0 0.0
    %599 = vmatpush1.msra.mxu0 0.0
    %600 = vmatprep.subr.mxu0 0.0
    %601 = vmatpush1.msra.mxu0 0.0
    %602 = vmatprep.subr.mxu0 0.0
    %603 = vmatpush1.msra.mxu0 0.0
    %604 = vmatprep.subr.mxu0 0.0
    %605 = vmatpush1.msra.mxu0 0.0
    %606 = vmatprep.mubr.f32.mxu0 0.0
    %607 = vmatmul.mubr.f32.gmra.mrb[0].mxu0 %v540
    %v608 = vpop.f32.mrb[0].mxu0
    %v609 = vadd.f32 0.0, %v608
    %v610 = vpop.f32.mrb[0].mxu0
    %v611 = vadd.f32 0.0, %v610
    %612 = vdwg.mxu0
    %s613 = scalar_lea.vmem [#allocation2], 32
    %v614 = vld [vmem:[%s613] sm:$0xff]
    %v615 = vadd.f32 %v614, %v609
    %s616 = scalar_lea.vmem [#allocation2], 80
    %v617 = vld [vmem:[%s616 + $0x8] sm:$0xff]
    %v618 = vadd.f32 %v617, %v611
    %v619 = vxor.u32 %v615, 2147483648
    %v620 = vmul.f32 %v619, 1.442695
    %v621 = vpow.pop %v620
    %v622 = vadd.f32 %v621, 1.0
    %v623 = vrcp.pop %v622
    %v624 = vmul.f32 1.0, %v623
    %v625 = vtanh.pop %v615
    %v626 = vmul.f32 %v624, %v495
    %628 = vrot.lane.b32.xlu0 %v625, 64
    %v629 = vpop.permute.xlu0 %628
    %v631 = vmul.f32 %v624, %v629
    %633 = vrot.lane.b32.xlu0 %v631, 32
    %v634 = vpop.permute.xlu0 %633
    %v636 = vadd.f32 %v626, %v634
    %v637 = vtanh.pop %v636
    %639 = vrot.lane.b32.xlu0 %v637, 64
    %v640 = vpop.permute.xlu0 %639
    %v642 = vmul.f32 %v624, %v640
    %v643 = vxor.u32 %v618, 2147483648
    %v644 = vmul.f32 %v643, 1.442695
    %v645 = vpow.pop %v644
    %v646 = vadd.f32 %v645, 1.0
    %v647 = vrcp.pop %v646
    %v648 = vmul.f32 1.0, %v647
    %v649 = vtanh.pop %v618
    %v650 = vmul.f32 %v648, %v519
    %652 = vrot.lane.b32.xlu0 %v649, 64
    %v653 = vpop.permute.xlu0 %652
    %v655 = vmul.f32 %v648, %v653
    %657 = vrot.lane.b32.xlu0 %v655, 32
    %v658 = vpop.permute.xlu0 %657
    %v660 = vadd.f32 %v650, %v658
    %v661 = vtanh.pop %v660
    %663 = vrot.lane.b32.xlu0 %v661, 64
    %v664 = vpop.permute.xlu0 %663
    %v666 = vmul.f32 %v648, %v664
    %668 = vrot.lane.b32.xlu0 %v642, 32
    %v669 = vpop.permute.xlu0 %668
    %672 = vrot.lane.b32.xlu0 %v666, 64
    %v673 = vpop.permute.xlu0 %672
    %v675 = vsel %vm392, %v669, %v673
    %s676 = scalar_lea.vmem [#allocation3], 16
    %677 = vst.msk [vmem:[%s676] sm:$0xff] %vm392, %v669
    %s678 = scalar_lea.vmem [#allocation3], 40
    %679 = vst.msk [vmem:[%s678] sm:$0xff] %vm396, %v673
    %v681 = vsel %vm256, %v675, 0
    %683 = vmatprep.subr.mxu0 %v241
    %684 = vmatpush1.msra.mxu0 %v240
    %685 = vmatprep.subr.mxu0 %v243
    %686 = vmatpush1.msra.mxu0 %v242
    %687 = vmatprep.subr.mxu0 %v245
    %688 = vmatpush1.msra.mxu0 %v244
    %689 = vmatprep.subr.mxu0 %v247
    %690 = vmatpush1.msra.mxu0 %v246
    %691 = vmatprep.subr.mxu0 %v249
    %692 = vmatpush1.msra.mxu0 %v248
    %693 = vmatprep.subr.mxu0 %v251
    %694 = vmatpush1.msra.mxu0 %v250
    %695 = vmatprep.subr.mxu0 %v253
    %696 = vmatpush1.msra.mxu0 %v252
    %697 = vmatprep.subr.mxu0 %v255
    %698 = vmatpush1.msra.mxu0 %v254
    %699 = vmatprep.subr.mxu0 0.0
    %700 = vmatpush1.msra.mxu0 0.0
    %701 = vmatprep.subr.mxu0 0.0
    %702 = vmatpush1.msra.mxu0 0.0
    %703 = vmatprep.subr.mxu0 0.0
    %704 = vmatpush1.msra.mxu0 0.0
    %705 = vmatprep.subr.mxu0 0.0
    %706 = vmatpush1.msra.mxu0 0.0
    %707 = vmatprep.subr.mxu0 0.0
    %708 = vmatpush1.msra.mxu0 0.0
    %709 = vmatprep.subr.mxu0 0.0
    %710 = vmatpush1.msra.mxu0 0.0
    %711 = vmatprep.subr.mxu0 0.0
    %712 = vmatpush1.msra.mxu0 0.0
    %713 = vmatprep.subr.mxu0 0.0
    %714 = vmatpush1.msra.mxu0 0.0
    %715 = vmatprep.subr.mxu0 0.0
    %716 = vmatpush1.msra.mxu0 0.0
    %717 = vmatprep.subr.mxu0 0.0
    %718 = vmatpush1.msra.mxu0 0.0
    %719 = vmatprep.subr.mxu0 0.0
    %720 = vmatpush1.msra.mxu0 0.0
    %721 = vmatprep.subr.mxu0 0.0
    %722 = vmatpush1.msra.mxu0 0.0
    %723 = vmatprep.subr.mxu0 0.0
    %724 = vmatpush1.msra.mxu0 0.0
    %725 = vmatprep.subr.mxu0 0.0
    %726 = vmatpush1.msra.mxu0 0.0
    %727 = vmatprep.subr.mxu0 0.0
    %728 = vmatpush1.msra.mxu0 0.0
    %729 = vmatprep.subr.mxu0 0.0
    %730 = vmatpush1.msra.mxu0 0.0
    %731 = vmatprep.subr.mxu0 0.0
    %732 = vmatpush1.msra.mxu0 0.0
    %733 = vmatprep.subr.mxu0 0.0
    %734 = vmatpush1.msra.mxu0 0.0
    %735 = vmatprep.subr.mxu0 0.0
    %736 = vmatpush1.msra.mxu0 0.0
    %737 = vmatprep.subr.mxu0 0.0
    %738 = vmatpush1.msra.mxu0 0.0
    %739 = vmatprep.subr.mxu0 0.0
    %740 = vmatpush1.msra.mxu0 0.0
    %741 = vmatprep.subr.mxu0 0.0
    %742 = vmatpush1.msra.mxu0 0.0
    %743 = vmatprep.subr.mxu0 0.0
    %744 = vmatpush1.msra.mxu0 0.0
    %745 = vmatprep.subr.mxu0 0.0
    %746 = vmatpush1.msra.mxu0 0.0
    %747 = vmatprep.mubr.f32.mxu0 0.0
    %748 = vmatmul.mubr.f32.gmra.mrb[0].mxu0 %v681
    %v749 = vpop.f32.mrb[0].mxu0
    %v750 = vadd.f32 0.0, %v749
    %v751 = vpop.f32.mrb[0].mxu0
    %v752 = vadd.f32 0.0, %v751
    %753 = vdwg.mxu0
    %s754 = scalar_lea.vmem [#allocation2], 48
    %v755 = vld [vmem:[%s754] sm:$0xff]
    %v756 = vadd.f32 %v755, %v750
    %s757 = scalar_lea.vmem [#allocation2], 64
    %v758 = vld [vmem:[%s757 + $0x8] sm:$0xff]
    %v759 = vadd.f32 %v758, %v752
    %v760 = vxor.u32 %v756, 2147483648
    %v761 = vmul.f32 %v760, 1.442695
    %v762 = vpow.pop %v761
    %v763 = vadd.f32 %v762, 1.0
    %v764 = vrcp.pop %v763
    %v765 = vmul.f32 1.0, %v764
    %v766 = vtanh.pop %v756
    %v767 = vmul.f32 %v765, %v636
    %769 = vrot.lane.b32.xlu0 %v766, 64
    %v770 = vpop.permute.xlu0 %769
    %v772 = vmul.f32 %v765, %v770
    %774 = vrot.lane.b32.xlu0 %v772, 32
    %v775 = vpop.permute.xlu0 %774
    %v777 = vadd.f32 %v767, %v775
    %v778 = vtanh.pop %v777
    %780 = vrot.lane.b32.xlu0 %v778, 64
    %v781 = vpop.permute.xlu0 %780
    %v783 = vmul.f32 %v765, %v781
    %v784 = vxor.u32 %v759, 2147483648
    %v785 = vmul.f32 %v784, 1.442695
    %v786 = vpow.pop %v785
    %v787 = vadd.f32 %v786, 1.0
    %v788 = vrcp.pop %v787
    %v789 = vmul.f32 1.0, %v788
    %v790 = vtanh.pop %v759
    %v791 = vmul.f32 %v789, %v660
    %793 = vrot.lane.b32.xlu0 %v790, 64
    %v794 = vpop.permute.xlu0 %793
    %v796 = vmul.f32 %v789, %v794
    %798 = vrot.lane.b32.xlu0 %v796, 32
    %v799 = vpop.permute.xlu0 %798
    %v801 = vadd.f32 %v791, %v799
    %v802 = vtanh.pop %v801
    %804 = vrot.lane.b32.xlu0 %v802, 64
    %v805 = vpop.permute.xlu0 %804
    %v807 = vmul.f32 %v789, %v805
    %809 = vrot.lane.b32.xlu0 %v783, 32
    %v810 = vpop.permute.xlu0 %809
    %813 = vrot.lane.b32.xlu0 %v807, 64
    %v814 = vpop.permute.xlu0 %813
    %v816 = vsel %vm392, %v810, %v814
    %s817 = scalar_lea.vmem [#allocation3], 24
    %818 = vst.msk [vmem:[%s817] sm:$0xff] %vm392, %v810
    %s819 = scalar_lea.vmem [#allocation3], 32
    %820 = vst.msk [vmem:[%s819] sm:$0xff] %vm396, %v814
    %v822 = vsel %vm256, %v816, 0
    %824 = vmatprep.subr.mxu0 %v241
    %825 = vmatpush1.msra.mxu0 %v240
    %826 = vmatprep.subr.mxu0 %v243
    %827 = vmatpush1.msra.mxu0 %v242
    %828 = vmatprep.subr.mxu0 %v245
    %829 = vmatpush1.msra.mxu0 %v244
    %830 = vmatprep.subr.mxu0 %v247
    %831 = vmatpush1.msra.mxu0 %v246
    %832 = vmatprep.subr.mxu0 %v249
    %833 = vmatpush1.msra.mxu0 %v248
    %834 = vmatprep.subr.mxu0 %v251
    %835 = vmatpush1.msra.mxu0 %v250
    %836 = vmatprep.subr.mxu0 %v253
    %837 = vmatpush1.msra.mxu0 %v252
    %838 = vmatprep.subr.mxu0 %v255
    %839 = vmatpush1.msra.mxu0 %v254
    %840 = vmatprep.subr.mxu0 0.0
    %841 = vmatpush1.msra.mxu0 0.0
    %842 = vmatprep.subr.mxu0 0.0
    %843 = vmatpush1.msra.mxu0 0.0
    %844 = vmatprep.subr.mxu0 0.0
    %845 = vmatpush1.msra.mxu0 0.0
    %846 = vmatprep.subr.mxu0 0.0
    %847 = vmatpush1.msra.mxu0 0.0
    %848 = vmatprep.subr.mxu0 0.0
    %849 = vmatpush1.msra.mxu0 0.0
    %850 = vmatprep.subr.mxu0 0.0
    %851 = vmatpush1.msra.mxu0 0.0
    %852 = vmatprep.subr.mxu0 0.0
    %853 = vmatpush1.msra.mxu0 0.0
    %854 = vmatprep.subr.mxu0 0.0
    %855 = vmatpush1.msra.mxu0 0.0
    %856 = vmatprep.subr.mxu0 0.0
    %857 = vmatpush1.msra.mxu0 0.0
    %858 = vmatprep.subr.mxu0 0.0
    %859 = vmatpush1.msra.mxu0 0.0
    %860 = vmatprep.subr.mxu0 0.0
    %861 = vmatpush1.msra.mxu0 0.0
    %862 = vmatprep.subr.mxu0 0.0
    %863 = vmatpush1.msra.mxu0 0.0
    %864 = vmatprep.subr.mxu0 0.0
    %865 = vmatpush1.msra.mxu0 0.0
    %866 = vmatprep.subr.mxu0 0.0
    %867 = vmatpush1.msra.mxu0 0.0
    %868 = vmatprep.subr.mxu0 0.0
    %869 = vmatpush1.msra.mxu0 0.0
    %870 = vmatprep.subr.mxu0 0.0
    %871 = vmatpush1.msra.mxu0 0.0
    %872 = vmatprep.subr.mxu0 0.0
    %873 = vmatpush1.msra.mxu0 0.0
    %874 = vmatprep.subr.mxu0 0.0
    %875 = vmatpush1.msra.mxu0 0.0
    %876 = vmatprep.subr.mxu0 0.0
    %877 = vmatpush1.msra.mxu0 0.0
    %878 = vmatprep.subr.mxu0 0.0
    %879 = vmatpush1.msra.mxu0 0.0
    %880 = vmatprep.subr.mxu0 0.0
    %881 = vmatpush1.msra.mxu0 0.0
    %882 = vmatprep.subr.mxu0 0.0
    %883 = vmatpush1.msra.mxu0 0.0
    %884 = vmatprep.subr.mxu0 0.0
    %885 = vmatpush1.msra.mxu0 0.0
    %886 = vmatprep.subr.mxu0 0.0
    %887 = vmatpush1.msra.mxu0 0.0
    %888 = vmatprep.mubr.f32.mxu0 0.0
    %889 = vmatmul.mubr.f32.gmra.mrb[0].mxu0 %v822
    %v890 = vpop.f32.mrb[0].mxu0
    %v891 = vadd.f32 0.0, %v890
    %v892 = vpop.f32.mrb[0].mxu0
    %v893 = vadd.f32 0.0, %v892
    %894 = vdwg.mxu0
    %v895 = vld [vmem:[%s757] sm:$0xff]
    %v896 = vadd.f32 %v895, %v891
    %v897 = vld [vmem:[%s754 + $0x8] sm:$0xff]
    %v898 = vadd.f32 %v897, %v893
    %v899 = vxor.u32 %v896, 2147483648
    %v900 = vmul.f32 %v899, 1.442695
    %v901 = vpow.pop %v900
    %v902 = vadd.f32 %v901, 1.0
    %v903 = vrcp.pop %v902
    %v904 = vmul.f32 1.0, %v903
    %v905 = vtanh.pop %v896
    %v906 = vmul.f32 %v904, %v777
    %908 = vrot.lane.b32.xlu0 %v905, 64
    %v909 = vpop.permute.xlu0 %908
    %v911 = vmul.f32 %v904, %v909
    %913 = vrot.lane.b32.xlu0 %v911, 32
    %v914 = vpop.permute.xlu0 %913
    %v916 = vadd.f32 %v906, %v914
    %v917 = vtanh.pop %v916
    %919 = vrot.lane.b32.xlu0 %v917, 64
    %v920 = vpop.permute.xlu0 %919
    %v922 = vmul.f32 %v904, %v920
    %v923 = vxor.u32 %v898, 2147483648
    %v924 = vmul.f32 %v923, 1.442695
    %v925 = vpow.pop %v924
    %v926 = vadd.f32 %v925, 1.0
    %v927 = vrcp.pop %v926
    %v928 = vmul.f32 1.0, %v927
    %v929 = vtanh.pop %v898
    %v930 = vmul.f32 %v928, %v801
    %932 = vrot.lane.b32.xlu0 %v929, 64
    %v933 = vpop.permute.xlu0 %932
    %v935 = vmul.f32 %v928, %v933
    %937 = vrot.lane.b32.xlu0 %v935, 32
    %v938 = vpop.permute.xlu0 %937
    %v940 = vadd.f32 %v930, %v938
    %v941 = vtanh.pop %v940
    %943 = vrot.lane.b32.xlu0 %v941, 64
    %v944 = vpop.permute.xlu0 %943
    %v946 = vmul.f32 %v928, %v944
    %948 = vrot.lane.b32.xlu0 %v922, 32
    %v949 = vpop.permute.xlu0 %948
    %952 = vrot.lane.b32.xlu0 %v946, 64
    %v953 = vpop.permute.xlu0 %952
    %v955 = vsel %vm392, %v949, %v953
    %956 = vst.msk [vmem:[%s819] sm:$0xff] %vm392, %v949
    %957 = vst.msk [vmem:[%s817] sm:$0xff] %vm396, %v953
    %v959 = vsel %vm256, %v955, 0
    %961 = vmatprep.subr.mxu0 %v241
    %962 = vmatpush1.msra.mxu0 %v240
    %963 = vmatprep.subr.mxu0 %v243
    %964 = vmatpush1.msra.mxu0 %v242
    %965 = vmatprep.subr.mxu0 %v245
    %966 = vmatpush1.msra.mxu0 %v244
    %967 = vmatprep.subr.mxu0 %v247
    %968 = vmatpush1.msra.mxu0 %v246
    %969 = vmatprep.subr.mxu0 %v249
    %970 = vmatpush1.msra.mxu0 %v248
    %971 = vmatprep.subr.mxu0 %v251
    %972 = vmatpush1.msra.mxu0 %v250
    %973 = vmatprep.subr.mxu0 %v253
    %974 = vmatpush1.msra.mxu0 %v252
    %975 = vmatprep.subr.mxu0 %v255
    %976 = vmatpush1.msra.mxu0 %v254
    %977 = vmatprep.subr.mxu0 0.0
    %978 = vmatpush1.msra.mxu0 0.0
    %979 = vmatprep.subr.mxu0 0.0
    %980 = vmatpush1.msra.mxu0 0.0
    %981 = vmatprep.subr.mxu0 0.0
    %982 = vmatpush1.msra.mxu0 0.0
    %983 = vmatprep.subr.mxu0 0.0
    %984 = vmatpush1.msra.mxu0 0.0
    %985 = vmatprep.subr.mxu0 0.0
    %986 = vmatpush1.msra.mxu0 0.0
    %987 = vmatprep.subr.mxu0 0.0
    %988 = vmatpush1.msra.mxu0 0.0
    %989 = vmatprep.subr.mxu0 0.0
    %990 = vmatpush1.msra.mxu0 0.0
    %991 = vmatprep.subr.mxu0 0.0
    %992 = vmatpush1.msra.mxu0 0.0
    %993 = vmatprep.subr.mxu0 0.0
    %994 = vmatpush1.msra.mxu0 0.0
    %995 = vmatprep.subr.mxu0 0.0
    %996 = vmatpush1.msra.mxu0 0.0
    %997 = vmatprep.subr.mxu0 0.0
    %998 = vmatpush1.msra.mxu0 0.0
    %999 = vmatprep.subr.mxu0 0.0
    %1000 = vmatpush1.msra.mxu0 0.0
    %1001 = vmatprep.subr.mxu0 0.0
    %1002 = vmatpush1.msra.mxu0 0.0
    %1003 = vmatprep.subr.mxu0 0.0
    %1004 = vmatpush1.msra.mxu0 0.0
    %1005 = vmatprep.subr.mxu0 0.0
    %1006 = vmatpush1.msra.mxu0 0.0
    %1007 = vmatprep.subr.mxu0 0.0
    %1008 = vmatpush1.msra.mxu0 0.0
    %1009 = vmatprep.subr.mxu0 0.0
    %1010 = vmatpush1.msra.mxu0 0.0
    %1011 = vmatprep.subr.mxu0 0.0
    %1012 = vmatpush1.msra.mxu0 0.0
    %1013 = vmatprep.subr.mxu0 0.0
    %1014 = vmatpush1.msra.mxu0 0.0
    %1015 = vmatprep.subr.mxu0 0.0
    %1016 = vmatpush1.msra.mxu0 0.0
    %1017 = vmatprep.subr.mxu0 0.0
    %1018 = vmatpush1.msra.mxu0 0.0
    %1019 = vmatprep.subr.mxu0 0.0
    %1020 = vmatpush1.msra.mxu0 0.0
    %1021 = vmatprep.subr.mxu0 0.0
    %1022 = vmatpush1.msra.mxu0 0.0
    %1023 = vmatprep.subr.mxu0 0.0
    %1024 = vmatpush1.msra.mxu0 0.0
    %1025 = vmatprep.mubr.f32.mxu0 0.0
    %1026 = vmatmul.mubr.f32.gmra.mrb[0].mxu0 %v959
    %v1027 = vpop.f32.mrb[0].mxu0
    %v1028 = vadd.f32 0.0, %v1027
    %v1029 = vpop.f32.mrb[0].mxu0
    %v1030 = vadd.f32 0.0, %v1029
    %1031 = vdwg.mxu0
    %v1032 = vld [vmem:[%s616] sm:$0xff]
    %v1033 = vadd.f32 %v1032, %v1028
    %v1034 = vld [vmem:[%s613 + $0x8] sm:$0xff]
    %v1035 = vadd.f32 %v1034, %v1030
    %v1036 = vxor.u32 %v1033, 2147483648
    %v1037 = vmul.f32 %v1036, 1.442695
    %v1038 = vpow.pop %v1037
    %v1039 = vadd.f32 %v1038, 1.0
    %v1040 = vrcp.pop %v1039
    %v1041 = vmul.f32 1.0, %v1040
    %v1042 = vtanh.pop %v1033
    %v1043 = vmul.f32 %v1041, %v916
    %1045 = vrot.lane.b32.xlu0 %v1042, 64
    %v1046 = vpop.permute.xlu0 %1045
    %v1048 = vmul.f32 %v1041, %v1046
    %1050 = vrot.lane.b32.xlu0 %v1048, 32
    %v1051 = vpop.permute.xlu0 %1050
    %v1053 = vadd.f32 %v1043, %v1051
    %v1054 = vtanh.pop %v1053
    %1056 = vrot.lane.b32.xlu0 %v1054, 64
    %v1057 = vpop.permute.xlu0 %1056
    %v1059 = vmul.f32 %v1041, %v1057
    %v1060 = vxor.u32 %v1035, 2147483648
    %v1061 = vmul.f32 %v1060, 1.442695
    %v1062 = vpow.pop %v1061
    %v1063 = vadd.f32 %v1062, 1.0
    %v1064 = vrcp.pop %v1063
    %v1065 = vmul.f32 1.0, %v1064
    %v1066 = vtanh.pop %v1035
    %v1067 = vmul.f32 %v1065, %v940
    %1069 = vrot.lane.b32.xlu0 %v1066, 64
    %v1070 = vpop.permute.xlu0 %1069
    %v1072 = vmul.f32 %v1065, %v1070
    %1074 = vrot.lane.b32.xlu0 %v1072, 32
    %v1075 = vpop.permute.xlu0 %1074
    %v1077 = vadd.f32 %v1067, %v1075
    %v1078 = vtanh.pop %v1077
    %1080 = vrot.lane.b32.xlu0 %v1078, 64
    %v1081 = vpop.permute.xlu0 %1080
    %v1083 = vmul.f32 %v1065, %v1081
    %1085 = vrot.lane.b32.xlu0 %v1059, 32
    %v1086 = vpop.permute.xlu0 %1085
    %1089 = vrot.lane.b32.xlu0 %v1083, 64
    %v1090 = vpop.permute.xlu0 %1089
    %v1092 = vsel %vm392, %v1086, %v1090
    %1093 = vst.msk [vmem:[%s678] sm:$0xff] %vm392, %v1086
    %1094 = vst.msk [vmem:[%s676] sm:$0xff] %vm396, %v1090
    %v1096 = vsel %vm256, %v1092, 0
    %1098 = vmatprep.subr.mxu0 %v241
    %1099 = vmatpush1.msra.mxu0 %v240
    %1100 = vmatprep.subr.mxu0 %v243
    %1101 = vmatpush1.msra.mxu0 %v242
    %1102 = vmatprep.subr.mxu0 %v245
    %1103 = vmatpush1.msra.mxu0 %v244
    %1104 = vmatprep.subr.mxu0 %v247
    %1105 = vmatpush1.msra.mxu0 %v246
    %1106 = vmatprep.subr.mxu0 %v249
    %1107 = vmatpush1.msra.mxu0 %v248
    %1108 = vmatprep.subr.mxu0 %v251
    %1109 = vmatpush1.msra.mxu0 %v250
    %1110 = vmatprep.subr.mxu0 %v253
    %1111 = vmatpush1.msra.mxu0 %v252
    %1112 = vmatprep.subr.mxu0 %v255
    %1113 = vmatpush1.msra.mxu0 %v254
    %1114 = vmatprep.subr.mxu0 0.0
    %1115 = vmatpush1.msra.mxu0 0.0
    %1116 = vmatprep.subr.mxu0 0.0
    %1117 = vmatpush1.msra.mxu0 0.0
    %1118 = vmatprep.subr.mxu0 0.0
    %1119 = vmatpush1.msra.mxu0 0.0
    %1120 = vmatprep.subr.mxu0 0.0
    %1121 = vmatpush1.msra.mxu0 0.0
    %1122 = vmatprep.subr.mxu0 0.0
    %1123 = vmatpush1.msra.mxu0 0.0
    %1124 = vmatprep.subr.mxu0 0.0
    %1125 = vmatpush1.msra.mxu0 0.0
    %1126 = vmatprep.subr.mxu0 0.0
    %1127 = vmatpush1.msra.mxu0 0.0
    %1128 = vmatprep.subr.mxu0 0.0
    %1129 = vmatpush1.msra.mxu0 0.0
    %1130 = vmatprep.subr.mxu0 0.0
    %1131 = vmatpush1.msra.mxu0 0.0
    %1132 = vmatprep.subr.mxu0 0.0
    %1133 = vmatpush1.msra.mxu0 0.0
    %1134 = vmatprep.subr.mxu0 0.0
    %1135 = vmatpush1.msra.mxu0 0.0
    %1136 = vmatprep.subr.mxu0 0.0
    %1137 = vmatpush1.msra.mxu0 0.0
    %1138 = vmatprep.subr.mxu0 0.0
    %1139 = vmatpush1.msra.mxu0 0.0
    %1140 = vmatprep.subr.mxu0 0.0
    %1141 = vmatpush1.msra.mxu0 0.0
    %1142 = vmatprep.subr.mxu0 0.0
    %1143 = vmatpush1.msra.mxu0 0.0
    %1144 = vmatprep.subr.mxu0 0.0
    %1145 = vmatpush1.msra.mxu0 0.0
    %1146 = vmatprep.subr.mxu0 0.0
    %1147 = vmatpush1.msra.mxu0 0.0
    %1148 = vmatprep.subr.mxu0 0.0
    %1149 = vmatpush1.msra.mxu0 0.0
    %1150 = vmatprep.subr.mxu0 0.0
    %1151 = vmatpush1.msra.mxu0 0.0
    %1152 = vmatprep.subr.mxu0 0.0
    %1153 = vmatpush1.msra.mxu0 0.0
    %1154 = vmatprep.subr.mxu0 0.0
    %1155 = vmatpush1.msra.mxu0 0.0
    %1156 = vmatprep.subr.mxu0 0.0
    %1157 = vmatpush1.msra.mxu0 0.0
    %1158 = vmatprep.subr.mxu0 0.0
    %1159 = vmatpush1.msra.mxu0 0.0
    %1160 = vmatprep.subr.mxu0 0.0
    %1161 = vmatpush1.msra.mxu0 0.0
    %1162 = vmatprep.mubr.f32.mxu0 0.0
    %1163 = vmatmul.mubr.f32.gmra.mrb[0].mxu0 %v1096
    %v1164 = vpop.f32.mrb[0].mxu0
    %v1165 = vadd.f32 0.0, %v1164
    %v1166 = vpop.f32.mrb[0].mxu0
    %v1167 = vadd.f32 0.0, %v1166
    %1168 = vdwg.mxu0
    %v1169 = vld [vmem:[%s475] sm:$0xff]
    %v1170 = vadd.f32 %v1169, %v1165
    %v1171 = vld [vmem:[%s472 + $0x8] sm:$0xff]
    %v1172 = vadd.f32 %v1171, %v1167
    %v1173 = vxor.u32 %v1170, 2147483648
    %v1174 = vmul.f32 %v1173, 1.442695
    %v1175 = vpow.pop %v1174
    %v1176 = vadd.f32 %v1175, 1.0
    %v1177 = vrcp.pop %v1176
    %v1178 = vmul.f32 1.0, %v1177
    %v1179 = vtanh.pop %v1170
    %v1180 = vmul.f32 %v1178, %v1053
    %1182 = vrot.lane.b32.xlu0 %v1179, 64
    %v1183 = vpop.permute.xlu0 %1182
    %v1185 = vmul.f32 %v1178, %v1183
    %1187 = vrot.lane.b32.xlu0 %v1185, 32
    %v1188 = vpop.permute.xlu0 %1187
    %v1190 = vadd.f32 %v1180, %v1188
    %v1191 = vtanh.pop %v1190
    %1193 = vrot.lane.b32.xlu0 %v1191, 64
    %v1194 = vpop.permute.xlu0 %1193
    %v1196 = vmul.f32 %v1178, %v1194
    %v1197 = vxor.u32 %v1172, 2147483648
    %v1198 = vmul.f32 %v1197, 1.442695
    %v1199 = vpow.pop %v1198
    %v1200 = vadd.f32 %v1199, 1.0
    %v1201 = vrcp.pop %v1200
    %v1202 = vmul.f32 1.0, %v1201
    %v1203 = vtanh.pop %v1172
    %v1204 = vmul.f32 %v1202, %v1077
    %1206 = vrot.lane.b32.xlu0 %v1203, 64
    %v1207 = vpop.permute.xlu0 %1206
    %v1209 = vmul.f32 %v1202, %v1207
    %1211 = vrot.lane.b32.xlu0 %v1209, 32
    %v1212 = vpop.permute.xlu0 %1211
    %v1214 = vadd.f32 %v1204, %v1212
    %v1215 = vtanh.pop %v1214
    %1217 = vrot.lane.b32.xlu0 %v1215, 64
    %v1218 = vpop.permute.xlu0 %1217
    %v1220 = vmul.f32 %v1202, %v1218
    %1222 = vrot.lane.b32.xlu0 %v1196, 32
    %v1223 = vpop.permute.xlu0 %1222
    %1226 = vrot.lane.b32.xlu0 %v1220, 64
    %v1227 = vpop.permute.xlu0 %1226
    %v1229 = vsel %vm392, %v1223, %v1227
    %1230 = vst.msk [vmem:[%s537] sm:$0xff] %vm392, %v1223
    %1231 = vst.msk [vmem:[%s535] sm:$0xff] %vm396, %v1227
    %v1233 = vsel %vm256, %v1229, 0
    %1235 = vmatprep.subr.mxu0 %v241
    %1236 = vmatpush1.msra.mxu0 %v240
    %1237 = vmatprep.subr.mxu0 %v243
    %1238 = vmatpush1.msra.mxu0 %v242
    %1239 = vmatprep.subr.mxu0 %v245
    %1240 = vmatpush1.msra.mxu0 %v244
    %1241 = vmatprep.subr.mxu0 %v247
    %1242 = vmatpush1.msra.mxu0 %v246
    %1243 = vmatprep.subr.mxu0 %v249
    %1244 = vmatpush1.msra.mxu0 %v248
    %1245 = vmatprep.subr.mxu0 %v251
    %1246 = vmatpush1.msra.mxu0 %v250
    %1247 = vmatprep.subr.mxu0 %v253
    %1248 = vmatpush1.msra.mxu0 %v252
    %1249 = vmatprep.subr.mxu0 %v255
    %1250 = vmatpush1.msra.mxu0 %v254
    %1251 = vmatprep.subr.mxu0 0.0
    %1252 = vmatpush1.msra.mxu0 0.0
    %1253 = vmatprep.subr.mxu0 0.0
    %1254 = vmatpush1.msra.mxu0 0.0
    %1255 = vmatprep.subr.mxu0 0.0
    %1256 = vmatpush1.msra.mxu0 0.0
    %1257 = vmatprep.subr.mxu0 0.0
    %1258 = vmatpush1.msra.mxu0 0.0
    %1259 = vmatprep.subr.mxu0 0.0
    %1260 = vmatpush1.msra.mxu0 0.0
    %1261 = vmatprep.subr.mxu0 0.0
    %1262 = vmatpush1.msra.mxu0 0.0
    %1263 = vmatprep.subr.mxu0 0.0
    %1264 = vmatpush1.msra.mxu0 0.0
    %1265 = vmatprep.subr.mxu0 0.0
    %1266 = vmatpush1.msra.mxu0 0.0
    %1267 = vmatprep.subr.mxu0 0.0
    %1268 = vmatpush1.msra.mxu0 0.0
    %1269 = vmatprep.subr.mxu0 0.0
    %1270 = vmatpush1.msra.mxu0 0.0
    %1271 = vmatprep.subr.mxu0 0.0
    %1272 = vmatpush1.msra.mxu0 0.0
    %1273 = vmatprep.subr.mxu0 0.0
    %1274 = vmatpush1.msra.mxu0 0.0
    %1275 = vmatprep.subr.mxu0 0.0
    %1276 = vmatpush1.msra.mxu0 0.0
    %1277 = vmatprep.subr.mxu0 0.0
    %1278 = vmatpush1.msra.mxu0 0.0
    %1279 = vmatprep.subr.mxu0 0.0
    %1280 = vmatpush1.msra.mxu0 0.0
    %1281 = vmatprep.subr.mxu0 0.0
    %1282 = vmatpush1.msra.mxu0 0.0
    %1283 = vmatprep.subr.mxu0 0.0
    %1284 = vmatpush1.msra.mxu0 0.0
    %1285 = vmatprep.subr.mxu0 0.0
    %1286 = vmatpush1.msra.mxu0 0.0
    %1287 = vmatprep.subr.mxu0 0.0
    %1288 = vmatpush1.msra.mxu0 0.0
    %1289 = vmatprep.subr.mxu0 0.0
    %1290 = vmatpush1.msra.mxu0 0.0
    %1291 = vmatprep.subr.mxu0 0.0
    %1292 = vmatpush1.msra.mxu0 0.0
    %1293 = vmatprep.subr.mxu0 0.0
    %1294 = vmatpush1.msra.mxu0 0.0
    %1295 = vmatprep.subr.mxu0 0.0
    %1296 = vmatpush1.msra.mxu0 0.0
    %1297 = vmatprep.subr.mxu0 0.0
    %1298 = vmatpush1.msra.mxu0 0.0
    %1299 = vmatprep.mubr.f32.mxu0 0.0
    %1300 = vmatmul.mubr.f32.gmra.mrb[0].mxu0 %v1233
    %v1301 = vpop.f32.mrb[0].mxu0
    %v1302 = vadd.f32 0.0, %v1301
    %v1303 = vpop.f32.mrb[0].mxu0
    %v1304 = vadd.f32 0.0, %v1303
    %1305 = vdwg.mxu0
    %v1306 = vld [vmem:[%s333] sm:$0xff]
    %v1307 = vadd.f32 %v1306, %v1302
    %v1308 = vld [vmem:[#allocation2 + $0x8] sm:$0xff]
    %v1309 = vadd.f32 %v1308, %v1304
    %v1310 = vxor.u32 %v1307, 2147483648
    %v1311 = vmul.f32 %v1310, 1.442695
    %v1312 = vpow.pop %v1311
    %v1313 = vadd.f32 %v1312, 1.0
    %v1314 = vrcp.pop %v1313
    %v1315 = vmul.f32 1.0, %v1314
    %v1316 = vtanh.pop %v1307
    %v1317 = vmul.f32 %v1315, %v1190
    %1319 = vrot.lane.b32.xlu0 %v1316, 64
    %v1320 = vpop.permute.xlu0 %1319
    %v1322 = vmul.f32 %v1315, %v1320
    %1324 = vrot.lane.b32.xlu0 %v1322, 32
    %v1325 = vpop.permute.xlu0 %1324
    %v1327 = vadd.f32 %v1317, %v1325
    %v1328 = vtanh.pop %v1327
    %1330 = vrot.lane.b32.xlu0 %v1328, 64
    %v1331 = vpop.permute.xlu0 %1330
    %v1333 = vmul.f32 %v1315, %v1331
    %v1334 = vxor.u32 %v1309, 2147483648
    %v1335 = vmul.f32 %v1334, 1.442695
    %v1336 = vpow.pop %v1335
    %v1337 = vadd.f32 %v1336, 1.0
    %v1338 = vrcp.pop %v1337
    %v1339 = vmul.f32 1.0, %v1338
    %v1340 = vtanh.pop %v1309
    %v1341 = vmul.f32 %v1339, %v1214
    %1343 = vrot.lane.b32.xlu0 %v1340, 64
    %v1344 = vpop.permute.xlu0 %1343
    %v1346 = vmul.f32 %v1339, %v1344
    %1348 = vrot.lane.b32.xlu0 %v1346, 32
    %v1349 = vpop.permute.xlu0 %1348
    %v1351 = vadd.f32 %v1341, %v1349
    %v1352 = vtanh.pop %v1351
    %1354 = vrot.lane.b32.xlu0 %v1352, 64
    %v1355 = vpop.permute.xlu0 %1354
    %v1357 = vmul.f32 %v1339, %v1355
    %1359 = vrot.lane.b32.xlu0 %v1333, 32
    %v1360 = vpop.permute.xlu0 %1359
    %1362 = vst.msk [vmem:[%s395] sm:$0xff] %vm392, %v1360
    %1364 = vrot.lane.b32.xlu0 %v1357, 64
    %v1365 = vpop.permute.xlu0 %1364
    %1367 = vst.msk [vmem:[#allocation3] sm:$0xff] %vm396, %v1365
    %v1368 = vld [vmem:[#allocation3] sm:$0xff]
    %v1369 = vld [vmem:[#allocation3 + $0x8] sm:$0xff]
    %v1370 = vld [vmem:[#allocation3 + $0x10] sm:$0xff]
    %v1371 = vld [vmem:[#allocation3 + $0x18] sm:$0xff]
    %v1372 = vld [vmem:[#allocation3 + $0x20] sm:$0xff]
    %v1373 = vld [vmem:[#allocation3 + $0x28] sm:$0xff]
    %v1374 = vld [vmem:[#allocation3 + $0x30] sm:$0xff]
    %v1375 = vld [vmem:[#allocation3 + $0x38] sm:$0xff]
    %v1376 = vld [vmem:[#allocation5] sm:$0xff]
    %v1377 = vld [vmem:[#allocation5 + $0x8] sm:$0xff]
    %v1378 = vld [vmem:[#allocation5 + $0x10] sm:$0xff]
    %v1379 = vld [vmem:[#allocation5 + $0x18] sm:$0xff]
    %v1380 = vld [vmem:[#allocation5 + $0x20] sm:$0xff]
    %v1381 = vld [vmem:[#allocation5 + $0x28] sm:$0xff]
    %v1382 = vld [vmem:[#allocation5 + $0x30] sm:$0xff]
    %v1383 = vld [vmem:[#allocation5 + $0x38] sm:$0xff]
    %v1384 = vld [vmem:[#allocation5 + $0x40] sm:$0xff]
    %v1385 = vld [vmem:[#allocation5 + $0x48] sm:$0xff]
    %v1386 = vld [vmem:[#allocation5 + $0x50] sm:$0xff]
    %v1387 = vld [vmem:[#allocation5 + $0x58] sm:$0xff]
    %v1388 = vld [vmem:[#allocation5 + $0x60] sm:$0xff]
    %v1389 = vld [vmem:[#allocation5 + $0x68] sm:$0xff]
    %v1390 = vld [vmem:[#allocation5 + $0x70] sm:$0xff]
    %v1391 = vld [vmem:[#allocation5 + $0x78] sm:$0xff]
    %v1392 = vld [vmem:[%s5] sm:$0x3]
    %v1394 = vlaneseq
    %v1395 = vshrl.u32 %v1394, 7
    %v1396 = vsub.s32 0, %v1395
    %v1397 = vrot.slane %v1392, %v1396
    %v1398 = vlaneseq
    %v1399 = vshrl.u32 %v1398, 7
    %v1400 = vsub.s32 1, %v1399
    %v1401 = vrot.slane %v1392, %v1400
    %v1405 = vsel %vm256, %v1368, 0
    %v1408 = vsel %vm256, %v1369, 0
    %v1411 = vsel %vm256, %v1370, 0
    %v1414 = vsel %vm256, %v1371, 0
    %v1417 = vsel %vm256, %v1372, 0
    %v1420 = vsel %vm256, %v1373, 0
    %v1423 = vsel %vm256, %v1374, 0
    %v1426 = vsel %vm256, %v1375, 0
    %1428 = vmatprep.subr.mxu0 %v1377
    %1429 = vmatpush1.msra.mxu0 %v1376
    %1430 = vmatprep.subr.mxu0 %v1379
    %1431 = vmatpush1.msra.mxu0 %v1378
    %1432 = vmatprep.subr.mxu0 %v1381
    %1433 = vmatpush1.msra.mxu0 %v1380
    %1434 = vmatprep.subr.mxu0 %v1383
    %1435 = vmatpush1.msra.mxu0 %v1382
    %1436 = vmatprep.subr.mxu0 %v1385
    %1437 = vmatpush1.msra.mxu0 %v1384
    %1438 = vmatprep.subr.mxu0 %v1387
    %1439 = vmatpush1.msra.mxu0 %v1386
    %1440 = vmatprep.subr.mxu0 %v1389
    %1441 = vmatpush1.msra.mxu0 %v1388
    %1442 = vmatprep.subr.mxu0 %v1391
    %1443 = vmatpush1.msra.mxu0 %v1390
    %1444 = vmatprep.subr.mxu0 0.0
    %1445 = vmatpush1.msra.mxu0 0.0
    %1446 = vmatprep.subr.mxu0 0.0
    %1447 = vmatpush1.msra.mxu0 0.0
    %1448 = vmatprep.subr.mxu0 0.0
    %1449 = vmatpush1.msra.mxu0 0.0
    %1450 = vmatprep.subr.mxu0 0.0
    %1451 = vmatpush1.msra.mxu0 0.0
    %1452 = vmatprep.subr.mxu0 0.0
    %1453 = vmatpush1.msra.mxu0 0.0
    %1454 = vmatprep.subr.mxu0 0.0
    %1455 = vmatpush1.msra.mxu0 0.0
    %1456 = vmatprep.subr.mxu0 0.0
    %1457 = vmatpush1.msra.mxu0 0.0
    %1458 = vmatprep.subr.mxu0 0.0
    %1459 = vmatpush1.msra.mxu0 0.0
    %1460 = vmatprep.subr.mxu0 0.0
    %1461 = vmatpush1.msra.mxu0 0.0
    %1462 = vmatprep.subr.mxu0 0.0
    %1463 = vmatpush1.msra.mxu0 0.0
    %1464 = vmatprep.subr.mxu0 0.0
    %1465 = vmatpush1.msra.mxu0 0.0
    %1466 = vmatprep.subr.mxu0 0.0
    %1467 = vmatpush1.msra.mxu0 0.0
    %1468 = vmatprep.subr.mxu0 0.0
    %1469 = vmatpush1.msra.mxu0 0.0
    %1470 = vmatprep.subr.mxu0 0.0
    %1471 = vmatpush1.msra.mxu0 0.0
    %1472 = vmatprep.subr.mxu0 0.0
    %1473 = vmatpush1.msra.mxu0 0.0
    %1474 = vmatprep.subr.mxu0 0.0
    %1475 = vmatpush1.msra.mxu0 0.0
    %1476 = vmatprep.subr.mxu0 0.0
    %1477 = vmatpush1.msra.mxu0 0.0
    %1478 = vmatprep.subr.mxu0 0.0
    %1479 = vmatpush1.msra.mxu0 0.0
    %1480 = vmatprep.subr.mxu0 0.0
    %1481 = vmatpush1.msra.mxu0 0.0
    %1482 = vmatprep.subr.mxu0 0.0
    %1483 = vmatpush1.msra.mxu0 0.0
    %1484 = vmatprep.subr.mxu0 0.0
    %1485 = vmatpush1.msra.mxu0 0.0
    %1486 = vmatprep.subr.mxu0 0.0
    %1487 = vmatpush1.msra.mxu0 0.0
    %1488 = vmatprep.subr.mxu0 0.0
    %1489 = vmatpush1.msra.mxu0 0.0
    %1490 = vmatprep.subr.mxu0 0.0
    %1491 = vmatpush1.msra.mxu0 0.0
    %1492 = vmatprep.mubr.f32.mxu0 0.0
    %1493 = vmatmul.mubr.f32.gmra.mrb[0].mxu0 %v1405
    %v1494 = vpop.f32.mrb[0].mxu0
    %v1495 = vadd.f32 %v1397, %v1494
    %v1496 = vpop.f32.mrb[0].mxu0
    %v1497 = vadd.f32 %v1401, %v1496
    %1498 = vmatprep.mubr.f32.mxu0 0.0
    %1499 = vmatmul.mubr.f32.gmra.mrb[0].mxu0 %v1408
    %v1500 = vpop.f32.mrb[0].mxu0
    %v1501 = vadd.f32 %v1397, %v1500
    %v1502 = vpop.f32.mrb[0].mxu0
    %v1503 = vadd.f32 %v1401, %v1502
    %1504 = vmatprep.mubr.f32.mxu0 0.0
    %1505 = vmatmul.mubr.f32.gmra.mrb[0].mxu0 %v1411
    %v1506 = vpop.f32.mrb[0].mxu0
    %v1507 = vadd.f32 %v1397, %v1506
    %v1508 = vpop.f32.mrb[0].mxu0
    %v1509 = vadd.f32 %v1401, %v1508
    %1510 = vmatprep.mubr.f32.mxu0 0.0
    %1511 = vmatmul.mubr.f32.gmra.mrb[0].mxu0 %v1414
    %v1512 = vpop.f32.mrb[0].mxu0
    %v1513 = vadd.f32 %v1397, %v1512
    %v1514 = vpop.f32.mrb[0].mxu0
    %v1515 = vadd.f32 %v1401, %v1514
    %1516 = vmatprep.mubr.f32.mxu0 0.0
    %1517 = vmatmul.mubr.f32.gmra.mrb[0].mxu0 %v1417
    %v1518 = vpop.f32.mrb[0].mxu0
    %v1519 = vadd.f32 %v1397, %v1518
    %v1520 = vpop.f32.mrb[0].mxu0
    %v1521 = vadd.f32 %v1401, %v1520
    %1522 = vmatprep.mubr.f32.mxu0 0.0
    %1523 = vmatmul.mubr.f32.gmra.mrb[0].mxu0 %v1420
    %v1524 = vpop.f32.mrb[0].mxu0
    %v1525 = vadd.f32 %v1397, %v1524
    %v1526 = vpop.f32.mrb[0].mxu0
    %v1527 = vadd.f32 %v1401, %v1526
    %1528 = vmatprep.mubr.f32.mxu0 0.0
    %1529 = vmatmul.mubr.f32.gmra.mrb[0].mxu0 %v1423
    %v1530 = vpop.f32.mrb[0].mxu0
    %v1531 = vadd.f32 %v1397, %v1530
    %v1532 = vpop.f32.mrb[0].mxu0
    %v1533 = vadd.f32 %v1401, %v1532
    %1534 = vmatprep.mubr.f32.mxu0 0.0
    %1535 = vmatmul.mubr.f32.gmra.mrb[0].mxu0 %v1426
    %v1536 = vpop.f32.mrb[0].mxu0
    %v1537 = vadd.f32 %v1397, %v1536
    %v1538 = vpop.f32.mrb[0].mxu0
    %v1539 = vadd.f32 %v1401, %v1538
    %1540 = vdwg.mxu0
    %1541 = vst [vmem:[#allocation2] sm:$0xff] %v1495
    %1542 = vst [vmem:[#allocation2 + $0x8] sm:$0xff] %v1497
    %1543 = vst [vmem:[#allocation2 + $0x10] sm:$0xff] %v1501
    %1544 = vst [vmem:[#allocation2 + $0x18] sm:$0xff] %v1503
    %1545 = vst [vmem:[#allocation2 + $0x20] sm:$0xff] %v1507
    %1546 = vst [vmem:[#allocation2 + $0x28] sm:$0xff] %v1509
    %1547 = vst [vmem:[#allocation2 + $0x30] sm:$0xff] %v1513
    %1548 = vst [vmem:[#allocation2 + $0x38] sm:$0xff] %v1515
    %1549 = vst [vmem:[#allocation2 + $0x40] sm:$0xff] %v1519
    %1550 = vst [vmem:[#allocation2 + $0x48] sm:$0xff] %v1521
    %1551 = vst [vmem:[#allocation2 + $0x50] sm:$0xff] %v1525
    %1552 = vst [vmem:[#allocation2 + $0x58] sm:$0xff] %v1527
    %1553 = vst [vmem:[#allocation2 + $0x60] sm:$0xff] %v1531
    %1554 = vst [vmem:[#allocation2 + $0x68] sm:$0xff] %v1533
    %1555 = vst [vmem:[#allocation2 + $0x70] sm:$0xff] %v1537
    %1556 = vst [vmem:[#allocation2 + $0x78] sm:$0xff] %v1539
    %v1557 = vld [vmem:[#allocation7] sm:$0xff]
    %v1558 = vld [vmem:[#allocation7 + $0x8] sm:$0xff]
    %v1559 = vld [vmem:[#allocation7 + $0x10] sm:$0xff]
    %v1560 = vld [vmem:[#allocation7 + $0x18] sm:$0xff]
    %v1561 = vld [vmem:[#allocation7 + $0x20] sm:$0xff]
    %v1562 = vld [vmem:[#allocation7 + $0x28] sm:$0xff]
    %v1563 = vld [vmem:[#allocation7 + $0x30] sm:$0xff]
    %v1564 = vld [vmem:[#allocation7 + $0x38] sm:$0xff]
    %v1565 = vld [vmem:[#allocation7 + $0x40] sm:$0xff]
    %v1566 = vld [vmem:[#allocation7 + $0x48] sm:$0xff]
    %v1567 = vld [vmem:[#allocation7 + $0x50] sm:$0xff]
    %v1568 = vld [vmem:[#allocation7 + $0x58] sm:$0xff]
    %v1569 = vld [vmem:[#allocation7 + $0x60] sm:$0xff]
    %v1570 = vld [vmem:[#allocation7 + $0x68] sm:$0xff]
    %v1571 = vld [vmem:[#allocation7 + $0x70] sm:$0xff]
    %v1572 = vld [vmem:[#allocation7 + $0x78] sm:$0xff]
    %1573 = vmatprep.subr.mxu0 %v1558
    %1574 = vmatpush1.msra.mxu0 %v1557
    %1575 = vmatprep.subr.mxu0 %v1560
    %1576 = vmatpush1.msra.mxu0 %v1559
    %1577 = vmatprep.subr.mxu0 %v1562
    %1578 = vmatpush1.msra.mxu0 %v1561
    %1579 = vmatprep.subr.mxu0 %v1564
    %1580 = vmatpush1.msra.mxu0 %v1563
    %1581 = vmatprep.subr.mxu0 %v1566
    %1582 = vmatpush1.msra.mxu0 %v1565
    %1583 = vmatprep.subr.mxu0 %v1568
    %1584 = vmatpush1.msra.mxu0 %v1567
    %1585 = vmatprep.subr.mxu0 %v1570
    %1586 = vmatpush1.msra.mxu0 %v1569
    %1587 = vmatprep.subr.mxu0 %v1572
    %1588 = vmatpush1.msra.mxu0 %v1571
    %1589 = vmatprep.subr.mxu0 0.0
    %1590 = vmatpush1.msra.mxu0 0.0
    %1591 = vmatprep.subr.mxu0 0.0
    %1592 = vmatpush1.msra.mxu0 0.0
    %1593 = vmatprep.subr.mxu0 0.0
    %1594 = vmatpush1.msra.mxu0 0.0
    %1595 = vmatprep.subr.mxu0 0.0
    %1596 = vmatpush1.msra.mxu0 0.0
    %1597 = vmatprep.subr.mxu0 0.0
    %1598 = vmatpush1.msra.mxu0 0.0
    %1599 = vmatprep.subr.mxu0 0.0
    %1600 = vmatpush1.msra.mxu0 0.0
    %1601 = vmatprep.subr.mxu0 0.0
    %1602 = vmatpush1.msra.mxu0 0.0
    %1603 = vmatprep.subr.mxu0 0.0
    %1604 = vmatpush1.msra.mxu0 0.0
    %1605 = vmatprep.subr.mxu0 0.0
    %1606 = vmatpush1.msra.mxu0 0.0
    %1607 = vmatprep.subr.mxu0 0.0
    %1608 = vmatpush1.msra.mxu0 0.0
    %1609 = vmatprep.subr.mxu0 0.0
    %1610 = vmatpush1.msra.mxu0 0.0
    %1611 = vmatprep.subr.mxu0 0.0
    %1612 = vmatpush1.msra.mxu0 0.0
    %1613 = vmatprep.subr.mxu0 0.0
    %1614 = vmatpush1.msra.mxu0 0.0
    %1615 = vmatprep.subr.mxu0 0.0
    %1616 = vmatpush1.msra.mxu0 0.0
    %1617 = vmatprep.subr.mxu0 0.0
    %1618 = vmatpush1.msra.mxu0 0.0
    %1619 = vmatprep.subr.mxu0 0.0
    %1620 = vmatpush1.msra.mxu0 0.0
    %1621 = vmatprep.subr.mxu0 0.0
    %1622 = vmatpush1.msra.mxu0 0.0
    %1623 = vmatprep.subr.mxu0 0.0
    %1624 = vmatpush1.msra.mxu0 0.0
    %1625 = vmatprep.subr.mxu0 0.0
    %1626 = vmatpush1.msra.mxu0 0.0
    %1627 = vmatprep.subr.mxu0 0.0
    %1628 = vmatpush1.msra.mxu0 0.0
    %1629 = vmatprep.subr.mxu0 0.0
    %1630 = vmatpush1.msra.mxu0 0.0
    %1631 = vmatprep.subr.mxu0 0.0
    %1632 = vmatpush1.msra.mxu0 0.0
    %1633 = vmatprep.subr.mxu0 0.0
    %1634 = vmatpush1.msra.mxu0 0.0
    %1635 = vmatprep.subr.mxu0 0.0
    %1636 = vmatpush1.msra.mxu0 0.0
    %1637 = vmatprep.mubr.f32.mxu0 0.0
    %1638 = vmatmul.mubr.f32.gmra.mrb[0].mxu0 %v258
    %v1639 = vpop.f32.mrb[0].mxu0
    %v1640 = vadd.f32 0.0, %v1639
    %v1641 = vpop.f32.mrb[0].mxu0
    %v1642 = vadd.f32 0.0, %v1641
    %1643 = vdwg.mxu0
    %v1644 = vld [vmem:[#allocation2] sm:$0xff]
    %v1645 = vadd.f32 %v1644, %v1640
    %v1646 = vld [vmem:[%s333 + $0x8] sm:$0xff]
    %v1647 = vadd.f32 %v1646, %v1642
    %v1648 = vxor.u32 %v1645, 2147483648
    %v1649 = vmul.f32 %v1648, 1.442695
    %v1650 = vpow.pop %v1649
    %v1651 = vadd.f32 %v1650, 1.0
    %v1652 = vrcp.pop %v1651
    %v1653 = vmul.f32 1.0, %v1652
    %v1654 = vtanh.pop %v1645
    %v1655 = vmul.f32 %v1653, 0.0
    %1657 = vrot.lane.b32.xlu0 %v1654, 64
    %v1658 = vpop.permute.xlu0 %1657
    %v1660 = vmul.f32 %v1653, %v1658
    %1662 = vrot.lane.b32.xlu0 %v1660, 32
    %v1663 = vpop.permute.xlu0 %1662
    %v1665 = vadd.f32 %v1655, %v1663
    %v1666 = vtanh.pop %v1665
    %1668 = vrot.lane.b32.xlu0 %v1666, 64
    %v1669 = vpop.permute.xlu0 %1668
    %v1671 = vmul.f32 %v1653, %v1669
    %v1672 = vxor.u32 %v1647, 2147483648
    %v1673 = vmul.f32 %v1672, 1.442695
    %v1674 = vpow.pop %v1673
    %v1675 = vadd.f32 %v1674, 1.0
    %v1676 = vrcp.pop %v1675
    %v1677 = vmul.f32 1.0, %v1676
    %v1678 = vtanh.pop %v1647
    %v1679 = vmul.f32 %v1677, 0.0
    %1681 = vrot.lane.b32.xlu0 %v1678, 64
    %v1682 = vpop.permute.xlu0 %1681
    %v1684 = vmul.f32 %v1677, %v1682
    %1686 = vrot.lane.b32.xlu0 %v1684, 32
    %v1687 = vpop.permute.xlu0 %1686
    %v1689 = vadd.f32 %v1679, %v1687
    %v1690 = vtanh.pop %v1689
    %1692 = vrot.lane.b32.xlu0 %v1690, 64
    %v1693 = vpop.permute.xlu0 %1692
    %v1695 = vmul.f32 %v1677, %v1693
    %1697 = vrot.lane.b32.xlu0 %v1671, 32
    %v1698 = vpop.permute.xlu0 %1697
    %1701 = vrot.lane.b32.xlu0 %v1695, 64
    %v1702 = vpop.permute.xlu0 %1701
    %v1704 = vsel %vm392, %v1698, %v1702
    %v1706 = vsel %vm256, %v1704, 0
    %1708 = vmatprep.subr.mxu0 %v1558
    %1709 = vmatpush1.msra.mxu0 %v1557
    %1710 = vmatprep.subr.mxu0 %v1560
    %1711 = vmatpush1.msra.mxu0 %v1559
    %1712 = vmatprep.subr.mxu0 %v1562
    %1713 = vmatpush1.msra.mxu0 %v1561
    %1714 = vmatprep.subr.mxu0 %v1564
    %1715 = vmatpush1.msra.mxu0 %v1563
    %1716 = vmatprep.subr.mxu0 %v1566
    %1717 = vmatpush1.msra.mxu0 %v1565
    %1718 = vmatprep.subr.mxu0 %v1568
    %1719 = vmatpush1.msra.mxu0 %v1567
    %1720 = vmatprep.subr.mxu0 %v1570
    %1721 = vmatpush1.msra.mxu0 %v1569
    %1722 = vmatprep.subr.mxu0 %v1572
    %1723 = vmatpush1.msra.mxu0 %v1571
    %1724 = vmatprep.subr.mxu0 0.0
    %1725 = vmatpush1.msra.mxu0 0.0
    %1726 = vmatprep.subr.mxu0 0.0
    %1727 = vmatpush1.msra.mxu0 0.0
    %1728 = vmatprep.subr.mxu0 0.0
    %1729 = vmatpush1.msra.mxu0 0.0
    %1730 = vmatprep.subr.mxu0 0.0
    %1731 = vmatpush1.msra.mxu0 0.0
    %1732 = vmatprep.subr.mxu0 0.0
    %1733 = vmatpush1.msra.mxu0 0.0
    %1734 = vmatprep.subr.mxu0 0.0
    %1735 = vmatpush1.msra.mxu0 0.0
    %1736 = vmatprep.subr.mxu0 0.0
    %1737 = vmatpush1.msra.mxu0 0.0
    %1738 = vmatprep.subr.mxu0 0.0
    %1739 = vmatpush1.msra.mxu0 0.0
    %1740 = vmatprep.subr.mxu0 0.0
    %1741 = vmatpush1.msra.mxu0 0.0
    %1742 = vmatprep.subr.mxu0 0.0
    %1743 = vmatpush1.msra.mxu0 0.0
    %1744 = vmatprep.subr.mxu0 0.0
    %1745 = vmatpush1.msra.mxu0 0.0
    %1746 = vmatprep.subr.mxu0 0.0
    %1747 = vmatpush1.msra.mxu0 0.0
    %1748 = vmatprep.subr.mxu0 0.0
    %1749 = vmatpush1.msra.mxu0 0.0
    %1750 = vmatprep.subr.mxu0 0.0
    %1751 = vmatpush1.msra.mxu0 0.0
    %1752 = vmatprep.subr.mxu0 0.0
    %1753 = vmatpush1.msra.mxu0 0.0
    %1754 = vmatprep.subr.mxu0 0.0
    %1755 = vmatpush1.msra.mxu0 0.0
    %1756 = vmatprep.subr.mxu0 0.0
    %1757 = vmatpush1.msra.mxu0 0.0
    %1758 = vmatprep.subr.mxu0 0.0
    %1759 = vmatpush1.msra.mxu0 0.0
    %1760 = vmatprep.subr.mxu0 0.0
    %1761 = vmatpush1.msra.mxu0 0.0
    %1762 = vmatprep.subr.mxu0 0.0
    %1763 = vmatpush1.msra.mxu0 0.0
    %1764 = vmatprep.subr.mxu0 0.0
    %1765 = vmatpush1.msra.mxu0 0.0
    %1766 = vmatprep.subr.mxu0 0.0
    %1767 = vmatpush1.msra.mxu0 0.0
    %1768 = vmatprep.subr.mxu0 0.0
    %1769 = vmatpush1.msra.mxu0 0.0
    %1770 = vmatprep.subr.mxu0 0.0
    %1771 = vmatpush1.msra.mxu0 0.0
    %1772 = vmatprep.mubr.f32.mxu0 0.0
    %1773 = vmatmul.mubr.f32.gmra.mrb[0].mxu0 %v1706
    %v1774 = vpop.f32.mrb[0].mxu0
    %v1775 = vadd.f32 0.0, %v1774
    %v1776 = vpop.f32.mrb[0].mxu0
    %v1777 = vadd.f32 0.0, %v1776
    %1778 = vdwg.mxu0
    %v1779 = vld [vmem:[%s472] sm:$0xff]
    %v1780 = vadd.f32 %v1779, %v1775
    %v1781 = vld [vmem:[%s475 + $0x8] sm:$0xff]
    %v1782 = vadd.f32 %v1781, %v1777
    %v1783 = vxor.u32 %v1780, 2147483648
    %v1784 = vmul.f32 %v1783, 1.442695
    %v1785 = vpow.pop %v1784
    %v1786 = vadd.f32 %v1785, 1.0
    %v1787 = vrcp.pop %v1786
    %v1788 = vmul.f32 1.0, %v1787
    %v1789 = vtanh.pop %v1780
    %v1790 = vmul.f32 %v1788, %v1665
    %1792 = vrot.lane.b32.xlu0 %v1789, 64
    %v1793 = vpop.permute.xlu0 %1792
    %v1795 = vmul.f32 %v1788, %v1793
    %1797 = vrot.lane.b32.xlu0 %v1795, 32
    %v1798 = vpop.permute.xlu0 %1797
    %v1800 = vadd.f32 %v1790, %v1798
    %v1801 = vtanh.pop %v1800
    %1803 = vrot.lane.b32.xlu0 %v1801, 64
    %v1804 = vpop.permute.xlu0 %1803
    %v1806 = vmul.f32 %v1788, %v1804
    %v1807 = vxor.u32 %v1782, 2147483648
    %v1808 = vmul.f32 %v1807, 1.442695
    %v1809 = vpow.pop %v1808
    %v1810 = vadd.f32 %v1809, 1.0
    %v1811 = vrcp.pop %v1810
    %v1812 = vmul.f32 1.0, %v1811
    %v1813 = vtanh.pop %v1782
    %v1814 = vmul.f32 %v1812, %v1689
    %1816 = vrot.lane.b32.xlu0 %v1813, 64
    %v1817 = vpop.permute.xlu0 %1816
    %v1819 = vmul.f32 %v1812, %v1817
    %1821 = vrot.lane.b32.xlu0 %v1819, 32
    %v1822 = vpop.permute.xlu0 %1821
    %v1824 = vadd.f32 %v1814, %v1822
    %v1825 = vtanh.pop %v1824
    %1827 = vrot.lane.b32.xlu0 %v1825, 64
    %v1828 = vpop.permute.xlu0 %1827
    %v1830 = vmul.f32 %v1812, %v1828
    %1832 = vrot.lane.b32.xlu0 %v1806, 32
    %v1833 = vpop.permute.xlu0 %1832
    %1836 = vrot.lane.b32.xlu0 %v1830, 64
    %v1837 = vpop.permute.xlu0 %1836
    %v1839 = vsel %vm392, %v1833, %v1837
    %v1841 = vsel %vm256, %v1839, 0
    %1843 = vmatprep.subr.mxu0 %v1558
    %1844 = vmatpush1.msra.mxu0 %v1557
    %1845 = vmatprep.subr.mxu0 %v1560
    %1846 = vmatpush1.msra.mxu0 %v1559
    %1847 = vmatprep.subr.mxu0 %v1562
    %1848 = vmatpush1.msra.mxu0 %v1561
    %1849 = vmatprep.subr.mxu0 %v1564
    %1850 = vmatpush1.msra.mxu0 %v1563
    %1851 = vmatprep.subr.mxu0 %v1566
    %1852 = vmatpush1.msra.mxu0 %v1565
    %1853 = vmatprep.subr.mxu0 %v1568
    %1854 = vmatpush1.msra.mxu0 %v1567
    %1855 = vmatprep.subr.mxu0 %v1570
    %1856 = vmatpush1.msra.mxu0 %v1569
    %1857 = vmatprep.subr.mxu0 %v1572
    %1858 = vmatpush1.msra.mxu0 %v1571
    %1859 = vmatprep.subr.mxu0 0.0
    %1860 = vmatpush1.msra.mxu0 0.0
    %1861 = vmatprep.subr.mxu0 0.0
    %1862 = vmatpush1.msra.mxu0 0.0
    %1863 = vmatprep.subr.mxu0 0.0
    %1864 = vmatpush1.msra.mxu0 0.0
    %1865 = vmatprep.subr.mxu0 0.0
    %1866 = vmatpush1.msra.mxu0 0.0
    %1867 = vmatprep.subr.mxu0 0.0
    %1868 = vmatpush1.msra.mxu0 0.0
    %1869 = vmatprep.subr.mxu0 0.0
    %1870 = vmatpush1.msra.mxu0 0.0
    %1871 = vmatprep.subr.mxu0 0.0
    %1872 = vmatpush1.msra.mxu0 0.0
    %1873 = vmatprep.subr.mxu0 0.0
    %1874 = vmatpush1.msra.mxu0 0.0
    %1875 = vmatprep.subr.mxu0 0.0
    %1876 = vmatpush1.msra.mxu0 0.0
    %1877 = vmatprep.subr.mxu0 0.0
    %1878 = vmatpush1.msra.mxu0 0.0
    %1879 = vmatprep.subr.mxu0 0.0
    %1880 = vmatpush1.msra.mxu0 0.0
    %1881 = vmatprep.subr.mxu0 0.0
    %1882 = vmatpush1.msra.mxu0 0.0
    %1883 = vmatprep.subr.mxu0 0.0
    %1884 = vmatpush1.msra.mxu0 0.0
    %1885 = vmatprep.subr.mxu0 0.0
    %1886 = vmatpush1.msra.mxu0 0.0
    %1887 = vmatprep.subr.mxu0 0.0
    %1888 = vmatpush1.msra.mxu0 0.0
    %1889 = vmatprep.subr.mxu0 0.0
    %1890 = vmatpush1.msra.mxu0 0.0
    %1891 = vmatprep.subr.mxu0 0.0
    %1892 = vmatpush1.msra.mxu0 0.0
    %1893 = vmatprep.subr.mxu0 0.0
    %1894 = vmatpush1.msra.mxu0 0.0
    %1895 = vmatprep.subr.mxu0 0.0
    %1896 = vmatpush1.msra.mxu0 0.0
    %1897 = vmatprep.subr.mxu0 0.0
    %1898 = vmatpush1.msra.mxu0 0.0
    %1899 = vmatprep.subr.mxu0 0.0
    %1900 = vmatpush1.msra.mxu0 0.0
    %1901 = vmatprep.subr.mxu0 0.0
    %1902 = vmatpush1.msra.mxu0 0.0
    %1903 = vmatprep.subr.mxu0 0.0
    %1904 = vmatpush1.msra.mxu0 0.0
    %1905 = vmatprep.subr.mxu0 0.0
    %1906 = vmatpush1.msra.mxu0 0.0
    %1907 = vmatprep.mubr.f32.mxu0 0.0
    %1908 = vmatmul.mubr.f32.gmra.mrb[0].mxu0 %v1841
    %v1909 = vpop.f32.mrb[0].mxu0
    %v1910 = vadd.f32 0.0, %v1909
    %v1911 = vpop.f32.mrb[0].mxu0
    %v1912 = vadd.f32 0.0, %v1911
    %1913 = vdwg.mxu0
    %v1914 = vld [vmem:[%s613] sm:$0xff]
    %v1915 = vadd.f32 %v1914, %v1910
    %v1916 = vld [vmem:[%s616 + $0x8] sm:$0xff]
    %v1917 = vadd.f32 %v1916, %v1912
    %v1918 = vxor.u32 %v1915, 2147483648
    %v1919 = vmul.f32 %v1918, 1.442695
    %v1920 = vpow.pop %v1919
    %v1921 = vadd.f32 %v1920, 1.0
    %v1922 = vrcp.pop %v1921
    %v1923 = vmul.f32 1.0, %v1922
    %v1924 = vtanh.pop %v1915
    %v1925 = vmul.f32 %v1923, %v1800
    %1927 = vrot.lane.b32.xlu0 %v1924, 64
    %v1928 = vpop.permute.xlu0 %1927
    %v1930 = vmul.f32 %v1923, %v1928
    %1932 = vrot.lane.b32.xlu0 %v1930, 32
    %v1933 = vpop.permute.xlu0 %1932
    %v1935 = vadd.f32 %v1925, %v1933
    %v1936 = vtanh.pop %v1935
    %1938 = vrot.lane.b32.xlu0 %v1936, 64
    %v1939 = vpop.permute.xlu0 %1938
    %v1941 = vmul.f32 %v1923, %v1939
    %v1942 = vxor.u32 %v1917, 2147483648
    %v1943 = vmul.f32 %v1942, 1.442695
    %v1944 = vpow.pop %v1943
    %v1945 = vadd.f32 %v1944, 1.0
    %v1946 = vrcp.pop %v1945
    %v1947 = vmul.f32 1.0, %v1946
    %v1948 = vtanh.pop %v1917
    %v1949 = vmul.f32 %v1947, %v1824
    %1951 = vrot.lane.b32.xlu0 %v1948, 64
    %v1952 = vpop.permute.xlu0 %1951
    %v1954 = vmul.f32 %v1947, %v1952
    %1956 = vrot.lane.b32.xlu0 %v1954, 32
    %v1957 = vpop.permute.xlu0 %1956
    %v1959 = vadd.f32 %v1949, %v1957
    %v1960 = vtanh.pop %v1959
    %1962 = vrot.lane.b32.xlu0 %v1960, 64
    %v1963 = vpop.permute.xlu0 %1962
    %v1965 = vmul.f32 %v1947, %v1963
    %1967 = vrot.lane.b32.xlu0 %v1941, 32
    %v1968 = vpop.permute.xlu0 %1967
    %1971 = vrot.lane.b32.xlu0 %v1965, 64
    %v1972 = vpop.permute.xlu0 %1971
    %v1974 = vsel %vm392, %v1968, %v1972
    %v1976 = vsel %vm256, %v1974, 0
    %1978 = vmatprep.subr.mxu0 %v1558
    %1979 = vmatpush1.msra.mxu0 %v1557
    %1980 = vmatprep.subr.mxu0 %v1560
    %1981 = vmatpush1.msra.mxu0 %v1559
    %1982 = vmatprep.subr.mxu0 %v1562
    %1983 = vmatpush1.msra.mxu0 %v1561
    %1984 = vmatprep.subr.mxu0 %v1564
    %1985 = vmatpush1.msra.mxu0 %v1563
    %1986 = vmatprep.subr.mxu0 %v1566
    %1987 = vmatpush1.msra.mxu0 %v1565
    %1988 = vmatprep.subr.mxu0 %v1568
    %1989 = vmatpush1.msra.mxu0 %v1567
    %1990 = vmatprep.subr.mxu0 %v1570
    %1991 = vmatpush1.msra.mxu0 %v1569
    %1992 = vmatprep.subr.mxu0 %v1572
    %1993 = vmatpush1.msra.mxu0 %v1571
    %1994 = vmatprep.subr.mxu0 0.0
    %1995 = vmatpush1.msra.mxu0 0.0
    %1996 = vmatprep.subr.mxu0 0.0
    %1997 = vmatpush1.msra.mxu0 0.0
    %1998 = vmatprep.subr.mxu0 0.0
    %1999 = vmatpush1.msra.mxu0 0.0
    %2000 = vmatprep.subr.mxu0 0.0
    %2001 = vmatpush1.msra.mxu0 0.0
    %2002 = vmatprep.subr.mxu0 0.0
    %2003 = vmatpush1.msra.mxu0 0.0
    %2004 = vmatprep.subr.mxu0 0.0
    %2005 = vmatpush1.msra.mxu0 0.0
    %2006 = vmatprep.subr.mxu0 0.0
    %2007 = vmatpush1.msra.mxu0 0.0
    %2008 = vmatprep.subr.mxu0 0.0
    %2009 = vmatpush1.msra.mxu0 0.0
    %2010 = vmatprep.subr.mxu0 0.0
    %2011 = vmatpush1.msra.mxu0 0.0
    %2012 = vmatprep.subr.mxu0 0.0
    %2013 = vmatpush1.msra.mxu0 0.0
    %2014 = vmatprep.subr.mxu0 0.0
    %2015 = vmatpush1.msra.mxu0 0.0
    %2016 = vmatprep.subr.mxu0 0.0
    %2017 = vmatpush1.msra.mxu0 0.0
    %2018 = vmatprep.subr.mxu0 0.0
    %2019 = vmatpush1.msra.mxu0 0.0
    %2020 = vmatprep.subr.mxu0 0.0
    %2021 = vmatpush1.msra.mxu0 0.0
    %2022 = vmatprep.subr.mxu0 0.0
    %2023 = vmatpush1.msra.mxu0 0.0
    %2024 = vmatprep.subr.mxu0 0.0
    %2025 = vmatpush1.msra.mxu0 0.0
    %2026 = vmatprep.subr.mxu0 0.0
    %2027 = vmatpush1.msra.mxu0 0.0
    %2028 = vmatprep.subr.mxu0 0.0
    %2029 = vmatpush1.msra.mxu0 0.0
    %2030 = vmatprep.subr.mxu0 0.0
    %2031 = vmatpush1.msra.mxu0 0.0
    %2032 = vmatprep.subr.mxu0 0.0
    %2033 = vmatpush1.msra.mxu0 0.0
    %2034 = vmatprep.subr.mxu0 0.0
    %2035 = vmatpush1.msra.mxu0 0.0
    %2036 = vmatprep.subr.mxu0 0.0
    %2037 = vmatpush1.msra.mxu0 0.0
    %2038 = vmatprep.subr.mxu0 0.0
    %2039 = vmatpush1.msra.mxu0 0.0
    %2040 = vmatprep.subr.mxu0 0.0
    %2041 = vmatpush1.msra.mxu0 0.0
    %2042 = vmatprep.mubr.f32.mxu0 0.0
    %2043 = vmatmul.mubr.f32.gmra.mrb[0].mxu0 %v1976
    %v2044 = vpop.f32.mrb[0].mxu0
    %v2045 = vadd.f32 0.0, %v2044
    %v2046 = vpop.f32.mrb[0].mxu0
    %v2047 = vadd.f32 0.0, %v2046
    %2048 = vdwg.mxu0
    %v2049 = vld [vmem:[%s754] sm:$0xff]
    %v2050 = vadd.f32 %v2049, %v2045
    %v2051 = vld [vmem:[%s757 + $0x8] sm:$0xff]
    %v2052 = vadd.f32 %v2051, %v2047
    %v2053 = vxor.u32 %v2050, 2147483648
    %v2054 = vmul.f32 %v2053, 1.442695
    %v2055 = vpow.pop %v2054
    %v2056 = vadd.f32 %v2055, 1.0
    %v2057 = vrcp.pop %v2056
    %v2058 = vmul.f32 1.0, %v2057
    %v2059 = vtanh.pop %v2050
    %v2060 = vmul.f32 %v2058, %v1935
    %2062 = vrot.lane.b32.xlu0 %v2059, 64
    %v2063 = vpop.permute.xlu0 %2062
    %v2065 = vmul.f32 %v2058, %v2063
    %2067 = vrot.lane.b32.xlu0 %v2065, 32
    %v2068 = vpop.permute.xlu0 %2067
    %v2070 = vadd.f32 %v2060, %v2068
    %v2071 = vtanh.pop %v2070
    %2073 = vrot.lane.b32.xlu0 %v2071, 64
    %v2074 = vpop.permute.xlu0 %2073
    %v2076 = vmul.f32 %v2058, %v2074
    %v2077 = vxor.u32 %v2052, 2147483648
    %v2078 = vmul.f32 %v2077, 1.442695
    %v2079 = vpow.pop %v2078
    %v2080 = vadd.f32 %v2079, 1.0
    %v2081 = vrcp.pop %v2080
    %v2082 = vmul.f32 1.0, %v2081
    %v2083 = vtanh.pop %v2052
    %v2084 = vmul.f32 %v2082, %v1959
    %2086 = vrot.lane.b32.xlu0 %v2083, 64
    %v2087 = vpop.permute.xlu0 %2086
    %v2089 = vmul.f32 %v2082, %v2087
    %2091 = vrot.lane.b32.xlu0 %v2089, 32
    %v2092 = vpop.permute.xlu0 %2091
    %v2094 = vadd.f32 %v2084, %v2092
    %v2095 = vtanh.pop %v2094
    %2097 = vrot.lane.b32.xlu0 %v2095, 64
    %v2098 = vpop.permute.xlu0 %2097
    %v2100 = vmul.f32 %v2082, %v2098
    %2102 = vrot.lane.b32.xlu0 %v2076, 32
    %v2103 = vpop.permute.xlu0 %2102
    %2106 = vrot.lane.b32.xlu0 %v2100, 64
    %v2107 = vpop.permute.xlu0 %2106
    %v2109 = vsel %vm392, %v2103, %v2107
    %v2111 = vsel %vm256, %v2109, 0
    %2113 = vmatprep.subr.mxu0 %v1558
    %2114 = vmatpush1.msra.mxu0 %v1557
    %2115 = vmatprep.subr.mxu0 %v1560
    %2116 = vmatpush1.msra.mxu0 %v1559
    %2117 = vmatprep.subr.mxu0 %v1562
    %2118 = vmatpush1.msra.mxu0 %v1561
    %2119 = vmatprep.subr.mxu0 %v1564
    %2120 = vmatpush1.msra.mxu0 %v1563
    %2121 = vmatprep.subr.mxu0 %v1566
    %2122 = vmatpush1.msra.mxu0 %v1565
    %2123 = vmatprep.subr.mxu0 %v1568
    %2124 = vmatpush1.msra.mxu0 %v1567
    %2125 = vmatprep.subr.mxu0 %v1570
    %2126 = vmatpush1.msra.mxu0 %v1569
    %2127 = vmatprep.subr.mxu0 %v1572
    %2128 = vmatpush1.msra.mxu0 %v1571
    %2129 = vmatprep.subr.mxu0 0.0
    %2130 = vmatpush1.msra.mxu0 0.0
    %2131 = vmatprep.subr.mxu0 0.0
    %2132 = vmatpush1.msra.mxu0 0.0
    %2133 = vmatprep.subr.mxu0 0.0
    %2134 = vmatpush1.msra.mxu0 0.0
    %2135 = vmatprep.subr.mxu0 0.0
    %2136 = vmatpush1.msra.mxu0 0.0
    %2137 = vmatprep.subr.mxu0 0.0
    %2138 = vmatpush1.msra.mxu0 0.0
    %2139 = vmatprep.subr.mxu0 0.0
    %2140 = vmatpush1.msra.mxu0 0.0
    %2141 = vmatprep.subr.mxu0 0.0
    %2142 = vmatpush1.msra.mxu0 0.0
    %2143 = vmatprep.subr.mxu0 0.0
    %2144 = vmatpush1.msra.mxu0 0.0
    %2145 = vmatprep.subr.mxu0 0.0
    %2146 = vmatpush1.msra.mxu0 0.0
    %2147 = vmatprep.subr.mxu0 0.0
    %2148 = vmatpush1.msra.mxu0 0.0
    %2149 = vmatprep.subr.mxu0 0.0
    %2150 = vmatpush1.msra.mxu0 0.0
    %2151 = vmatprep.subr.mxu0 0.0
    %2152 = vmatpush1.msra.mxu0 0.0
    %2153 = vmatprep.subr.mxu0 0.0
    %2154 = vmatpush1.msra.mxu0 0.0
    %2155 = vmatprep.subr.mxu0 0.0
    %2156 = vmatpush1.msra.mxu0 0.0
    %2157 = vmatprep.subr.mxu0 0.0
    %2158 = vmatpush1.msra.mxu0 0.0
    %2159 = vmatprep.subr.mxu0 0.0
    %2160 = vmatpush1.msra.mxu0 0.0
    %2161 = vmatprep.subr.mxu0 0.0
    %2162 = vmatpush1.msra.mxu0 0.0
    %2163 = vmatprep.subr.mxu0 0.0
    %2164 = vmatpush1.msra.mxu0 0.0
    %2165 = vmatprep.subr.mxu0 0.0
    %2166 = vmatpush1.msra.mxu0 0.0
    %2167 = vmatprep.subr.mxu0 0.0
    %2168 = vmatpush1.msra.mxu0 0.0
    %2169 = vmatprep.subr.mxu0 0.0
    %2170 = vmatpush1.msra.mxu0 0.0
    %2171 = vmatprep.subr.mxu0 0.0
    %2172 = vmatpush1.msra.mxu0 0.0
    %2173 = vmatprep.subr.mxu0 0.0
    %2174 = vmatpush1.msra.mxu0 0.0
    %2175 = vmatprep.subr.mxu0 0.0
    %2176 = vmatpush1.msra.mxu0 0.0
    %2177 = vmatprep.mubr.f32.mxu0 0.0
    %2178 = vmatmul.mubr.f32.gmra.mrb[0].mxu0 %v2111
    %v2179 = vpop.f32.mrb[0].mxu0
    %v2180 = vadd.f32 0.0, %v2179
    %v2181 = vpop.f32.mrb[0].mxu0
    %v2182 = vadd.f32 0.0, %v2181
    %2183 = vdwg.mxu0
    %v2184 = vld [vmem:[%s757] sm:$0xff]
    %v2185 = vadd.f32 %v2184, %v2180
    %v2186 = vld [vmem:[%s754 + $0x8] sm:$0xff]
    %v2187 = vadd.f32 %v2186, %v2182
    %v2188 = vxor.u32 %v2185, 2147483648
    %v2189 = vmul.f32 %v2188, 1.442695
    %v2190 = vpow.pop %v2189
    %v2191 = vadd.f32 %v2190, 1.0
    %v2192 = vrcp.pop %v2191
    %v2193 = vmul.f32 1.0, %v2192
    %v2194 = vtanh.pop %v2185
    %v2195 = vmul.f32 %v2193, %v2070
    %2197 = vrot.lane.b32.xlu0 %v2194, 64
    %v2198 = vpop.permute.xlu0 %2197
    %v2200 = vmul.f32 %v2193, %v2198
    %2202 = vrot.lane.b32.xlu0 %v2200, 32
    %v2203 = vpop.permute.xlu0 %2202
    %v2205 = vadd.f32 %v2195, %v2203
    %v2206 = vtanh.pop %v2205
    %2208 = vrot.lane.b32.xlu0 %v2206, 64
    %v2209 = vpop.permute.xlu0 %2208
    %v2211 = vmul.f32 %v2193, %v2209
    %v2212 = vxor.u32 %v2187, 2147483648
    %v2213 = vmul.f32 %v2212, 1.442695
    %v2214 = vpow.pop %v2213
    %v2215 = vadd.f32 %v2214, 1.0
    %v2216 = vrcp.pop %v2215
    %v2217 = vmul.f32 1.0, %v2216
    %v2218 = vtanh.pop %v2187
    %v2219 = vmul.f32 %v2217, %v2094
    %2221 = vrot.lane.b32.xlu0 %v2218, 64
    %v2222 = vpop.permute.xlu0 %2221
    %v2224 = vmul.f32 %v2217, %v2222
    %2226 = vrot.lane.b32.xlu0 %v2224, 32
    %v2227 = vpop.permute.xlu0 %2226
    %v2229 = vadd.f32 %v2219, %v2227
    %v2230 = vtanh.pop %v2229
    %2232 = vrot.lane.b32.xlu0 %v2230, 64
    %v2233 = vpop.permute.xlu0 %2232
    %v2235 = vmul.f32 %v2217, %v2233
    %2237 = vrot.lane.b32.xlu0 %v2211, 32
    %v2238 = vpop.permute.xlu0 %2237
    %2241 = vrot.lane.b32.xlu0 %v2235, 64
    %v2242 = vpop.permute.xlu0 %2241
    %v2244 = vsel %vm392, %v2238, %v2242
    %v2246 = vsel %vm256, %v2244, 0
    %2248 = vmatprep.subr.mxu0 %v1558
    %2249 = vmatpush1.msra.mxu0 %v1557
    %2250 = vmatprep.subr.mxu0 %v1560
    %2251 = vmatpush1.msra.mxu0 %v1559
    %2252 = vmatprep.subr.mxu0 %v1562
    %2253 = vmatpush1.msra.mxu0 %v1561
    %2254 = vmatprep.subr.mxu0 %v1564
    %2255 = vmatpush1.msra.mxu0 %v1563
    %2256 = vmatprep.subr.mxu0 %v1566
    %2257 = vmatpush1.msra.mxu0 %v1565
    %2258 = vmatprep.subr.mxu0 %v1568
    %2259 = vmatpush1.msra.mxu0 %v1567
    %2260 = vmatprep.subr.mxu0 %v1570
    %2261 = vmatpush1.msra.mxu0 %v1569
    %2262 = vmatprep.subr.mxu0 %v1572
    %2263 = vmatpush1.msra.mxu0 %v1571
    %2264 = vmatprep.subr.mxu0 0.0
    %2265 = vmatpush1.msra.mxu0 0.0
    %2266 = vmatprep.subr.mxu0 0.0
    %2267 = vmatpush1.msra.mxu0 0.0
    %2268 = vmatprep.subr.mxu0 0.0
    %2269 = vmatpush1.msra.mxu0 0.0
    %2270 = vmatprep.subr.mxu0 0.0
    %2271 = vmatpush1.msra.mxu0 0.0
    %2272 = vmatprep.subr.mxu0 0.0
    %2273 = vmatpush1.msra.mxu0 0.0
    %2274 = vmatprep.subr.mxu0 0.0
    %2275 = vmatpush1.msra.mxu0 0.0
    %2276 = vmatprep.subr.mxu0 0.0
    %2277 = vmatpush1.msra.mxu0 0.0
    %2278 = vmatprep.subr.mxu0 0.0
    %2279 = vmatpush1.msra.mxu0 0.0
    %2280 = vmatprep.subr.mxu0 0.0
    %2281 = vmatpush1.msra.mxu0 0.0
    %2282 = vmatprep.subr.mxu0 0.0
    %2283 = vmatpush1.msra.mxu0 0.0
    %2284 = vmatprep.subr.mxu0 0.0
    %2285 = vmatpush1.msra.mxu0 0.0
    %2286 = vmatprep.subr.mxu0 0.0
    %2287 = vmatpush1.msra.mxu0 0.0
    %2288 = vmatprep.subr.mxu0 0.0
    %2289 = vmatpush1.msra.mxu0 0.0
    %2290 = vmatprep.subr.mxu0 0.0
    %2291 = vmatpush1.msra.mxu0 0.0
    %2292 = vmatprep.subr.mxu0 0.0
    %2293 = vmatpush1.msra.mxu0 0.0
    %2294 = vmatprep.subr.mxu0 0.0
    %2295 = vmatpush1.msra.mxu0 0.0
    %2296 = vmatprep.subr.mxu0 0.0
    %2297 = vmatpush1.msra.mxu0 0.0
    %2298 = vmatprep.subr.mxu0 0.0
    %2299 = vmatpush1.msra.mxu0 0.0
    %2300 = vmatprep.subr.mxu0 0.0
    %2301 = vmatpush1.msra.mxu0 0.0
    %2302 = vmatprep.subr.mxu0 0.0
    %2303 = vmatpush1.msra.mxu0 0.0
    %2304 = vmatprep.subr.mxu0 0.0
    %2305 = vmatpush1.msra.mxu0 0.0
    %2306 = vmatprep.subr.mxu0 0.0
    %2307 = vmatpush1.msra.mxu0 0.0
    %2308 = vmatprep.subr.mxu0 0.0
    %2309 = vmatpush1.msra.mxu0 0.0
    %2310 = vmatprep.subr.mxu0 0.0
    %2311 = vmatpush1.msra.mxu0 0.0
    %2312 = vmatprep.mubr.f32.mxu0 0.0
    %2313 = vmatmul.mubr.f32.gmra.mrb[0].mxu0 %v2246
    %v2314 = vpop.f32.mrb[0].mxu0
    %v2315 = vadd.f32 0.0, %v2314
    %v2316 = vpop.f32.mrb[0].mxu0
    %v2317 = vadd.f32 0.0, %v2316
    %2318 = vdwg.mxu0
    %v2319 = vld [vmem:[%s616] sm:$0xff]
    %v2320 = vadd.f32 %v2319, %v2315
    %v2321 = vld [vmem:[%s613 + $0x8] sm:$0xff]
    %v2322 = vadd.f32 %v2321, %v2317
    %v2323 = vxor.u32 %v2320, 2147483648
    %v2324 = vmul.f32 %v2323, 1.442695
    %v2325 = vpow.pop %v2324
    %v2326 = vadd.f32 %v2325, 1.0
    %v2327 = vrcp.pop %v2326
    %v2328 = vmul.f32 1.0, %v2327
    %v2329 = vtanh.pop %v2320
    %v2330 = vmul.f32 %v2328, %v2205
    %2332 = vrot.lane.b32.xlu0 %v2329, 64
    %v2333 = vpop.permute.xlu0 %2332
    %v2335 = vmul.f32 %v2328, %v2333
    %2337 = vrot.lane.b32.xlu0 %v2335, 32
    %v2338 = vpop.permute.xlu0 %2337
    %v2340 = vadd.f32 %v2330, %v2338
    %v2341 = vtanh.pop %v2340
    %2343 = vrot.lane.b32.xlu0 %v2341, 64
    %v2344 = vpop.permute.xlu0 %2343
    %v2346 = vmul.f32 %v2328, %v2344
    %v2347 = vxor.u32 %v2322, 2147483648
    %v2348 = vmul.f32 %v2347, 1.442695
    %v2349 = vpow.pop %v2348
    %v2350 = vadd.f32 %v2349, 1.0
    %v2351 = vrcp.pop %v2350
    %v2352 = vmul.f32 1.0, %v2351
    %v2353 = vtanh.pop %v2322
    %v2354 = vmul.f32 %v2352, %v2229
    %2356 = vrot.lane.b32.xlu0 %v2353, 64
    %v2357 = vpop.permute.xlu0 %2356
    %v2359 = vmul.f32 %v2352, %v2357
    %2361 = vrot.lane.b32.xlu0 %v2359, 32
    %v2362 = vpop.permute.xlu0 %2361
    %v2364 = vadd.f32 %v2354, %v2362
    %v2365 = vtanh.pop %v2364
    %2367 = vrot.lane.b32.xlu0 %v2365, 64
    %v2368 = vpop.permute.xlu0 %2367
    %v2370 = vmul.f32 %v2352, %v2368
    %2372 = vrot.lane.b32.xlu0 %v2346, 32
    %v2373 = vpop.permute.xlu0 %2372
    %2376 = vrot.lane.b32.xlu0 %v2370, 64
    %v2377 = vpop.permute.xlu0 %2376
    %v2379 = vsel %vm392, %v2373, %v2377
    %v2381 = vsel %vm256, %v2379, 0
    %2383 = vmatprep.subr.mxu0 %v1558
    %2384 = vmatpush1.msra.mxu0 %v1557
    %2385 = vmatprep.subr.mxu0 %v1560
    %2386 = vmatpush1.msra.mxu0 %v1559
    %2387 = vmatprep.subr.mxu0 %v1562
    %2388 = vmatpush1.msra.mxu0 %v1561
    %2389 = vmatprep.subr.mxu0 %v1564
    %2390 = vmatpush1.msra.mxu0 %v1563
    %2391 = vmatprep.subr.mxu0 %v1566
    %2392 = vmatpush1.msra.mxu0 %v1565
    %2393 = vmatprep.subr.mxu0 %v1568
    %2394 = vmatpush1.msra.mxu0 %v1567
    %2395 = vmatprep.subr.mxu0 %v1570
    %2396 = vmatpush1.msra.mxu0 %v1569
    %2397 = vmatprep.subr.mxu0 %v1572
    %2398 = vmatpush1.msra.mxu0 %v1571
    %2399 = vmatprep.subr.mxu0 0.0
    %2400 = vmatpush1.msra.mxu0 0.0
    %2401 = vmatprep.subr.mxu0 0.0
    %2402 = vmatpush1.msra.mxu0 0.0
    %2403 = vmatprep.subr.mxu0 0.0
    %2404 = vmatpush1.msra.mxu0 0.0
    %2405 = vmatprep.subr.mxu0 0.0
    %2406 = vmatpush1.msra.mxu0 0.0
    %2407 = vmatprep.subr.mxu0 0.0
    %2408 = vmatpush1.msra.mxu0 0.0
    %2409 = vmatprep.subr.mxu0 0.0
    %2410 = vmatpush1.msra.mxu0 0.0
    %2411 = vmatprep.subr.mxu0 0.0
    %2412 = vmatpush1.msra.mxu0 0.0
    %2413 = vmatprep.subr.mxu0 0.0
    %2414 = vmatpush1.msra.mxu0 0.0
    %2415 = vmatprep.subr.mxu0 0.0
    %2416 = vmatpush1.msra.mxu0 0.0
    %2417 = vmatprep.subr.mxu0 0.0
    %2418 = vmatpush1.msra.mxu0 0.0
    %2419 = vmatprep.subr.mxu0 0.0
    %2420 = vmatpush1.msra.mxu0 0.0
    %2421 = vmatprep.subr.mxu0 0.0
    %2422 = vmatpush1.msra.mxu0 0.0
    %2423 = vmatprep.subr.mxu0 0.0
    %2424 = vmatpush1.msra.mxu0 0.0
    %2425 = vmatprep.subr.mxu0 0.0
    %2426 = vmatpush1.msra.mxu0 0.0
    %2427 = vmatprep.subr.mxu0 0.0
    %2428 = vmatpush1.msra.mxu0 0.0
    %2429 = vmatprep.subr.mxu0 0.0
    %2430 = vmatpush1.msra.mxu0 0.0
    %2431 = vmatprep.subr.mxu0 0.0
    %2432 = vmatpush1.msra.mxu0 0.0
    %2433 = vmatprep.subr.mxu0 0.0
    %2434 = vmatpush1.msra.mxu0 0.0
    %2435 = vmatprep.subr.mxu0 0.0
    %2436 = vmatpush1.msra.mxu0 0.0
    %2437 = vmatprep.subr.mxu0 0.0
    %2438 = vmatpush1.msra.mxu0 0.0
    %2439 = vmatprep.subr.mxu0 0.0
    %2440 = vmatpush1.msra.mxu0 0.0
    %2441 = vmatprep.subr.mxu0 0.0
    %2442 = vmatpush1.msra.mxu0 0.0
    %2443 = vmatprep.subr.mxu0 0.0
    %2444 = vmatpush1.msra.mxu0 0.0
    %2445 = vmatprep.subr.mxu0 0.0
    %2446 = vmatpush1.msra.mxu0 0.0
    %2447 = vmatprep.mubr.f32.mxu0 0.0
    %2448 = vmatmul.mubr.f32.gmra.mrb[0].mxu0 %v2381
    %v2449 = vpop.f32.mrb[0].mxu0
    %v2450 = vadd.f32 0.0, %v2449
    %v2451 = vpop.f32.mrb[0].mxu0
    %v2452 = vadd.f32 0.0, %v2451
    %2453 = vdwg.mxu0
    %v2454 = vld [vmem:[%s475] sm:$0xff]
    %v2455 = vadd.f32 %v2454, %v2450
    %v2456 = vld [vmem:[%s472 + $0x8] sm:$0xff]
    %v2457 = vadd.f32 %v2456, %v2452
    %v2458 = vxor.u32 %v2455, 2147483648
    %v2459 = vmul.f32 %v2458, 1.442695
    %v2460 = vpow.pop %v2459
    %v2461 = vadd.f32 %v2460, 1.0
    %v2462 = vrcp.pop %v2461
    %v2463 = vmul.f32 1.0, %v2462
    %v2464 = vtanh.pop %v2455
    %v2465 = vmul.f32 %v2463, %v2340
    %2467 = vrot.lane.b32.xlu0 %v2464, 64
    %v2468 = vpop.permute.xlu0 %2467
    %v2470 = vmul.f32 %v2463, %v2468
    %2472 = vrot.lane.b32.xlu0 %v2470, 32
    %v2473 = vpop.permute.xlu0 %2472
    %v2475 = vadd.f32 %v2465, %v2473
    %v2476 = vtanh.pop %v2475
    %2478 = vrot.lane.b32.xlu0 %v2476, 64
    %v2479 = vpop.permute.xlu0 %2478
    %v2481 = vmul.f32 %v2463, %v2479
    %v2482 = vxor.u32 %v2457, 2147483648
    %v2483 = vmul.f32 %v2482, 1.442695
    %v2484 = vpow.pop %v2483
    %v2485 = vadd.f32 %v2484, 1.0
    %v2486 = vrcp.pop %v2485
    %v2487 = vmul.f32 1.0, %v2486
    %v2488 = vtanh.pop %v2457
    %v2489 = vmul.f32 %v2487, %v2364
    %2491 = vrot.lane.b32.xlu0 %v2488, 64
    %v2492 = vpop.permute.xlu0 %2491
    %v2494 = vmul.f32 %v2487, %v2492
    %2496 = vrot.lane.b32.xlu0 %v2494, 32
    %v2497 = vpop.permute.xlu0 %2496
    %v2499 = vadd.f32 %v2489, %v2497
    %v2500 = vtanh.pop %v2499
    %2502 = vrot.lane.b32.xlu0 %v2500, 64
    %v2503 = vpop.permute.xlu0 %2502
    %v2505 = vmul.f32 %v2487, %v2503
    %2507 = vrot.lane.b32.xlu0 %v2481, 32
    %v2508 = vpop.permute.xlu0 %2507
    %2511 = vrot.lane.b32.xlu0 %v2505, 64
    %v2512 = vpop.permute.xlu0 %2511
    %v2514 = vsel %vm392, %v2508, %v2512
    %v2516 = vsel %vm256, %v2514, 0
    %2518 = vmatprep.subr.mxu0 %v1558
    %2519 = vmatpush1.msra.mxu0 %v1557
    %2520 = vmatprep.subr.mxu0 %v1560
    %2521 = vmatpush1.msra.mxu0 %v1559
    %2522 = vmatprep.subr.mxu0 %v1562
    %2523 = vmatpush1.msra.mxu0 %v1561
    %2524 = vmatprep.subr.mxu0 %v1564
    %2525 = vmatpush1.msra.mxu0 %v1563
    %2526 = vmatprep.subr.mxu0 %v1566
    %2527 = vmatpush1.msra.mxu0 %v1565
    %2528 = vmatprep.subr.mxu0 %v1568
    %2529 = vmatpush1.msra.mxu0 %v1567
    %2530 = vmatprep.subr.mxu0 %v1570
    %2531 = vmatpush1.msra.mxu0 %v1569
    %2532 = vmatprep.subr.mxu0 %v1572
    %2533 = vmatpush1.msra.mxu0 %v1571
    %2534 = vmatprep.subr.mxu0 0.0
    %2535 = vmatpush1.msra.mxu0 0.0
    %2536 = vmatprep.subr.mxu0 0.0
    %2537 = vmatpush1.msra.mxu0 0.0
    %2538 = vmatprep.subr.mxu0 0.0
    %2539 = vmatpush1.msra.mxu0 0.0
    %2540 = vmatprep.subr.mxu0 0.0
    %2541 = vmatpush1.msra.mxu0 0.0
    %2542 = vmatprep.subr.mxu0 0.0
    %2543 = vmatpush1.msra.mxu0 0.0
    %2544 = vmatprep.subr.mxu0 0.0
    %2545 = vmatpush1.msra.mxu0 0.0
    %2546 = vmatprep.subr.mxu0 0.0
    %2547 = vmatpush1.msra.mxu0 0.0
    %2548 = vmatprep.subr.mxu0 0.0
    %2549 = vmatpush1.msra.mxu0 0.0
    %2550 = vmatprep.subr.mxu0 0.0
    %2551 = vmatpush1.msra.mxu0 0.0
    %2552 = vmatprep.subr.mxu0 0.0
    %2553 = vmatpush1.msra.mxu0 0.0
    %2554 = vmatprep.subr.mxu0 0.0
    %2555 = vmatpush1.msra.mxu0 0.0
    %2556 = vmatprep.subr.mxu0 0.0
    %2557 = vmatpush1.msra.mxu0 0.0
    %2558 = vmatprep.subr.mxu0 0.0
    %2559 = vmatpush1.msra.mxu0 0.0
    %2560 = vmatprep.subr.mxu0 0.0
    %2561 = vmatpush1.msra.mxu0 0.0
    %2562 = vmatprep.subr.mxu0 0.0
    %2563 = vmatpush1.msra.mxu0 0.0
    %2564 = vmatprep.subr.mxu0 0.0
    %2565 = vmatpush1.msra.mxu0 0.0
    %2566 = vmatprep.subr.mxu0 0.0
    %2567 = vmatpush1.msra.mxu0 0.0
    %2568 = vmatprep.subr.mxu0 0.0
    %2569 = vmatpush1.msra.mxu0 0.0
    %2570 = vmatprep.subr.mxu0 0.0
    %2571 = vmatpush1.msra.mxu0 0.0
    %2572 = vmatprep.subr.mxu0 0.0
    %2573 = vmatpush1.msra.mxu0 0.0
    %2574 = vmatprep.subr.mxu0 0.0
    %2575 = vmatpush1.msra.mxu0 0.0
    %2576 = vmatprep.subr.mxu0 0.0
    %2577 = vmatpush1.msra.mxu0 0.0
    %2578 = vmatprep.subr.mxu0 0.0
    %2579 = vmatpush1.msra.mxu0 0.0
    %2580 = vmatprep.subr.mxu0 0.0
    %2581 = vmatpush1.msra.mxu0 0.0
    %2582 = vmatprep.mubr.f32.mxu0 0.0
    %2583 = vmatmul.mubr.f32.gmra.mrb[0].mxu0 %v2516
    %v2584 = vpop.f32.mrb[0].mxu0
    %v2585 = vadd.f32 0.0, %v2584
    %v2586 = vpop.f32.mrb[0].mxu0
    %v2587 = vadd.f32 0.0, %v2586
    %2588 = vdwg.mxu0
    %v2589 = vld [vmem:[%s333] sm:$0xff]
    %v2590 = vadd.f32 %v2589, %v2585
    %v2591 = vld [vmem:[#allocation2 + $0x8] sm:$0xff]
    %v2592 = vadd.f32 %v2591, %v2587
    %v2593 = vxor.u32 %v2590, 2147483648
    %v2594 = vmul.f32 %v2593, 1.442695
    %v2595 = vpow.pop %v2594
    %v2596 = vadd.f32 %v2595, 1.0
    %v2597 = vrcp.pop %v2596
    %v2598 = vmul.f32 1.0, %v2597
    %v2599 = vtanh.pop %v2590
    %v2600 = vmul.f32 %v2598, %v2475
    %2602 = vrot.lane.b32.xlu0 %v2599, 64
    %v2603 = vpop.permute.xlu0 %2602
    %v2605 = vmul.f32 %v2598, %v2603
    %2607 = vrot.lane.b32.xlu0 %v2605, 32
    %v2608 = vpop.permute.xlu0 %2607
    %v2610 = vadd.f32 %v2600, %v2608
    %v2611 = vtanh.pop %v2610
    %2613 = vrot.lane.b32.xlu0 %v2611, 64
    %v2614 = vpop.permute.xlu0 %2613
    %v2616 = vmul.f32 %v2598, %v2614
    %v2617 = vxor.u32 %v2592, 2147483648
    %v2618 = vmul.f32 %v2617, 1.442695
    %v2619 = vpow.pop %v2618
    %v2620 = vadd.f32 %v2619, 1.0
    %v2621 = vrcp.pop %v2620
    %v2622 = vmul.f32 1.0, %v2621
    %v2623 = vtanh.pop %v2592
    %v2624 = vmul.f32 %v2622, %v2499
    %2626 = vrot.lane.b32.xlu0 %v2623, 64
    %v2627 = vpop.permute.xlu0 %2626
    %v2629 = vmul.f32 %v2622, %v2627
    %2631 = vrot.lane.b32.xlu0 %v2629, 32
    %v2632 = vpop.permute.xlu0 %2631
    %v2634 = vadd.f32 %v2624, %v2632
    %v2635 = vtanh.pop %v2634
    %2637 = vrot.lane.b32.xlu0 %v2635, 64
    %v2638 = vpop.permute.xlu0 %2637
    %v2640 = vmul.f32 %v2622, %v2638
    %2642 = vrot.lane.b32.xlu0 %v2616, 32
    %v2643 = vpop.permute.xlu0 %2642
    %2646 = vrot.lane.b32.xlu0 %v2640, 64
    %v2647 = vpop.permute.xlu0 %2646
    %v2649 = vsel %vm392, %v2643, %v2647
    %v2650 = vsel %vm392, %v2649, %v1702
    %v2651 = vmax.f32 %v2650, 0.0
    %v2652 = vld [vmem:[%s7] sm:$0xff]
    %v2653 = vld [vmem:[%s7 + $0x8] sm:$0xff]
    %v2654 = vld [vmem:[%s7 + $0x10] sm:$0xff]
    %v2655 = vld [vmem:[%s7 + $0x18] sm:$0xff]
    %v2656 = vld [vmem:[%s7 + $0x20] sm:$0xff]
    %v2657 = vld [vmem:[%s7 + $0x28] sm:$0xff]
    %v2658 = vld [vmem:[%s7 + $0x30] sm:$0xff]
    %v2659 = vld [vmem:[%s7 + $0x38] sm:$0xff]
    %v2660 = vld [vmem:[#allocation4] sm:$0x1]
    %v2662 = vlaneseq
    %v2663 = vshrl.u32 %v2662, 7
    %v2664 = vsub.s32 0, %v2663
    %v2665 = vrot.slane %v2660, %v2664
    %v2668 = vsel %vm256, %v2651, 0
    %2670 = vmatprep.subr.mxu0 0.0
    %2671 = vmatpush1.msra.mxu0 %v2652
    %2672 = vmatprep.subr.mxu0 0.0
    %2673 = vmatpush1.msra.mxu0 %v2653
    %2674 = vmatprep.subr.mxu0 0.0
    %2675 = vmatpush1.msra.mxu0 %v2654
    %2676 = vmatprep.subr.mxu0 0.0
    %2677 = vmatpush1.msra.mxu0 %v2655
    %2678 = vmatprep.subr.mxu0 0.0
    %2679 = vmatpush1.msra.mxu0 %v2656
    %2680 = vmatprep.subr.mxu0 0.0
    %2681 = vmatpush1.msra.mxu0 %v2657
    %2682 = vmatprep.subr.mxu0 0.0
    %2683 = vmatpush1.msra.mxu0 %v2658
    %2684 = vmatprep.subr.mxu0 0.0
    %2685 = vmatpush1.msra.mxu0 %v2659
    %2686 = vmatprep.subr.mxu0 0.0
    %2687 = vmatpush1.msra.mxu0 0.0
    %2688 = vmatprep.subr.mxu0 0.0
    %2689 = vmatpush1.msra.mxu0 0.0
    %2690 = vmatprep.subr.mxu0 0.0
    %2691 = vmatpush1.msra.mxu0 0.0
    %2692 = vmatprep.subr.mxu0 0.0
    %2693 = vmatpush1.msra.mxu0 0.0
    %2694 = vmatprep.subr.mxu0 0.0
    %2695 = vmatpush1.msra.mxu0 0.0
    %2696 = vmatprep.subr.mxu0 0.0
    %2697 = vmatpush1.msra.mxu0 0.0
    %2698 = vmatprep.subr.mxu0 0.0
    %2699 = vmatpush1.msra.mxu0 0.0
    %2700 = vmatprep.subr.mxu0 0.0
    %2701 = vmatpush1.msra.mxu0 0.0
    %2702 = vmatprep.subr.mxu0 0.0
    %2703 = vmatpush1.msra.mxu0 0.0
    %2704 = vmatprep.subr.mxu0 0.0
    %2705 = vmatpush1.msra.mxu0 0.0
    %2706 = vmatprep.subr.mxu0 0.0
    %2707 = vmatpush1.msra.mxu0 0.0
    %2708 = vmatprep.subr.mxu0 0.0
    %2709 = vmatpush1.msra.mxu0 0.0
    %2710 = vmatprep.subr.mxu0 0.0
    %2711 = vmatpush1.msra.mxu0 0.0
    %2712 = vmatprep.subr.mxu0 0.0
    %2713 = vmatpush1.msra.mxu0 0.0
    %2714 = vmatprep.subr.mxu0 0.0
    %2715 = vmatpush1.msra.mxu0 0.0
    %2716 = vmatprep.subr.mxu0 0.0
    %2717 = vmatpush1.msra.mxu0 0.0
    %2718 = vmatprep.subr.mxu0 0.0
    %2719 = vmatpush1.msra.mxu0 0.0
    %2720 = vmatprep.subr.mxu0 0.0
    %2721 = vmatpush1.msra.mxu0 0.0
    %2722 = vmatprep.subr.mxu0 0.0
    %2723 = vmatpush1.msra.mxu0 0.0
    %2724 = vmatprep.subr.mxu0 0.0
    %2725 = vmatpush1.msra.mxu0 0.0
    %2726 = vmatprep.subr.mxu0 0.0
    %2727 = vmatpush1.msra.mxu0 0.0
    %2728 = vmatprep.subr.mxu0 0.0
    %2729 = vmatpush1.msra.mxu0 0.0
    %2730 = vmatprep.subr.mxu0 0.0
    %2731 = vmatpush1.msra.mxu0 0.0
    %2732 = vmatprep.subr.mxu0 0.0
    %2733 = vmatpush1.msra.mxu0 0.0
    %2734 = vmatprep.mubr.f32.mxu0 0.0
    %2735 = vmatmul.mubr.f32.gmra.mrb[0].mxu0 %v2668
    %v2736 = vpop.f32.mrb[0].mxu0
    %v2737 = vadd.f32 %v2665, %v2736
    %v2738 = vpop.f32.mrb[0].mxu0
    %2739 = vdwg.mxu0
    %vm2740 = vcmask 7168
    %2741 = vst.msk [vmem:[%s9] sm:$0xff] %vm2740, %v2737
    // Predicated region
    $region46: #{discriminator_forward.1} parent=1 // pred_check
      _
    $region47: #{discriminator_forward.1} parent=1 // pred_check_branch
      %2743 = sbr.rel (0) target = $region49
    $region48: #{discriminator_forward.1} parent=1 // pred_region
      _
    $region49: #{discriminator_forward.1} parent=1 // pred_fallthru
      _
    // Predicated region
    $region50: #{discriminator_forward.1} parent=1 // pred_check
      _
    $region51: #{discriminator_forward.1} parent=1 // pred_check_branch
      %2745 = sbr.rel (0) target = $region53
    $region52: #{discriminator_forward.1} parent=1 // pred_region
      _
    $region53: #{discriminator_forward.1} parent=1 // pred_fallthru
      _
    %2746 = vsyncpa [#allocation6], 1
    %2747 = vsyncpa [#allocation8], 1

</llo_original>
